<compile_context>
chip_gen: v7x
topology: tpu7x:2x2x1
jax: 0.10.0
libtpu: 0.0.40
codegen_flags: <defaults>
</compile_context>

<pallas_src>
import functools

import jax
import jax.numpy as jnp
from jax.experimental import pallas as pl
from jax.experimental.pallas import tpu as pltpu


# ---------------------------------------------------------------------------
# Trace-time constant builders (tiny arrays, plain JAX, evaluated under jit)
# ---------------------------------------------------------------------------

def _band_matrix(wk, win, wout):
    """Band matrix for one kernel-row slice of a conv weight.

    wk: (OC, IC, KW) weight slice at a fixed kh.  Returns (IC*win, OC*wout) with
      B[ic*win + w, oc*wout + j] = wk[oc, ic, w - j]  for 0 <= w - j < KW.
    """
    OC, IC, KW = wk.shape
    d = jnp.arange(win)[:, None] - jnp.arange(wout)[None, :]        # (win, wout)
    valid = (d >= 0) & (d < KW)
    dc = jnp.clip(d, 0, KW - 1)
    band = wk[:, :, dc]                                             # (OC, IC, win, wout)
    band = jnp.where(valid[None, None], band, 0.0)
    return jnp.transpose(band, (1, 2, 0, 3)).reshape(IC * win, OC * wout)


def _conv_band_weight(w, win):
    """(OC, IC, 5, 5) conv weight -> (5*IC*win, OC*(win-4)) K-stacked band weight."""
    OC, IC, KH, KW = w.shape
    wout = win - KW + 1
    return jnp.concatenate(
        [_band_matrix(w[:, :, kh, :], win, wout) for kh in range(KH)], axis=0)


def _width_pool(size, ch):
    """AvgPool along the packed width axis: (ch*size, ch*size//2) right-multiplier."""
    half = size // 2
    sel = (jnp.arange(size)[:, None] // 2) == jnp.arange(half)[None, :]
    return jnp.kron(jnp.eye(ch, dtype=jnp.float32), 0.5 * sel.astype(jnp.float32))


def _height_pool1(bb):
    """(bb*14, bb*32-4): row (b,i') = 0.5*(row b*32+2i' + row b*32+2i'+1)."""
    r = jnp.arange(bb * 32 - 4)
    rb, ri = r // 32, r % 32
    q = jnp.arange(bb * 14)
    qb, qi = q // 14, q % 14
    sel = ((qb[:, None] == rb[None, :])
           & (qi[:, None] == ri[None, :] // 2)
           & (ri[None, :] < 28))
    return 0.5 * sel.astype(jnp.float32)


def _height_pool2_perm(bb):
    """(5*bb, bb*14-4): row (i'',b) = 0.5*(row b*14+2i'' + row b*14+2i''+1)."""
    r = jnp.arange(bb * 14 - 4)
    rb, ri = r // 14, r % 14
    q = jnp.arange(5 * bb)
    qi, qb = q // bb, q % bb
    sel = ((qb[:, None] == rb[None, :])
           & (qi[:, None] == ri[None, :] // 2)
           & (ri[None, :] < 10))
    return 0.5 * sel.astype(jnp.float32)


# ---------------------------------------------------------------------------
# Fused LeNet5 kernel (one batch block per grid step)
# ---------------------------------------------------------------------------

def _lenet5_kernel(x_ref, wb1_ref, cb1_ref, pw1_ref, hp1_ref,
                   wb2_ref, cb2_ref, pw2_ref, hp2_ref,
                   w1_ref, fb1_ref, w2_ref, fb2_ref, w3_ref, fb3_ref,
                   o_ref, *, bb):
    dot = functools.partial(jnp.dot, preferred_element_type=jnp.float32)

    # ---- conv1 + ReLU over whole 32-row image slabs (junk rows pooled away) --
    xb = x_ref[...]                                                  # (bb*32, 32)
    n1 = bb * 32 - 4
    a1in = jnp.concatenate([xb[kh:kh + n1, :] for kh in range(5)], axis=1)
    a1 = jnp.maximum(dot(a1in, wb1_ref[...]) + cb1_ref[...], 0.0)    # (n1, 168)

    # ---- pool1: width pooling (cols), then height pooling (rows) -------------
    p1 = dot(hp1_ref[...], dot(a1, pw1_ref[...]))                    # (bb*14, 84)

    # ---- conv2 + ReLU ---------------------------------------------------------
    n2 = bb * 14 - 4
    a2in = jnp.concatenate([p1[kh:kh + n2, :] for kh in range(5)], axis=1)
    a2 = jnp.maximum(dot(a2in, wb2_ref[...]) + cb2_ref[...], 0.0)    # (n2, 160)

    # ---- pool2 (also permutes rows to (i'', b)-major for the flatten) --------
    g = dot(hp2_ref[...], dot(a2, pw2_ref[...]))                     # (5*bb, 80)

    # ---- flatten to PyTorch view(-1, 400) order + fc1/fc2/fc3 ----------------
    gcat = jnp.concatenate([g[v * bb:(v + 1) * bb, :] for v in range(5)], axis=1)
    h = jnp.maximum(dot(gcat, w1_ref[...]) + fb1_ref[...], 0.0)      # (bb, 120)
    h = jnp.maximum(dot(h, w2_ref[...]) + fb2_ref[...], 0.0)         # (bb, 84)
    o_ref[...] = dot(h, w3_ref[...]) + fb3_ref[...]                  # (bb, 10)


# ---------------------------------------------------------------------------
# Public forward
# ---------------------------------------------------------------------------

@jax.jit
def lenet5_forward(x_nchw, params):
    """x_nchw: (B, 1, 32, 32) float32 NCHW (PyTorch convention) -> (B, 10)."""
    f32 = jnp.float32
    x = x_nchw.astype(f32)
    B = x.shape[0]

    # Batch block: multiple of 8, at most 32; >= 2 grid steps once B >= 16.
    BB = min(32, 8 * ((B + 15) // 16))
    Bp = BB * ((B + BB - 1) // BB)

    # Free contiguous reshape (no transpose / HBM rewrite of the input).
    x2 = x.reshape(B * 32, 32)
    if Bp != B:  # only pad when B is not a multiple of the block size
        x2 = jnp.concatenate([x2, jnp.zeros(((Bp - B) * 32, 32), f32)], axis=0)

    # Trace-time constants (all small; DMA'd to VMEM once, reused every step).
    wb1 = _conv_band_weight(params["conv1_w"].astype(f32), 32)        # (160, 168)
    cb1 = jnp.repeat(params["conv1_b"].astype(f32), 28)[None, :]      # (1, 168)
    wb2 = _conv_band_weight(params["conv2_w"].astype(f32), 14)        # (420, 160)
    cb2 = jnp.repeat(params["conv2_b"].astype(f32), 10)[None, :]      # (1, 160)
    pw1 = _width_pool(28, 6)                                          # (168, 84)
    pw2 = _width_pool(10, 16)                                         # (160, 80)
    hp1 = _height_pool1(BB)                                           # (BB*14, BB*32-4)
    hp2 = _height_pool2_perm(BB)                                      # (5*BB, BB*14-4)
    w1p = (params["fc1_w"].astype(f32).reshape(120, 16, 5, 5)
           .transpose(2, 1, 3, 0).reshape(400, 120))                  # (400, 120)
    fb1 = params["fc1_b"].astype(f32)[None, :]                        # (1, 120)
    w2t = params["fc2_w"].astype(f32).T                               # (120, 84)
    fb2 = params["fc2_b"].astype(f32)[None, :]                        # (1, 84)
    w3t = params["fc3_w"].astype(f32).T                               # (84, 10)
    fb3 = params["fc3_b"].astype(f32)[None, :]                        # (1, 10)

    consts = [wb1, cb1, pw1, hp1, wb2, cb2, pw2, hp2,
              w1p, fb1, w2t, fb2, w3t, fb3]
    const_specs = [pl.BlockSpec(c.shape, lambda i: (0, 0)) for c in consts]

    out = pl.pallas_call(
        functools.partial(_lenet5_kernel, bb=BB),
        grid=(Bp // BB,),
        in_specs=[pl.BlockSpec((BB * 32, 32), lambda i: (i, 0))] + const_specs,
        out_specs=pl.BlockSpec((BB, 10), lambda i: (i, 0)),
        out_shape=jax.ShapeDtypeStruct((Bp, 10), f32),
        compiler_params=pltpu.CompilerParams(
            dimension_semantics=("parallel",)),
    )(x2, *consts)
    return out[:B]


# ---------------------------------------------------------------------------
# Parameter init (mimics PyTorch default U(-1/sqrt(fan_in), 1/sqrt(fan_in)))
# ---------------------------------------------------------------------------

def init_params(key):
    def uniform(k, shape, fan_in):
        bound = 1.0 / jnp.sqrt(jnp.float32(fan_in))
        return jax.random.uniform(k, shape, jnp.float32, -bound, bound)

    ks = jax.random.split(key, 10)
    return {
        "conv1_w": uniform(ks[0], (6, 1, 5, 5), 1 * 5 * 5),
        "conv1_b": uniform(ks[1], (6,), 1 * 5 * 5),
        "conv2_w": uniform(ks[2], (16, 6, 5, 5), 6 * 5 * 5),
        "conv2_b": uniform(ks[3], (16,), 6 * 5 * 5),
        "fc1_w":   uniform(ks[4], (120, 400), 400),
        "fc1_b":   uniform(ks[5], (120,), 400),
        "fc2_w":   uniform(ks[6], (84, 120), 120),
        "fc2_b":   uniform(ks[7], (84,), 120),
        "fc3_w":   uniform(ks[8], (10, 84), 84),
        "fc3_b":   uniform(ks[9], (10,), 84),
    }


if __name__ == "__main__":
    key = jax.random.PRNGKey(0)
    k_params, k_x = jax.random.split(key)
    params = init_params(k_params)

    # LeNet5 expects 1x32x32 inputs (so that fc1 sees 16*5*5 features).
    x = jax.random.normal(k_x, (2, 1, 32, 32), dtype=jnp.float32)

    out = lenet5_forward(x, params)
    out = jax.block_until_ready(out)
    assert out.shape == (2, 10), out.shape
    assert out.dtype == jnp.float32
    assert bool(jnp.all(jnp.isfinite(out)))
    print("KERNEL_OK")
</pallas_src>

<mosaic_0001>
module attributes {stable_mosaic.version = 11 : i64} {
  func.func @_lenet5_kernel(%arg0: i32, %arg1: memref<256x32xf32, #tpu.memory_space<vmem>>, %arg2: memref<160x168xf32, #tpu.memory_space<vmem>>, %arg3: memref<1x168xf32, #tpu.memory_space<vmem>>, %arg4: memref<168x84xf32, #tpu.memory_space<vmem>>, %arg5: memref<112x252xf32, #tpu.memory_space<vmem>>, %arg6: memref<420x160xf32, #tpu.memory_space<vmem>>, %arg7: memref<1x160xf32, #tpu.memory_space<vmem>>, %arg8: memref<160x80xf32, #tpu.memory_space<vmem>>, %arg9: memref<40x108xf32, #tpu.memory_space<vmem>>, %arg10: memref<400x120xf32, #tpu.memory_space<vmem>>, %arg11: memref<1x120xf32, #tpu.memory_space<vmem>>, %arg12: memref<120x84xf32, #tpu.memory_space<vmem>>, %arg13: memref<1x84xf32, #tpu.memory_space<vmem>>, %arg14: memref<84x10xf32, #tpu.memory_space<vmem>>, %arg15: memref<1x10xf32, #tpu.memory_space<vmem>>, %arg16: memref<8x10xf32, #tpu.memory_space<vmem>>) attributes {dimension_semantics = [#tpu.dimension_semantics<parallel>], iteration_bounds = array<i64: 1>, scalar_prefetch = 0 : i64, scratch_operands = 0 : i64, tpu.core_type = #tpu.core_type<tc>, window_params = [{transform_indices = @transform_0, window_bounds = array<i64: 256, 32>}, {pipeline_mode = #tpu.pipeline_mode<synchronous>, transform_indices = @transform_1, window_bounds = array<i64: 160, 168>}, {pipeline_mode = #tpu.pipeline_mode<synchronous>, transform_indices = @transform_2, window_bounds = array<i64: 1, 168>}, {pipeline_mode = #tpu.pipeline_mode<synchronous>, transform_indices = @transform_3, window_bounds = array<i64: 168, 84>}, {pipeline_mode = #tpu.pipeline_mode<synchronous>, transform_indices = @transform_4, window_bounds = array<i64: 112, 252>}, {pipeline_mode = #tpu.pipeline_mode<synchronous>, transform_indices = @transform_5, window_bounds = array<i64: 420, 160>}, {pipeline_mode = #tpu.pipeline_mode<synchronous>, transform_indices = @transform_6, window_bounds = array<i64: 1, 160>}, {pipeline_mode = #tpu.pipeline_mode<synchronous>, transform_indices = @transform_7, window_bounds = array<i64: 160, 80>}, {pipeline_mode = #tpu.pipeline_mode<synchronous>, transform_indices = @transform_8, window_bounds = array<i64: 40, 108>}, {pipeline_mode = #tpu.pipeline_mode<synchronous>, transform_indices = @transform_9, window_bounds = array<i64: 400, 120>}, {pipeline_mode = #tpu.pipeline_mode<synchronous>, transform_indices = @transform_10, window_bounds = array<i64: 1, 120>}, {pipeline_mode = #tpu.pipeline_mode<synchronous>, transform_indices = @transform_11, window_bounds = array<i64: 120, 84>}, {pipeline_mode = #tpu.pipeline_mode<synchronous>, transform_indices = @transform_12, window_bounds = array<i64: 1, 84>}, {pipeline_mode = #tpu.pipeline_mode<synchronous>, transform_indices = @transform_13, window_bounds = array<i64: 84, 10>}, {pipeline_mode = #tpu.pipeline_mode<synchronous>, transform_indices = @transform_14, window_bounds = array<i64: 1, 10>}, {transform_indices = @transform_15, window_bounds = array<i64: 8, 10>}]} {
    %c0 = arith.constant 0 : index
    %c0_0 = arith.constant 0 : index
    %0 = vector.load %arg1[%c0, %c0_0] : memref<256x32xf32, #tpu.memory_space<vmem>>, vector<256x32xf32>
    %1 = vector.extract_strided_slice %0 {offsets = [0, 0], sizes = [252, 32], strides = [1, 1]} : vector<256x32xf32> to vector<252x32xf32>
    %2 = vector.extract_strided_slice %0 {offsets = [1, 0], sizes = [252, 32], strides = [1, 1]} : vector<256x32xf32> to vector<252x32xf32>
    %3 = vector.extract_strided_slice %0 {offsets = [2, 0], sizes = [252, 32], strides = [1, 1]} : vector<256x32xf32> to vector<252x32xf32>
    %4 = vector.extract_strided_slice %0 {offsets = [3, 0], sizes = [252, 32], strides = [1, 1]} : vector<256x32xf32> to vector<252x32xf32>
    %5 = vector.extract_strided_slice %0 {offsets = [4, 0], sizes = [252, 32], strides = [1, 1]} : vector<256x32xf32> to vector<252x32xf32>
    %6 = tpu.concatenate %1, %2, %3, %4, %5 in 1 : vector<252x32xf32>, vector<252x32xf32>, vector<252x32xf32>, vector<252x32xf32>, vector<252x32xf32> -> vector<252x160xf32>
    %c0_1 = arith.constant 0 : index
    %c0_2 = arith.constant 0 : index
    %7 = vector.load %arg2[%c0_1, %c0_2] : memref<160x168xf32, #tpu.memory_space<vmem>>, vector<160x168xf32>
    %cst = arith.constant dense<0.000000e+00> : vector<252x168xf32>
    %8 = tpu.matmul %6, %7, %cst {dimension_numbers = #tpu.dot_dimension_numbers<[1], [0], [0], [1], [0, 0, 1, 1], [], []>} : vector<252x160xf32>, vector<160x168xf32>, vector<252x168xf32> -> vector<252x168xf32>
    %c0_3 = arith.constant 0 : index
    %c0_4 = arith.constant 0 : index
    %9 = vector.load %arg3[%c0_3, %c0_4] : memref<1x168xf32, #tpu.memory_space<vmem>>, vector<1x168xf32>
    %10 = vector.broadcast %9 : vector<1x168xf32> to vector<252x168xf32>
    %11 = arith.addf %8, %10 : vector<252x168xf32>
    %cst_5 = arith.constant 0.000000e+00 : f32
    %12 = vector.broadcast %cst_5 : f32 to vector<252x168xf32>
    %13 = arith.maximumf %11, %12 : vector<252x168xf32>
    %c0_6 = arith.constant 0 : index
    %c0_7 = arith.constant 0 : index
    %14 = vector.load %arg5[%c0_6, %c0_7] : memref<112x252xf32, #tpu.memory_space<vmem>>, vector<112x252xf32>
    %c0_8 = arith.constant 0 : index
    %c0_9 = arith.constant 0 : index
    %15 = vector.load %arg4[%c0_8, %c0_9] : memref<168x84xf32, #tpu.memory_space<vmem>>, vector<168x84xf32>
    %cst_10 = arith.constant dense<0.000000e+00> : vector<252x84xf32>
    %16 = tpu.matmul %13, %15, %cst_10 {dimension_numbers = #tpu.dot_dimension_numbers<[1], [0], [0], [1], [0, 0, 1, 1], [], []>} : vector<252x168xf32>, vector<168x84xf32>, vector<252x84xf32> -> vector<252x84xf32>
    %cst_11 = arith.constant dense<0.000000e+00> : vector<112x84xf32>
    %17 = tpu.matmul %14, %16, %cst_11 {dimension_numbers = #tpu.dot_dimension_numbers<[1], [0], [0], [1], [0, 0, 1, 1], [], []>} : vector<112x252xf32>, vector<252x84xf32>, vector<112x84xf32> -> vector<112x84xf32>
    %18 = vector.extract_strided_slice %17 {offsets = [0, 0], sizes = [108, 84], strides = [1, 1]} : vector<112x84xf32> to vector<108x84xf32>
    %19 = vector.extract_strided_slice %17 {offsets = [1, 0], sizes = [108, 84], strides = [1, 1]} : vector<112x84xf32> to vector<108x84xf32>
    %20 = vector.extract_strided_slice %17 {offsets = [2, 0], sizes = [108, 84], strides = [1, 1]} : vector<112x84xf32> to vector<108x84xf32>
    %21 = vector.extract_strided_slice %17 {offsets = [3, 0], sizes = [108, 84], strides = [1, 1]} : vector<112x84xf32> to vector<108x84xf32>
    %22 = vector.extract_strided_slice %17 {offsets = [4, 0], sizes = [108, 84], strides = [1, 1]} : vector<112x84xf32> to vector<108x84xf32>
    %23 = tpu.concatenate %18, %19, %20, %21, %22 in 1 : vector<108x84xf32>, vector<108x84xf32>, vector<108x84xf32>, vector<108x84xf32>, vector<108x84xf32> -> vector<108x420xf32>
    %c0_12 = arith.constant 0 : index
    %c0_13 = arith.constant 0 : index
    %24 = vector.load %arg6[%c0_12, %c0_13] : memref<420x160xf32, #tpu.memory_space<vmem>>, vector<420x160xf32>
    %cst_14 = arith.constant dense<0.000000e+00> : vector<108x160xf32>
    %25 = tpu.matmul %23, %24, %cst_14 {dimension_numbers = #tpu.dot_dimension_numbers<[1], [0], [0], [1], [0, 0, 1, 1], [], []>} : vector<108x420xf32>, vector<420x160xf32>, vector<108x160xf32> -> vector<108x160xf32>
    %c0_15 = arith.constant 0 : index
    %c0_16 = arith.constant 0 : index
    %26 = vector.load %arg7[%c0_15, %c0_16] : memref<1x160xf32, #tpu.memory_space<vmem>>, vector<1x160xf32>
    %27 = vector.broadcast %26 : vector<1x160xf32> to vector<108x160xf32>
    %28 = arith.addf %25, %27 : vector<108x160xf32>
    %cst_17 = arith.constant 0.000000e+00 : f32
    %29 = vector.broadcast %cst_17 : f32 to vector<108x160xf32>
    %30 = arith.maximumf %28, %29 : vector<108x160xf32>
    %c0_18 = arith.constant 0 : index
    %c0_19 = arith.constant 0 : index
    %31 = vector.load %arg9[%c0_18, %c0_19] : memref<40x108xf32, #tpu.memory_space<vmem>>, vector<40x108xf32>
    %c0_20 = arith.constant 0 : index
    %c0_21 = arith.constant 0 : index
    %32 = vector.load %arg8[%c0_20, %c0_21] : memref<160x80xf32, #tpu.memory_space<vmem>>, vector<160x80xf32>
    %cst_22 = arith.constant dense<0.000000e+00> : vector<108x80xf32>
    %33 = tpu.matmul %30, %32, %cst_22 {dimension_numbers = #tpu.dot_dimension_numbers<[1], [0], [0], [1], [0, 0, 1, 1], [], []>} : vector<108x160xf32>, vector<160x80xf32>, vector<108x80xf32> -> vector<108x80xf32>
    %cst_23 = arith.constant dense<0.000000e+00> : vector<40x80xf32>
    %34 = tpu.matmul %31, %33, %cst_23 {dimension_numbers = #tpu.dot_dimension_numbers<[1], [0], [0], [1], [0, 0, 1, 1], [], []>} : vector<40x108xf32>, vector<108x80xf32>, vector<40x80xf32> -> vector<40x80xf32>
    %35 = vector.extract_strided_slice %34 {offsets = [0, 0], sizes = [8, 80], strides = [1, 1]} : vector<40x80xf32> to vector<8x80xf32>
    %36 = vector.extract_strided_slice %34 {offsets = [8, 0], sizes = [8, 80], strides = [1, 1]} : vector<40x80xf32> to vector<8x80xf32>
    %37 = vector.extract_strided_slice %34 {offsets = [16, 0], sizes = [8, 80], strides = [1, 1]} : vector<40x80xf32> to vector<8x80xf32>
    %38 = vector.extract_strided_slice %34 {offsets = [24, 0], sizes = [8, 80], strides = [1, 1]} : vector<40x80xf32> to vector<8x80xf32>
    %39 = vector.extract_strided_slice %34 {offsets = [32, 0], sizes = [8, 80], strides = [1, 1]} : vector<40x80xf32> to vector<8x80xf32>
    %40 = tpu.concatenate %35, %36, %37, %38, %39 in 1 : vector<8x80xf32>, vector<8x80xf32>, vector<8x80xf32>, vector<8x80xf32>, vector<8x80xf32> -> vector<8x400xf32>
    %c0_24 = arith.constant 0 : index
    %c0_25 = arith.constant 0 : index
    %41 = vector.load %arg10[%c0_24, %c0_25] : memref<400x120xf32, #tpu.memory_space<vmem>>, vector<400x120xf32>
    %cst_26 = arith.constant dense<0.000000e+00> : vector<8x120xf32>
    %42 = tpu.matmul %40, %41, %cst_26 {dimension_numbers = #tpu.dot_dimension_numbers<[1], [0], [0], [1], [0, 0, 1, 1], [], []>} : vector<8x400xf32>, vector<400x120xf32>, vector<8x120xf32> -> vector<8x120xf32>
    %c0_27 = arith.constant 0 : index
    %c0_28 = arith.constant 0 : index
    %43 = vector.load %arg11[%c0_27, %c0_28] : memref<1x120xf32, #tpu.memory_space<vmem>>, vector<1x120xf32>
    %44 = vector.broadcast %43 : vector<1x120xf32> to vector<8x120xf32>
    %45 = arith.addf %42, %44 : vector<8x120xf32>
    %cst_29 = arith.constant 0.000000e+00 : f32
    %46 = vector.broadcast %cst_29 : f32 to vector<8x120xf32>
    %47 = arith.maximumf %45, %46 : vector<8x120xf32>
    %c0_30 = arith.constant 0 : index
    %c0_31 = arith.constant 0 : index
    %48 = vector.load %arg12[%c0_30, %c0_31] : memref<120x84xf32, #tpu.memory_space<vmem>>, vector<120x84xf32>
    %cst_32 = arith.constant dense<0.000000e+00> : vector<8x84xf32>
    %49 = tpu.matmul %47, %48, %cst_32 {dimension_numbers = #tpu.dot_dimension_numbers<[1], [0], [0], [1], [0, 0, 1, 1], [], []>} : vector<8x120xf32>, vector<120x84xf32>, vector<8x84xf32> -> vector<8x84xf32>
    %c0_33 = arith.constant 0 : index
    %c0_34 = arith.constant 0 : index
    %50 = vector.load %arg13[%c0_33, %c0_34] : memref<1x84xf32, #tpu.memory_space<vmem>>, vector<1x84xf32>
    %51 = vector.broadcast %50 : vector<1x84xf32> to vector<8x84xf32>
    %52 = arith.addf %49, %51 : vector<8x84xf32>
    %cst_35 = arith.constant 0.000000e+00 : f32
    %53 = vector.broadcast %cst_35 : f32 to vector<8x84xf32>
    %54 = arith.maximumf %52, %53 : vector<8x84xf32>
    %c0_36 = arith.constant 0 : index
    %c0_37 = arith.constant 0 : index
    %55 = vector.load %arg14[%c0_36, %c0_37] : memref<84x10xf32, #tpu.memory_space<vmem>>, vector<84x10xf32>
    %cst_38 = arith.constant dense<0.000000e+00> : vector<8x10xf32>
    %56 = tpu.matmul %54, %55, %cst_38 {dimension_numbers = #tpu.dot_dimension_numbers<[1], [0], [0], [1], [0, 0, 1, 1], [], []>} : vector<8x84xf32>, vector<84x10xf32>, vector<8x10xf32> -> vector<8x10xf32>
    %c0_39 = arith.constant 0 : index
    %c0_40 = arith.constant 0 : index
    %57 = vector.load %arg15[%c0_39, %c0_40] : memref<1x10xf32, #tpu.memory_space<vmem>>, vector<1x10xf32>
    %58 = vector.broadcast %57 : vector<1x10xf32> to vector<8x10xf32>
    %59 = arith.addf %56, %58 : vector<8x10xf32>
    %c0_41 = arith.constant 0 : index
    %c0_42 = arith.constant 0 : index
    %60 = vector.load %arg16[%c0_41, %c0_42] : memref<8x10xf32, #tpu.memory_space<vmem>>, vector<8x10xf32>
    tpu.vector_store %arg16[%c0_41, %c0_42], %59 {strides = array<i32>} : memref<8x10xf32, #tpu.memory_space<vmem>>, vector<8x10xf32>,
    return
  }
  func.func @transform_0(%arg0: i32) -> (i32, i32) {
    %c0_i32 = arith.constant 0 : i32
    %c0_i32_0 = arith.constant 0 : i32
    return %arg0, %c0_i32 : i32, i32
  }
  func.func @transform_1(%arg0: i32) -> (i32, i32) {
    %c0_i32 = arith.constant 0 : i32
    %c0_i32_0 = arith.constant 0 : i32
    %c0_i32_1 = arith.constant 0 : i32
    return %c0_i32, %c0_i32_0 : i32, i32
  }
  func.func @transform_2(%arg0: i32) -> (i32, i32) {
    %c0_i32 = arith.constant 0 : i32
    %c0_i32_0 = arith.constant 0 : i32
    %c0_i32_1 = arith.constant 0 : i32
    return %c0_i32, %c0_i32_0 : i32, i32
  }
  func.func @transform_3(%arg0: i32) -> (i32, i32) {
    %c0_i32 = arith.constant 0 : i32
    %c0_i32_0 = arith.constant 0 : i32
    %c0_i32_1 = arith.constant 0 : i32
    return %c0_i32, %c0_i32_0 : i32, i32
  }
  func.func @transform_4(%arg0: i32) -> (i32, i32) {
    %c0_i32 = arith.constant 0 : i32
    %c0_i32_0 = arith.constant 0 : i32
    %c0_i32_1 = arith.constant 0 : i32
    return %c0_i32, %c0_i32_0 : i32, i32
  }
  func.func @transform_5(%arg0: i32) -> (i32, i32) {
    %c0_i32 = arith.constant 0 : i32
    %c0_i32_0 = arith.constant 0 : i32
    %c0_i32_1 = arith.constant 0 : i32
    return %c0_i32, %c0_i32_0 : i32, i32
  }
  func.func @transform_6(%arg0: i32) -> (i32, i32) {
    %c0_i32 = arith.constant 0 : i32
    %c0_i32_0 = arith.constant 0 : i32
    %c0_i32_1 = arith.constant 0 : i32
    return %c0_i32, %c0_i32_0 : i32, i32
  }
  func.func @transform_7(%arg0: i32) -> (i32, i32) {
    %c0_i32 = arith.constant 0 : i32
    %c0_i32_0 = arith.constant 0 : i32
    %c0_i32_1 = arith.constant 0 : i32
    return %c0_i32, %c0_i32_0 : i32, i32
  }
  func.func @transform_8(%arg0: i32) -> (i32, i32) {
    %c0_i32 = arith.constant 0 : i32
    %c0_i32_0 = arith.constant 0 : i32
    %c0_i32_1 = arith.constant 0 : i32
    return %c0_i32, %c0_i32_0 : i32, i32
  }
  func.func @transform_9(%arg0: i32) -> (i32, i32) {
    %c0_i32 = arith.constant 0 : i32
    %c0_i32_0 = arith.constant 0 : i32
    %c0_i32_1 = arith.constant 0 : i32
    return %c0_i32, %c0_i32_0 : i32, i32
  }
  func.func @transform_10(%arg0: i32) -> (i32, i32) {
    %c0_i32 = arith.constant 0 : i32
    %c0_i32_0 = arith.constant 0 : i32
    %c0_i32_1 = arith.constant 0 : i32
    return %c0_i32, %c0_i32_0 : i32, i32
  }
  func.func @transform_11(%arg0: i32) -> (i32, i32) {
    %c0_i32 = arith.constant 0 : i32
    %c0_i32_0 = arith.constant 0 : i32
    %c0_i32_1 = arith.constant 0 : i32
    return %c0_i32, %c0_i32_0 : i32, i32
  }
  func.func @transform_12(%arg0: i32) -> (i32, i32) {
    %c0_i32 = arith.constant 0 : i32
    %c0_i32_0 = arith.constant 0 : i32
    %c0_i32_1 = arith.constant 0 : i32
    return %c0_i32, %c0_i32_0 : i32, i32
  }
  func.func @transform_13(%arg0: i32) -> (i32, i32) {
    %c0_i32 = arith.constant 0 : i32
    %c0_i32_0 = arith.constant 0 : i32
    %c0_i32_1 = arith.constant 0 : i32
    return %c0_i32, %c0_i32_0 : i32, i32
  }
  func.func @transform_14(%arg0: i32) -> (i32, i32) {
    %c0_i32 = arith.constant 0 : i32
    %c0_i32_0 = arith.constant 0 : i32
    %c0_i32_1 = arith.constant 0 : i32
    return %c0_i32, %c0_i32_0 : i32, i32
  }
  func.func @transform_15(%arg0: i32) -> (i32, i32) {
    %c0_i32 = arith.constant 0 : i32
    %c0_i32_0 = arith.constant 0 : i32
    return %arg0, %c0_i32 : i32, i32
  }
}

</mosaic_0001>

<llo_original>
// kernel: lenet5_forward.1
$region0: #{lenet5_forward.1}
  #allocation0 [shape = 'u32[]', space=smem, size = 0x4, offset = 0x4, fixed_abs, tag = 'smem constant byte address 0x4 - core index']
  #allocation1 [shape = 'u32[144,128]{1,0:T(1,128)}', space=vmem, size = 0x12000, scoped, tag = 'internal scratch']
  %s0 = inlined_call_operand.vmem [shape: f32[256,32], index: 0, kind: input, shape index: {}]
  %s1 = inlined_call_operand.vmem [shape: f32[160,168], index: 1, kind: input, shape index: {}]
  %s2 = inlined_call_operand.vmem [shape: f32[1,168], index: 2, kind: input, shape index: {}]
  %s3 = inlined_call_operand.vmem [shape: f32[168,84], index: 3, kind: input, shape index: {}]
  %s4 = inlined_call_operand.vmem [shape: f32[112,252], index: 4, kind: input, shape index: {}]
  %s5 = inlined_call_operand.vmem [shape: f32[420,160], index: 5, kind: input, shape index: {}]
  %s6 = inlined_call_operand.vmem [shape: f32[1,160], index: 6, kind: input, shape index: {}]
  %s7 = inlined_call_operand.vmem [shape: f32[160,80], index: 7, kind: input, shape index: {}]
  %s8 = inlined_call_operand.vmem [shape: f32[40,108], index: 8, kind: input, shape index: {}]
  %s9 = inlined_call_operand.vmem [shape: f32[400,120], index: 9, kind: input, shape index: {}]
  %s10 = inlined_call_operand.vmem [shape: f32[1,120], index: 10, kind: input, shape index: {}]
  %s11 = inlined_call_operand.vmem [shape: f32[120,84], index: 11, kind: input, shape index: {}]
  %s12 = inlined_call_operand.vmem [shape: f32[1,84], index: 12, kind: input, shape index: {}]
  %s13 = inlined_call_operand.vmem [shape: f32[84,10], index: 13, kind: input, shape index: {}]
  %s14 = inlined_call_operand.vmem [shape: f32[1,10], index: 14, kind: input, shape index: {}]
  %s15 = inlined_call_operand.vmem [shape: f32[8,10], index: 15, kind: output, shape index: {}]
  %s16 = sld [smem:[#allocation0]]
  $region70: #{lenet5_forward.1} parent=0
    _
  %s18 = ssub.s32 1, %s16
  %s19 = scalar_select 0, %s18, %s16
  // Predicated region
  $region2: #{lenet5_forward.1} parent=0 // pred_check
    _
  $region3: #{lenet5_forward.1} parent=0 // pred_check_branch
    %21 = sbr.rel (0) target = $region5
  $region4: #{lenet5_forward.1} parent=0 // pred_region
    _
  $region5: #{lenet5_forward.1} parent=0 // pred_fallthru
    _
  // Predicated region
  $region6: #{lenet5_forward.1} parent=0 // pred_check
    _
  $region7: #{lenet5_forward.1} parent=0 // pred_check_branch
    %23 = sbr.rel (0) target = $region9
  $region8: #{lenet5_forward.1} parent=0 // pred_region
    _
  $region9: #{lenet5_forward.1} parent=0 // pred_fallthru
    _
  // Predicated region
  $region10: #{lenet5_forward.1} parent=0 // pred_check
    _
  $region11: #{lenet5_forward.1} parent=0 // pred_check_branch
    %25 = sbr.rel (0) target = $region13
  $region12: #{lenet5_forward.1} parent=0 // pred_region
    _
  $region13: #{lenet5_forward.1} parent=0 // pred_fallthru
    _
  // Predicated region
  $region14: #{lenet5_forward.1} parent=0 // pred_check
    _
  $region15: #{lenet5_forward.1} parent=0 // pred_check_branch
    %27 = sbr.rel (0) target = $region17
  $region16: #{lenet5_forward.1} parent=0 // pred_region
    _
  $region17: #{lenet5_forward.1} parent=0 // pred_fallthru
    _
  // Predicated region
  $region18: #{lenet5_forward.1} parent=0 // pred_check
    _
  $region19: #{lenet5_forward.1} parent=0 // pred_check_branch
    %29 = sbr.rel (0) target = $region21
  $region20: #{lenet5_forward.1} parent=0 // pred_region
    _
  $region21: #{lenet5_forward.1} parent=0 // pred_fallthru
    _
  // Predicated region
  $region22: #{lenet5_forward.1} parent=0 // pred_check
    _
  $region23: #{lenet5_forward.1} parent=0 // pred_check_branch
    %31 = sbr.rel (0) target = $region25
  $region24: #{lenet5_forward.1} parent=0 // pred_region
    _
  $region25: #{lenet5_forward.1} parent=0 // pred_fallthru
    _
  // Predicated region
  $region26: #{lenet5_forward.1} parent=0 // pred_check
    _
  $region27: #{lenet5_forward.1} parent=0 // pred_check_branch
    %33 = sbr.rel (0) target = $region29
  $region28: #{lenet5_forward.1} parent=0 // pred_region
    _
  $region29: #{lenet5_forward.1} parent=0 // pred_fallthru
    _
  // Predicated region
  $region30: #{lenet5_forward.1} parent=0 // pred_check
    _
  $region31: #{lenet5_forward.1} parent=0 // pred_check_branch
    %35 = sbr.rel (0) target = $region33
  $region32: #{lenet5_forward.1} parent=0 // pred_region
    _
  $region33: #{lenet5_forward.1} parent=0 // pred_fallthru
    _
  // Predicated region
  $region34: #{lenet5_forward.1} parent=0 // pred_check
    _
  $region35: #{lenet5_forward.1} parent=0 // pred_check_branch
    %37 = sbr.rel (0) target = $region37
  $region36: #{lenet5_forward.1} parent=0 // pred_region
    _
  $region37: #{lenet5_forward.1} parent=0 // pred_fallthru
    _
  // Predicated region
  $region38: #{lenet5_forward.1} parent=0 // pred_check
    _
  $region39: #{lenet5_forward.1} parent=0 // pred_check_branch
    %39 = sbr.rel (0) target = $region41
  $region40: #{lenet5_forward.1} parent=0 // pred_region
    _
  $region41: #{lenet5_forward.1} parent=0 // pred_fallthru
    _
  // Predicated region
  $region42: #{lenet5_forward.1} parent=0 // pred_check
    _
  $region43: #{lenet5_forward.1} parent=0 // pred_check_branch
    %41 = sbr.rel (0) target = $region45
  $region44: #{lenet5_forward.1} parent=0 // pred_region
    _
  $region45: #{lenet5_forward.1} parent=0 // pred_fallthru
    _
  // Predicated region
  $region46: #{lenet5_forward.1} parent=0 // pred_check
    _
  $region47: #{lenet5_forward.1} parent=0 // pred_check_branch
    %43 = sbr.rel (0) target = $region49
  $region48: #{lenet5_forward.1} parent=0 // pred_region
    _
  $region49: #{lenet5_forward.1} parent=0 // pred_fallthru
    _
  // Predicated region
  $region50: #{lenet5_forward.1} parent=0 // pred_check
    _
  $region51: #{lenet5_forward.1} parent=0 // pred_check_branch
    %45 = sbr.rel (0) target = $region53
  $region52: #{lenet5_forward.1} parent=0 // pred_region
    _
  $region53: #{lenet5_forward.1} parent=0 // pred_fallthru
    _
  // Predicated region
  $region54: #{lenet5_forward.1} parent=0 // pred_check
    _
  $region55: #{lenet5_forward.1} parent=0 // pred_check_branch
    %47 = sbr.rel (0) target = $region57
  $region56: #{lenet5_forward.1} parent=0 // pred_region
    _
  $region57: #{lenet5_forward.1} parent=0 // pred_fallthru
    _
  // Predicated region
  $region58: #{lenet5_forward.1} parent=0 // pred_check
    _
  $region59: #{lenet5_forward.1} parent=0 // pred_check_branch
    %49 = sbr.rel (0) target = $region61
  $region60: #{lenet5_forward.1} parent=0 // pred_region
    _
  $region61: #{lenet5_forward.1} parent=0 // pred_fallthru
    _
  %v50 = vld [vmem:[%s0] sm:$0xff]
  %v51 = vld [vmem:[%s0 + $0x8] sm:$0xff]
  %v52 = vld [vmem:[%s0 + $0x10] sm:$0xff]
  %v53 = vld [vmem:[%s0 + $0x18] sm:$0xff]
  %v54 = vld [vmem:[%s0 + $0x20] sm:$0xff]
  %v55 = vld [vmem:[%s0 + $0x28] sm:$0xff]
  %v56 = vld [vmem:[%s0 + $0x30] sm:$0xff]
  %v57 = vld [vmem:[%s0 + $0x38] sm:$0xff]
  %v58 = vld [vmem:[%s0 + $0x40] sm:$0xff]
  %v59 = vld [vmem:[%s0 + $0x48] sm:$0xff]
  %v60 = vld [vmem:[%s0 + $0x50] sm:$0xff]
  %v61 = vld [vmem:[%s0 + $0x58] sm:$0xff]
  %v62 = vld [vmem:[%s0 + $0x60] sm:$0xff]
  %v63 = vld [vmem:[%s0 + $0x68] sm:$0xff]
  %v64 = vld [vmem:[%s0 + $0x70] sm:$0xff]
  %v65 = vld [vmem:[%s0 + $0x78] sm:$0xff]
  %v66 = vld [vmem:[%s0 + $0x80] sm:$0xff]
  %v67 = vld [vmem:[%s0 + $0x88] sm:$0xff]
  %v68 = vld [vmem:[%s0 + $0x90] sm:$0xff]
  %v69 = vld [vmem:[%s0 + $0x98] sm:$0xff]
  %v70 = vld [vmem:[%s0 + $0xa0] sm:$0xff]
  %v71 = vld [vmem:[%s0 + $0xa8] sm:$0xff]
  %v72 = vld [vmem:[%s0 + $0xb0] sm:$0xff]
  %v73 = vld [vmem:[%s0 + $0xb8] sm:$0xff]
  %v74 = vld [vmem:[%s0 + $0xc0] sm:$0xff]
  %v75 = vld [vmem:[%s0 + $0xc8] sm:$0xff]
  %v76 = vld [vmem:[%s0 + $0xd0] sm:$0xff]
  %v77 = vld [vmem:[%s0 + $0xd8] sm:$0xff]
  %v78 = vld [vmem:[%s0 + $0xe0] sm:$0xff]
  %v79 = vld [vmem:[%s0 + $0xe8] sm:$0xff]
  %v80 = vld [vmem:[%s0 + $0xf0] sm:$0xff]
  %v81 = vld [vmem:[%s0 + $0xf8] sm:$0xff]
  %vm114 = vcmask 1046528
  %v115 = vrot.slane %v50, 1
  %v116 = vrot.slane %v51, 1
  %v117 = vsel %vm114, %v115, %v116
  %v118 = vrot.slane %v52, 1
  %v119 = vsel %vm114, %v116, %v118
  %v120 = vrot.slane %v53, 1
  %v121 = vsel %vm114, %v118, %v120
  %v122 = vrot.slane %v54, 1
  %v123 = vsel %vm114, %v120, %v122
  %v124 = vrot.slane %v55, 1
  %v125 = vsel %vm114, %v122, %v124
  %v126 = vrot.slane %v56, 1
  %v127 = vsel %vm114, %v124, %v126
  %v128 = vrot.slane %v57, 1
  %v129 = vsel %vm114, %v126, %v128
  %v130 = vrot.slane %v58, 1
  %v131 = vsel %vm114, %v128, %v130
  %v132 = vrot.slane %v59, 1
  %v133 = vsel %vm114, %v130, %v132
  %v134 = vrot.slane %v60, 1
  %v135 = vsel %vm114, %v132, %v134
  %v136 = vrot.slane %v61, 1
  %v137 = vsel %vm114, %v134, %v136
  %v138 = vrot.slane %v62, 1
  %v139 = vsel %vm114, %v136, %v138
  %v140 = vrot.slane %v63, 1
  %v141 = vsel %vm114, %v138, %v140
  %v142 = vrot.slane %v64, 1
  %v143 = vsel %vm114, %v140, %v142
  %v144 = vrot.slane %v65, 1
  %v145 = vsel %vm114, %v142, %v144
  %v146 = vrot.slane %v66, 1
  %v147 = vsel %vm114, %v144, %v146
  %v148 = vrot.slane %v67, 1
  %v149 = vsel %vm114, %v146, %v148
  %v150 = vrot.slane %v68, 1
  %v151 = vsel %vm114, %v148, %v150
  %v152 = vrot.slane %v69, 1
  %v153 = vsel %vm114, %v150, %v152
  %v154 = vrot.slane %v70, 1
  %v155 = vsel %vm114, %v152, %v154
  %v156 = vrot.slane %v71, 1
  %v157 = vsel %vm114, %v154, %v156
  %v158 = vrot.slane %v72, 1
  %v159 = vsel %vm114, %v156, %v158
  %v160 = vrot.slane %v73, 1
  %v161 = vsel %vm114, %v158, %v160
  %v162 = vrot.slane %v74, 1
  %v163 = vsel %vm114, %v160, %v162
  %v164 = vrot.slane %v75, 1
  %v165 = vsel %vm114, %v162, %v164
  %v166 = vrot.slane %v76, 1
  %v167 = vsel %vm114, %v164, %v166
  %v168 = vrot.slane %v77, 1
  %v169 = vsel %vm114, %v166, %v168
  %v170 = vrot.slane %v78, 1
  %v171 = vsel %vm114, %v168, %v170
  %v172 = vrot.slane %v79, 1
  %v173 = vsel %vm114, %v170, %v172
  %v174 = vrot.slane %v80, 1
  %v175 = vsel %vm114, %v172, %v174
  %v176 = vrot.slane %v81, 1
  %v177 = vsel %vm114, %v174, %v176
  %178 = vrot.lane.b32.xlu0 %v117, 32
  %v179 = vpop.permute.xlu0 %178
  %180 = vrot.lane.b32.xlu0 %v119, 32
  %v181 = vpop.permute.xlu0 %180
  %182 = vrot.lane.b32.xlu0 %v121, 32
  %v183 = vpop.permute.xlu0 %182
  %184 = vrot.lane.b32.xlu0 %v123, 32
  %v185 = vpop.permute.xlu0 %184
  %186 = vrot.lane.b32.xlu0 %v125, 32
  %v187 = vpop.permute.xlu0 %186
  %188 = vrot.lane.b32.xlu0 %v127, 32
  %v189 = vpop.permute.xlu0 %188
  %190 = vrot.lane.b32.xlu0 %v129, 32
  %v191 = vpop.permute.xlu0 %190
  %192 = vrot.lane.b32.xlu0 %v131, 32
  %v193 = vpop.permute.xlu0 %192
  %194 = vrot.lane.b32.xlu0 %v133, 32
  %v195 = vpop.permute.xlu0 %194
  %196 = vrot.lane.b32.xlu0 %v135, 32
  %v197 = vpop.permute.xlu0 %196
  %198 = vrot.lane.b32.xlu0 %v137, 32
  %v199 = vpop.permute.xlu0 %198
  %200 = vrot.lane.b32.xlu0 %v139, 32
  %v201 = vpop.permute.xlu0 %200
  %202 = vrot.lane.b32.xlu0 %v141, 32
  %v203 = vpop.permute.xlu0 %202
  %204 = vrot.lane.b32.xlu0 %v143, 32
  %v205 = vpop.permute.xlu0 %204
  %206 = vrot.lane.b32.xlu0 %v145, 32
  %v207 = vpop.permute.xlu0 %206
  %208 = vrot.lane.b32.xlu0 %v147, 32
  %v209 = vpop.permute.xlu0 %208
  %210 = vrot.lane.b32.xlu0 %v149, 32
  %v211 = vpop.permute.xlu0 %210
  %212 = vrot.lane.b32.xlu0 %v151, 32
  %v213 = vpop.permute.xlu0 %212
  %214 = vrot.lane.b32.xlu0 %v153, 32
  %v215 = vpop.permute.xlu0 %214
  %216 = vrot.lane.b32.xlu0 %v155, 32
  %v217 = vpop.permute.xlu0 %216
  %218 = vrot.lane.b32.xlu0 %v157, 32
  %v219 = vpop.permute.xlu0 %218
  %220 = vrot.lane.b32.xlu0 %v159, 32
  %v221 = vpop.permute.xlu0 %220
  %222 = vrot.lane.b32.xlu0 %v161, 32
  %v223 = vpop.permute.xlu0 %222
  %224 = vrot.lane.b32.xlu0 %v163, 32
  %v225 = vpop.permute.xlu0 %224
  %226 = vrot.lane.b32.xlu0 %v165, 32
  %v227 = vpop.permute.xlu0 %226
  %228 = vrot.lane.b32.xlu0 %v167, 32
  %v229 = vpop.permute.xlu0 %228
  %230 = vrot.lane.b32.xlu0 %v169, 32
  %v231 = vpop.permute.xlu0 %230
  %232 = vrot.lane.b32.xlu0 %v171, 32
  %v233 = vpop.permute.xlu0 %232
  %234 = vrot.lane.b32.xlu0 %v173, 32
  %v235 = vpop.permute.xlu0 %234
  %236 = vrot.lane.b32.xlu0 %v175, 32
  %v237 = vpop.permute.xlu0 %236
  %238 = vrot.lane.b32.xlu0 %v177, 32
  %v239 = vpop.permute.xlu0 %238
  %240 = vrot.lane.b32.xlu0 %v176, 32
  %v241 = vpop.permute.xlu0 %240
  %vm274 = vcmask 1045504
  %v275 = vrot.slane %v50, 2
  %v276 = vrot.slane %v51, 2
  %v277 = vsel %vm274, %v275, %v276
  %v278 = vrot.slane %v52, 2
  %v279 = vsel %vm274, %v276, %v278
  %v280 = vrot.slane %v53, 2
  %v281 = vsel %vm274, %v278, %v280
  %v282 = vrot.slane %v54, 2
  %v283 = vsel %vm274, %v280, %v282
  %v284 = vrot.slane %v55, 2
  %v285 = vsel %vm274, %v282, %v284
  %v286 = vrot.slane %v56, 2
  %v287 = vsel %vm274, %v284, %v286
  %v288 = vrot.slane %v57, 2
  %v289 = vsel %vm274, %v286, %v288
  %v290 = vrot.slane %v58, 2
  %v291 = vsel %vm274, %v288, %v290
  %v292 = vrot.slane %v59, 2
  %v293 = vsel %vm274, %v290, %v292
  %v294 = vrot.slane %v60, 2
  %v295 = vsel %vm274, %v292, %v294
  %v296 = vrot.slane %v61, 2
  %v297 = vsel %vm274, %v294, %v296
  %v298 = vrot.slane %v62, 2
  %v299 = vsel %vm274, %v296, %v298
  %v300 = vrot.slane %v63, 2
  %v301 = vsel %vm274, %v298, %v300
  %v302 = vrot.slane %v64, 2
  %v303 = vsel %vm274, %v300, %v302
  %v304 = vrot.slane %v65, 2
  %v305 = vsel %vm274, %v302, %v304
  %v306 = vrot.slane %v66, 2
  %v307 = vsel %vm274, %v304, %v306
  %v308 = vrot.slane %v67, 2
  %v309 = vsel %vm274, %v306, %v308
  %v310 = vrot.slane %v68, 2
  %v311 = vsel %vm274, %v308, %v310
  %v312 = vrot.slane %v69, 2
  %v313 = vsel %vm274, %v310, %v312
  %v314 = vrot.slane %v70, 2
  %v315 = vsel %vm274, %v312, %v314
  %v316 = vrot.slane %v71, 2
  %v317 = vsel %vm274, %v314, %v316
  %v318 = vrot.slane %v72, 2
  %v319 = vsel %vm274, %v316, %v318
  %v320 = vrot.slane %v73, 2
  %v321 = vsel %vm274, %v318, %v320
  %v322 = vrot.slane %v74, 2
  %v323 = vsel %vm274, %v320, %v322
  %v324 = vrot.slane %v75, 2
  %v325 = vsel %vm274, %v322, %v324
  %v326 = vrot.slane %v76, 2
  %v327 = vsel %vm274, %v324, %v326
  %v328 = vrot.slane %v77, 2
  %v329 = vsel %vm274, %v326, %v328
  %v330 = vrot.slane %v78, 2
  %v331 = vsel %vm274, %v328, %v330
  %v332 = vrot.slane %v79, 2
  %v333 = vsel %vm274, %v330, %v332
  %v334 = vrot.slane %v80, 2
  %v335 = vsel %vm274, %v332, %v334
  %v336 = vrot.slane %v81, 2
  %v337 = vsel %vm274, %v334, %v336
  %338 = vrot.lane.b32.xlu0 %v277, 64
  %v339 = vpop.permute.xlu0 %338
  %340 = vrot.lane.b32.xlu0 %v279, 64
  %v341 = vpop.permute.xlu0 %340
  %342 = vrot.lane.b32.xlu0 %v281, 64
  %v343 = vpop.permute.xlu0 %342
  %344 = vrot.lane.b32.xlu0 %v283, 64
  %v345 = vpop.permute.xlu0 %344
  %346 = vrot.lane.b32.xlu0 %v285, 64
  %v347 = vpop.permute.xlu0 %346
  %348 = vrot.lane.b32.xlu0 %v287, 64
  %v349 = vpop.permute.xlu0 %348
  %350 = vrot.lane.b32.xlu0 %v289, 64
  %v351 = vpop.permute.xlu0 %350
  %352 = vrot.lane.b32.xlu0 %v291, 64
  %v353 = vpop.permute.xlu0 %352
  %354 = vrot.lane.b32.xlu0 %v293, 64
  %v355 = vpop.permute.xlu0 %354
  %356 = vrot.lane.b32.xlu0 %v295, 64
  %v357 = vpop.permute.xlu0 %356
  %358 = vrot.lane.b32.xlu0 %v297, 64
  %v359 = vpop.permute.xlu0 %358
  %360 = vrot.lane.b32.xlu0 %v299, 64
  %v361 = vpop.permute.xlu0 %360
  %362 = vrot.lane.b32.xlu0 %v301, 64
  %v363 = vpop.permute.xlu0 %362
  %364 = vrot.lane.b32.xlu0 %v303, 64
  %v365 = vpop.permute.xlu0 %364
  %366 = vrot.lane.b32.xlu0 %v305, 64
  %v367 = vpop.permute.xlu0 %366
  %368 = vrot.lane.b32.xlu0 %v307, 64
  %v369 = vpop.permute.xlu0 %368
  %370 = vrot.lane.b32.xlu0 %v309, 64
  %v371 = vpop.permute.xlu0 %370
  %372 = vrot.lane.b32.xlu0 %v311, 64
  %v373 = vpop.permute.xlu0 %372
  %374 = vrot.lane.b32.xlu0 %v313, 64
  %v375 = vpop.permute.xlu0 %374
  %376 = vrot.lane.b32.xlu0 %v315, 64
  %v377 = vpop.permute.xlu0 %376
  %378 = vrot.lane.b32.xlu0 %v317, 64
  %v379 = vpop.permute.xlu0 %378
  %380 = vrot.lane.b32.xlu0 %v319, 64
  %v381 = vpop.permute.xlu0 %380
  %382 = vrot.lane.b32.xlu0 %v321, 64
  %v383 = vpop.permute.xlu0 %382
  %384 = vrot.lane.b32.xlu0 %v323, 64
  %v385 = vpop.permute.xlu0 %384
  %386 = vrot.lane.b32.xlu0 %v325, 64
  %v387 = vpop.permute.xlu0 %386
  %388 = vrot.lane.b32.xlu0 %v327, 64
  %v389 = vpop.permute.xlu0 %388
  %390 = vrot.lane.b32.xlu0 %v329, 64
  %v391 = vpop.permute.xlu0 %390
  %392 = vrot.lane.b32.xlu0 %v331, 64
  %v393 = vpop.permute.xlu0 %392
  %394 = vrot.lane.b32.xlu0 %v333, 64
  %v395 = vpop.permute.xlu0 %394
  %396 = vrot.lane.b32.xlu0 %v335, 64
  %v397 = vpop.permute.xlu0 %396
  %398 = vrot.lane.b32.xlu0 %v337, 64
  %v399 = vpop.permute.xlu0 %398
  %400 = vrot.lane.b32.xlu0 %v336, 64
  %v401 = vpop.permute.xlu0 %400
  %vm434 = vcmask 1044480
  %v435 = vrot.slane %v50, 3
  %v436 = vrot.slane %v51, 3
  %v437 = vsel %vm434, %v435, %v436
  %v438 = vrot.slane %v52, 3
  %v439 = vsel %vm434, %v436, %v438
  %v440 = vrot.slane %v53, 3
  %v441 = vsel %vm434, %v438, %v440
  %v442 = vrot.slane %v54, 3
  %v443 = vsel %vm434, %v440, %v442
  %v444 = vrot.slane %v55, 3
  %v445 = vsel %vm434, %v442, %v444
  %v446 = vrot.slane %v56, 3
  %v447 = vsel %vm434, %v444, %v446
  %v448 = vrot.slane %v57, 3
  %v449 = vsel %vm434, %v446, %v448
  %v450 = vrot.slane %v58, 3
  %v451 = vsel %vm434, %v448, %v450
  %v452 = vrot.slane %v59, 3
  %v453 = vsel %vm434, %v450, %v452
  %v454 = vrot.slane %v60, 3
  %v455 = vsel %vm434, %v452, %v454
  %v456 = vrot.slane %v61, 3
  %v457 = vsel %vm434, %v454, %v456
  %v458 = vrot.slane %v62, 3
  %v459 = vsel %vm434, %v456, %v458
  %v460 = vrot.slane %v63, 3
  %v461 = vsel %vm434, %v458, %v460
  %v462 = vrot.slane %v64, 3
  %v463 = vsel %vm434, %v460, %v462
  %v464 = vrot.slane %v65, 3
  %v465 = vsel %vm434, %v462, %v464
  %v466 = vrot.slane %v66, 3
  %v467 = vsel %vm434, %v464, %v466
  %v468 = vrot.slane %v67, 3
  %v469 = vsel %vm434, %v466, %v468
  %v470 = vrot.slane %v68, 3
  %v471 = vsel %vm434, %v468, %v470
  %v472 = vrot.slane %v69, 3
  %v473 = vsel %vm434, %v470, %v472
  %v474 = vrot.slane %v70, 3
  %v475 = vsel %vm434, %v472, %v474
  %v476 = vrot.slane %v71, 3
  %v477 = vsel %vm434, %v474, %v476
  %v478 = vrot.slane %v72, 3
  %v479 = vsel %vm434, %v476, %v478
  %v480 = vrot.slane %v73, 3
  %v481 = vsel %vm434, %v478, %v480
  %v482 = vrot.slane %v74, 3
  %v483 = vsel %vm434, %v480, %v482
  %v484 = vrot.slane %v75, 3
  %v485 = vsel %vm434, %v482, %v484
  %v486 = vrot.slane %v76, 3
  %v487 = vsel %vm434, %v484, %v486
  %v488 = vrot.slane %v77, 3
  %v489 = vsel %vm434, %v486, %v488
  %v490 = vrot.slane %v78, 3
  %v491 = vsel %vm434, %v488, %v490
  %v492 = vrot.slane %v79, 3
  %v493 = vsel %vm434, %v490, %v492
  %v494 = vrot.slane %v80, 3
  %v495 = vsel %vm434, %v492, %v494
  %v496 = vrot.slane %v81, 3
  %v497 = vsel %vm434, %v494, %v496
  %498 = vrot.lane.b32.xlu0 %v437, 96
  %v499 = vpop.permute.xlu0 %498
  %500 = vrot.lane.b32.xlu0 %v439, 96
  %v501 = vpop.permute.xlu0 %500
  %502 = vrot.lane.b32.xlu0 %v441, 96
  %v503 = vpop.permute.xlu0 %502
  %504 = vrot.lane.b32.xlu0 %v443, 96
  %v505 = vpop.permute.xlu0 %504
  %506 = vrot.lane.b32.xlu0 %v445, 96
  %v507 = vpop.permute.xlu0 %506
  %508 = vrot.lane.b32.xlu0 %v447, 96
  %v509 = vpop.permute.xlu0 %508
  %510 = vrot.lane.b32.xlu0 %v449, 96
  %v511 = vpop.permute.xlu0 %510
  %512 = vrot.lane.b32.xlu0 %v451, 96
  %v513 = vpop.permute.xlu0 %512
  %514 = vrot.lane.b32.xlu0 %v453, 96
  %v515 = vpop.permute.xlu0 %514
  %516 = vrot.lane.b32.xlu0 %v455, 96
  %v517 = vpop.permute.xlu0 %516
  %518 = vrot.lane.b32.xlu0 %v457, 96
  %v519 = vpop.permute.xlu0 %518
  %520 = vrot.lane.b32.xlu0 %v459, 96
  %v521 = vpop.permute.xlu0 %520
  %522 = vrot.lane.b32.xlu0 %v461, 96
  %v523 = vpop.permute.xlu0 %522
  %524 = vrot.lane.b32.xlu0 %v463, 96
  %v525 = vpop.permute.xlu0 %524
  %526 = vrot.lane.b32.xlu0 %v465, 96
  %v527 = vpop.permute.xlu0 %526
  %528 = vrot.lane.b32.xlu0 %v467, 96
  %v529 = vpop.permute.xlu0 %528
  %530 = vrot.lane.b32.xlu0 %v469, 96
  %v531 = vpop.permute.xlu0 %530
  %532 = vrot.lane.b32.xlu0 %v471, 96
  %v533 = vpop.permute.xlu0 %532
  %534 = vrot.lane.b32.xlu0 %v473, 96
  %v535 = vpop.permute.xlu0 %534
  %536 = vrot.lane.b32.xlu0 %v475, 96
  %v537 = vpop.permute.xlu0 %536
  %538 = vrot.lane.b32.xlu0 %v477, 96
  %v539 = vpop.permute.xlu0 %538
  %540 = vrot.lane.b32.xlu0 %v479, 96
  %v541 = vpop.permute.xlu0 %540
  %542 = vrot.lane.b32.xlu0 %v481, 96
  %v543 = vpop.permute.xlu0 %542
  %544 = vrot.lane.b32.xlu0 %v483, 96
  %v545 = vpop.permute.xlu0 %544
  %546 = vrot.lane.b32.xlu0 %v485, 96
  %v547 = vpop.permute.xlu0 %546
  %548 = vrot.lane.b32.xlu0 %v487, 96
  %v549 = vpop.permute.xlu0 %548
  %550 = vrot.lane.b32.xlu0 %v489, 96
  %v551 = vpop.permute.xlu0 %550
  %552 = vrot.lane.b32.xlu0 %v491, 96
  %v553 = vpop.permute.xlu0 %552
  %554 = vrot.lane.b32.xlu0 %v493, 96
  %v555 = vpop.permute.xlu0 %554
  %556 = vrot.lane.b32.xlu0 %v495, 96
  %v557 = vpop.permute.xlu0 %556
  %558 = vrot.lane.b32.xlu0 %v497, 96
  %v559 = vpop.permute.xlu0 %558
  %560 = vrot.lane.b32.xlu0 %v496, 96
  %v561 = vpop.permute.xlu0 %560
  %vm594 = vcmask 1043456
  %v595 = vrot.slane %v50, 4
  %v596 = vrot.slane %v51, 4
  %v597 = vsel %vm594, %v595, %v596
  %v598 = vrot.slane %v52, 4
  %v599 = vsel %vm594, %v596, %v598
  %v600 = vrot.slane %v53, 4
  %v601 = vsel %vm594, %v598, %v600
  %v602 = vrot.slane %v54, 4
  %v603 = vsel %vm594, %v600, %v602
  %v604 = vrot.slane %v55, 4
  %v605 = vsel %vm594, %v602, %v604
  %v606 = vrot.slane %v56, 4
  %v607 = vsel %vm594, %v604, %v606
  %v608 = vrot.slane %v57, 4
  %v609 = vsel %vm594, %v606, %v608
  %v610 = vrot.slane %v58, 4
  %v611 = vsel %vm594, %v608, %v610
  %v612 = vrot.slane %v59, 4
  %v613 = vsel %vm594, %v610, %v612
  %v614 = vrot.slane %v60, 4
  %v615 = vsel %vm594, %v612, %v614
  %v616 = vrot.slane %v61, 4
  %v617 = vsel %vm594, %v614, %v616
  %v618 = vrot.slane %v62, 4
  %v619 = vsel %vm594, %v616, %v618
  %v620 = vrot.slane %v63, 4
  %v621 = vsel %vm594, %v618, %v620
  %v622 = vrot.slane %v64, 4
  %v623 = vsel %vm594, %v620, %v622
  %v624 = vrot.slane %v65, 4
  %v625 = vsel %vm594, %v622, %v624
  %v626 = vrot.slane %v66, 4
  %v627 = vsel %vm594, %v624, %v626
  %v628 = vrot.slane %v67, 4
  %v629 = vsel %vm594, %v626, %v628
  %v630 = vrot.slane %v68, 4
  %v631 = vsel %vm594, %v628, %v630
  %v632 = vrot.slane %v69, 4
  %v633 = vsel %vm594, %v630, %v632
  %v634 = vrot.slane %v70, 4
  %v635 = vsel %vm594, %v632, %v634
  %v636 = vrot.slane %v71, 4
  %v637 = vsel %vm594, %v634, %v636
  %v638 = vrot.slane %v72, 4
  %v639 = vsel %vm594, %v636, %v638
  %v640 = vrot.slane %v73, 4
  %v641 = vsel %vm594, %v638, %v640
  %v642 = vrot.slane %v74, 4
  %v643 = vsel %vm594, %v640, %v642
  %v644 = vrot.slane %v75, 4
  %v645 = vsel %vm594, %v642, %v644
  %v646 = vrot.slane %v76, 4
  %v647 = vsel %vm594, %v644, %v646
  %v648 = vrot.slane %v77, 4
  %v649 = vsel %vm594, %v646, %v648
  %v650 = vrot.slane %v78, 4
  %v651 = vsel %vm594, %v648, %v650
  %v652 = vrot.slane %v79, 4
  %v653 = vsel %vm594, %v650, %v652
  %v654 = vrot.slane %v80, 4
  %v655 = vsel %vm594, %v652, %v654
  %v656 = vrot.slane %v81, 4
  %v657 = vsel %vm594, %v654, %v656
  %vm658 = vcmask 261120
  %v659 = vsel %vm658, %v50, %v179
  %v660 = vsel %vm658, %v51, %v181
  %v661 = vsel %vm658, %v52, %v183
  %v662 = vsel %vm658, %v53, %v185
  %v663 = vsel %vm658, %v54, %v187
  %v664 = vsel %vm658, %v55, %v189
  %v665 = vsel %vm658, %v56, %v191
  %v666 = vsel %vm658, %v57, %v193
  %v667 = vsel %vm658, %v58, %v195
  %v668 = vsel %vm658, %v59, %v197
  %v669 = vsel %vm658, %v60, %v199
  %v670 = vsel %vm658, %v61, %v201
  %v671 = vsel %vm658, %v62, %v203
  %v672 = vsel %vm658, %v63, %v205
  %v673 = vsel %vm658, %v64, %v207
  %v674 = vsel %vm658, %v65, %v209
  %v675 = vsel %vm658, %v66, %v211
  %v676 = vsel %vm658, %v67, %v213
  %v677 = vsel %vm658, %v68, %v215
  %v678 = vsel %vm658, %v69, %v217
  %v679 = vsel %vm658, %v70, %v219
  %v680 = vsel %vm658, %v71, %v221
  %v681 = vsel %vm658, %v72, %v223
  %v682 = vsel %vm658, %v73, %v225
  %v683 = vsel %vm658, %v74, %v227
  %v684 = vsel %vm658, %v75, %v229
  %v685 = vsel %vm658, %v76, %v231
  %v686 = vsel %vm658, %v77, %v233
  %v687 = vsel %vm658, %v78, %v235
  %v688 = vsel %vm658, %v79, %v237
  %v689 = vsel %vm658, %v80, %v239
  %v690 = vsel %vm658, %v81, %v241
  %vm691 = vcmask 523264
  %v692 = vsel %vm691, %v659, %v339
  %v693 = vsel %vm691, %v660, %v341
  %v694 = vsel %vm691, %v661, %v343
  %v695 = vsel %vm691, %v662, %v345
  %v696 = vsel %vm691, %v663, %v347
  %v697 = vsel %vm691, %v664, %v349
  %v698 = vsel %vm691, %v665, %v351
  %v699 = vsel %vm691, %v666, %v353
  %v700 = vsel %vm691, %v667, %v355
  %v701 = vsel %vm691, %v668, %v357
  %v702 = vsel %vm691, %v669, %v359
  %v703 = vsel %vm691, %v670, %v361
  %v704 = vsel %vm691, %v671, %v363
  %v705 = vsel %vm691, %v672, %v365
  %v706 = vsel %vm691, %v673, %v367
  %v707 = vsel %vm691, %v674, %v369
  %v708 = vsel %vm691, %v675, %v371
  %v709 = vsel %vm691, %v676, %v373
  %v710 = vsel %vm691, %v677, %v375
  %v711 = vsel %vm691, %v678, %v377
  %v712 = vsel %vm691, %v679, %v379
  %v713 = vsel %vm691, %v680, %v381
  %v714 = vsel %vm691, %v681, %v383
  %v715 = vsel %vm691, %v682, %v385
  %v716 = vsel %vm691, %v683, %v387
  %v717 = vsel %vm691, %v684, %v389
  %v718 = vsel %vm691, %v685, %v391
  %v719 = vsel %vm691, %v686, %v393
  %v720 = vsel %vm691, %v687, %v395
  %v721 = vsel %vm691, %v688, %v397
  %v722 = vsel %vm691, %v689, %v399
  %v723 = vsel %vm691, %v690, %v401
  %vm724 = vcmask 785408
  %v725 = vsel %vm724, %v692, %v499
  %v726 = vsel %vm724, %v693, %v501
  %v727 = vsel %vm724, %v694, %v503
  %v728 = vsel %vm724, %v695, %v505
  %v729 = vsel %vm724, %v696, %v507
  %v730 = vsel %vm724, %v697, %v509
  %v731 = vsel %vm724, %v698, %v511
  %v732 = vsel %vm724, %v699, %v513
  %v733 = vsel %vm724, %v700, %v515
  %v734 = vsel %vm724, %v701, %v517
  %v735 = vsel %vm724, %v702, %v519
  %v736 = vsel %vm724, %v703, %v521
  %v737 = vsel %vm724, %v704, %v523
  %v738 = vsel %vm724, %v705, %v525
  %v739 = vsel %vm724, %v706, %v527
  %v740 = vsel %vm724, %v707, %v529
  %v741 = vsel %vm724, %v708, %v531
  %v742 = vsel %vm724, %v709, %v533
  %v743 = vsel %vm724, %v710, %v535
  %v744 = vsel %vm724, %v711, %v537
  %v745 = vsel %vm724, %v712, %v539
  %v746 = vsel %vm724, %v713, %v541
  %v747 = vsel %vm724, %v714, %v543
  %v748 = vsel %vm724, %v715, %v545
  %v749 = vsel %vm724, %v716, %v547
  %v750 = vsel %vm724, %v717, %v549
  %v751 = vsel %vm724, %v718, %v551
  %v752 = vsel %vm724, %v719, %v553
  %v753 = vsel %vm724, %v720, %v555
  %v754 = vsel %vm724, %v721, %v557
  %v755 = vsel %vm724, %v722, %v559
  %v756 = vsel %vm724, %v723, %v561
  %v757 = vld [vmem:[%s1] sm:$0xff]
  %v758 = vld [vmem:[%s1 + $0x8] sm:$0xff]
  %v759 = vld [vmem:[%s1 + $0x10] sm:$0xff]
  %v760 = vld [vmem:[%s1 + $0x18] sm:$0xff]
  %v761 = vld [vmem:[%s1 + $0x20] sm:$0xff]
  %v762 = vld [vmem:[%s1 + $0x28] sm:$0xff]
  %v763 = vld [vmem:[%s1 + $0x30] sm:$0xff]
  %v764 = vld [vmem:[%s1 + $0x38] sm:$0xff]
  %v765 = vld [vmem:[%s1 + $0x40] sm:$0xff]
  %v766 = vld [vmem:[%s1 + $0x48] sm:$0xff]
  %v767 = vld [vmem:[%s1 + $0x50] sm:$0xff]
  %v768 = vld [vmem:[%s1 + $0x58] sm:$0xff]
  %v769 = vld [vmem:[%s1 + $0x60] sm:$0xff]
  %v770 = vld [vmem:[%s1 + $0x68] sm:$0xff]
  %v771 = vld [vmem:[%s1 + $0x70] sm:$0xff]
  %v772 = vld [vmem:[%s1 + $0x78] sm:$0xff]
  %v773 = vld [vmem:[%s1 + $0x80] sm:$0xff]
  %v774 = vld [vmem:[%s1 + $0x88] sm:$0xff]
  %v775 = vld [vmem:[%s1 + $0x90] sm:$0xff]
  %v776 = vld [vmem:[%s1 + $0x98] sm:$0xff]
  %v777 = vld [vmem:[%s1 + $0xa0] sm:$0xff]
  %v778 = vld [vmem:[%s1 + $0xa8] sm:$0xff]
  %v779 = vld [vmem:[%s1 + $0xb0] sm:$0xff]
  %v780 = vld [vmem:[%s1 + $0xb8] sm:$0xff]
  %v781 = vld [vmem:[%s1 + $0xc0] sm:$0xff]
  %v782 = vld [vmem:[%s1 + $0xc8] sm:$0xff]
  %v783 = vld [vmem:[%s1 + $0xd0] sm:$0xff]
  %v784 = vld [vmem:[%s1 + $0xd8] sm:$0xff]
  %v785 = vld [vmem:[%s1 + $0xe0] sm:$0xff]
  %v786 = vld [vmem:[%s1 + $0xe8] sm:$0xff]
  %v787 = vld [vmem:[%s1 + $0xf0] sm:$0xff]
  %v788 = vld [vmem:[%s1 + $0xf8] sm:$0xff]
  %v789 = vld [vmem:[%s1 + $0x100] sm:$0xff]
  %v790 = vld [vmem:[%s1 + $0x108] sm:$0xff]
  %v791 = vld [vmem:[%s1 + $0x110] sm:$0xff]
  %v792 = vld [vmem:[%s1 + $0x118] sm:$0xff]
  %v793 = vld [vmem:[%s1 + $0x120] sm:$0xff]
  %v794 = vld [vmem:[%s1 + $0x128] sm:$0xff]
  %v795 = vld [vmem:[%s1 + $0x130] sm:$0xff]
  %v796 = vld [vmem:[%s1 + $0x138] sm:$0xff]
  %v797 = vld [vmem:[%s2] sm:$0x3]
  %v799 = vlaneseq
  %v800 = vshrl.u32 %v799, 7
  %v801 = vsub.s32 0, %v800
  %v802 = vrot.slane %v797, %v801
  %v803 = vlaneseq
  %v804 = vshrl.u32 %v803, 7
  %v805 = vsub.s32 1, %v804
  %v806 = vrot.slane %v797, %v805
  %v809 = vsel %vm658, %v597, 0
  %v811 = vsel %vm658, %v599, 0
  %v813 = vsel %vm658, %v601, 0
  %v815 = vsel %vm658, %v603, 0
  %v817 = vsel %vm658, %v605, 0
  %v819 = vsel %vm658, %v607, 0
  %v821 = vsel %vm658, %v609, 0
  %v823 = vsel %vm658, %v611, 0
  %v825 = vsel %vm658, %v613, 0
  %v827 = vsel %vm658, %v615, 0
  %v829 = vsel %vm658, %v617, 0
  %v831 = vsel %vm658, %v619, 0
  %v833 = vsel %vm658, %v621, 0
  %v835 = vsel %vm658, %v623, 0
  %v837 = vsel %vm658, %v625, 0
  %v839 = vsel %vm658, %v627, 0
  %v841 = vsel %vm658, %v629, 0
  %v843 = vsel %vm658, %v631, 0
  %v845 = vsel %vm658, %v633, 0
  %v847 = vsel %vm658, %v635, 0
  %v849 = vsel %vm658, %v637, 0
  %v851 = vsel %vm658, %v639, 0
  %v853 = vsel %vm658, %v641, 0
  %v855 = vsel %vm658, %v643, 0
  %v857 = vsel %vm658, %v645, 0
  %v859 = vsel %vm658, %v647, 0
  %v861 = vsel %vm658, %v649, 0
  %v863 = vsel %vm658, %v651, 0
  %v865 = vsel %vm658, %v653, 0
  %v867 = vsel %vm658, %v655, 0
  %v869 = vsel %vm658, %v657, 0
  %v871 = vsel %vm658, %v656, 0
  %873 = vmatprep.subr.mxu0 %v758
  %874 = vmatpush1.msra.mxu0 %v757
  %875 = vmatprep.subr.mxu0 %v760
  %876 = vmatpush1.msra.mxu0 %v759
  %877 = vmatprep.subr.mxu0 %v762
  %878 = vmatpush1.msra.mxu0 %v761
  %879 = vmatprep.subr.mxu0 %v764
  %880 = vmatpush1.msra.mxu0 %v763
  %881 = vmatprep.subr.mxu0 %v766
  %882 = vmatpush1.msra.mxu0 %v765
  %883 = vmatprep.subr.mxu0 %v768
  %884 = vmatpush1.msra.mxu0 %v767
  %885 = vmatprep.subr.mxu0 %v770
  %886 = vmatpush1.msra.mxu0 %v769
  %887 = vmatprep.subr.mxu0 %v772
  %888 = vmatpush1.msra.mxu0 %v771
  %889 = vmatprep.subr.mxu0 %v774
  %890 = vmatpush1.msra.mxu0 %v773
  %891 = vmatprep.subr.mxu0 %v776
  %892 = vmatpush1.msra.mxu0 %v775
  %893 = vmatprep.subr.mxu0 %v778
  %894 = vmatpush1.msra.mxu0 %v777
  %895 = vmatprep.subr.mxu0 %v780
  %896 = vmatpush1.msra.mxu0 %v779
  %897 = vmatprep.subr.mxu0 %v782
  %898 = vmatpush1.msra.mxu0 %v781
  %899 = vmatprep.subr.mxu0 %v784
  %900 = vmatpush1.msra.mxu0 %v783
  %901 = vmatprep.subr.mxu0 %v786
  %902 = vmatpush1.msra.mxu0 %v785
  %903 = vmatprep.subr.mxu0 %v788
  %904 = vmatpush1.msra.mxu0 %v787
  %905 = vmatprep.subr.mxu0 %v790
  %906 = vmatpush1.msra.mxu0 %v789
  %907 = vmatprep.subr.mxu0 %v792
  %908 = vmatpush1.msra.mxu0 %v791
  %909 = vmatprep.subr.mxu0 %v794
  %910 = vmatpush1.msra.mxu0 %v793
  %911 = vmatprep.subr.mxu0 %v796
  %912 = vmatpush1.msra.mxu0 %v795
  %913 = vmatprep.subr.mxu0 0.0
  %914 = vmatpush1.msra.mxu0 0.0
  %915 = vmatprep.subr.mxu0 0.0
  %916 = vmatpush1.msra.mxu0 0.0
  %917 = vmatprep.subr.mxu0 0.0
  %918 = vmatpush1.msra.mxu0 0.0
  %919 = vmatprep.subr.mxu0 0.0
  %920 = vmatpush1.msra.mxu0 0.0
  %921 = vmatprep.subr.mxu0 0.0
  %922 = vmatpush1.msra.mxu0 0.0
  %923 = vmatprep.subr.mxu0 0.0
  %924 = vmatpush1.msra.mxu0 0.0
  %925 = vmatprep.subr.mxu0 0.0
  %926 = vmatpush1.msra.mxu0 0.0
  %927 = vmatprep.subr.mxu0 0.0
  %928 = vmatpush1.msra.mxu0 0.0
  %929 = vmatprep.subr.mxu0 0.0
  %930 = vmatpush1.msra.mxu0 0.0
  %931 = vmatprep.subr.mxu0 0.0
  %932 = vmatpush1.msra.mxu0 0.0
  %933 = vmatprep.subr.mxu0 0.0
  %934 = vmatpush1.msra.mxu0 0.0
  %935 = vmatprep.subr.mxu0 0.0
  %936 = vmatpush1.msra.mxu0 0.0
  %937 = vmatprep.mubr.f32.mxu0 %v809
  %938 = vmatmul.mubr.f32.gmra.mrb[0].mxu0 %v725
  %v939 = vpop.f32.mrb[0].mxu0
  %v940 = vadd.f32 %v802, %v939
  %v941 = vpop.f32.mrb[0].mxu0
  %v942 = vadd.f32 %v806, %v941
  %943 = vmatprep.mubr.f32.mxu0 %v811
  %944 = vmatmul.mubr.f32.gmra.mrb[0].mxu0 %v726
  %v945 = vpop.f32.mrb[0].mxu0
  %v946 = vadd.f32 %v802, %v945
  %v947 = vpop.f32.mrb[0].mxu0
  %v948 = vadd.f32 %v806, %v947
  %949 = vmatprep.mubr.f32.mxu0 %v813
  %950 = vmatmul.mubr.f32.gmra.mrb[0].mxu0 %v727
  %v951 = vpop.f32.mrb[0].mxu0
  %v952 = vadd.f32 %v802, %v951
  %v953 = vpop.f32.mrb[0].mxu0
  %v954 = vadd.f32 %v806, %v953
  %955 = vmatprep.mubr.f32.mxu0 %v815
  %956 = vmatmul.mubr.f32.gmra.mrb[0].mxu0 %v728
  %v957 = vpop.f32.mrb[0].mxu0
  %v958 = vadd.f32 %v802, %v957
  %v959 = vpop.f32.mrb[0].mxu0
  %v960 = vadd.f32 %v806, %v959
  %961 = vmatprep.mubr.f32.mxu0 %v817
  %962 = vmatmul.mubr.f32.gmra.mrb[0].mxu0 %v729
  %v963 = vpop.f32.mrb[0].mxu0
  %v964 = vadd.f32 %v802, %v963
  %v965 = vpop.f32.mrb[0].mxu0
  %v966 = vadd.f32 %v806, %v965
  %967 = vmatprep.mubr.f32.mxu0 %v819
  %968 = vmatmul.mubr.f32.gmra.mrb[0].mxu0 %v730
  %v969 = vpop.f32.mrb[0].mxu0
  %v970 = vadd.f32 %v802, %v969
  %v971 = vpop.f32.mrb[0].mxu0
  %v972 = vadd.f32 %v806, %v971
  %973 = vmatprep.mubr.f32.mxu0 %v821
  %974 = vmatmul.mubr.f32.gmra.mrb[0].mxu0 %v731
  %v975 = vpop.f32.mrb[0].mxu0
  %v976 = vadd.f32 %v802, %v975
  %v977 = vpop.f32.mrb[0].mxu0
  %v978 = vadd.f32 %v806, %v977
  %979 = vmatprep.mubr.f32.mxu0 %v823
  %980 = vmatmul.mubr.f32.gmra.mrb[0].mxu0 %v732
  %v981 = vpop.f32.mrb[0].mxu0
  %v982 = vadd.f32 %v802, %v981
  %v983 = vpop.f32.mrb[0].mxu0
  %v984 = vadd.f32 %v806, %v983
  %985 = vmatprep.mubr.f32.mxu0 %v825
  %986 = vmatmul.mubr.f32.gmra.mrb[0].mxu0 %v733
  %v987 = vpop.f32.mrb[0].mxu0
  %v988 = vadd.f32 %v802, %v987
  %v989 = vpop.f32.mrb[0].mxu0
  %v990 = vadd.f32 %v806, %v989
  %991 = vmatprep.mubr.f32.mxu0 %v827
  %992 = vmatmul.mubr.f32.gmra.mrb[0].mxu0 %v734
  %v993 = vpop.f32.mrb[0].mxu0
  %v994 = vadd.f32 %v802, %v993
  %v995 = vpop.f32.mrb[0].mxu0
  %v996 = vadd.f32 %v806, %v995
  %997 = vmatprep.mubr.f32.mxu0 %v829
  %998 = vmatmul.mubr.f32.gmra.mrb[0].mxu0 %v735
  %v999 = vpop.f32.mrb[0].mxu0
  %v1000 = vadd.f32 %v802, %v999
  %v1001 = vpop.f32.mrb[0].mxu0
  %v1002 = vadd.f32 %v806, %v1001
  %1003 = vmatprep.mubr.f32.mxu0 %v831
  %1004 = vmatmul.mubr.f32.gmra.mrb[0].mxu0 %v736
  %v1005 = vpop.f32.mrb[0].mxu0
  %v1006 = vadd.f32 %v802, %v1005
  %v1007 = vpop.f32.mrb[0].mxu0
  %v1008 = vadd.f32 %v806, %v1007
  %1009 = vmatprep.mubr.f32.mxu0 %v833
  %1010 = vmatmul.mubr.f32.gmra.mrb[0].mxu0 %v737
  %v1011 = vpop.f32.mrb[0].mxu0
  %v1012 = vadd.f32 %v802, %v1011
  %v1013 = vpop.f32.mrb[0].mxu0
  %v1014 = vadd.f32 %v806, %v1013
  %1015 = vmatprep.mubr.f32.mxu0 %v835
  %1016 = vmatmul.mubr.f32.gmra.mrb[0].mxu0 %v738
  %v1017 = vpop.f32.mrb[0].mxu0
  %v1018 = vadd.f32 %v802, %v1017
  %v1019 = vpop.f32.mrb[0].mxu0
  %v1020 = vadd.f32 %v806, %v1019
  %1021 = vmatprep.mubr.f32.mxu0 %v837
  %1022 = vmatmul.mubr.f32.gmra.mrb[0].mxu0 %v739
  %v1023 = vpop.f32.mrb[0].mxu0
  %v1024 = vadd.f32 %v802, %v1023
  %v1025 = vpop.f32.mrb[0].mxu0
  %v1026 = vadd.f32 %v806, %v1025
  %1027 = vmatprep.mubr.f32.mxu0 %v839
  %1028 = vmatmul.mubr.f32.gmra.mrb[0].mxu0 %v740
  %v1029 = vpop.f32.mrb[0].mxu0
  %v1030 = vadd.f32 %v802, %v1029
  %v1031 = vpop.f32.mrb[0].mxu0
  %v1032 = vadd.f32 %v806, %v1031
  %1033 = vmatprep.mubr.f32.mxu0 %v841
  %1034 = vmatmul.mubr.f32.gmra.mrb[0].mxu0 %v741
  %v1035 = vpop.f32.mrb[0].mxu0
  %v1036 = vadd.f32 %v802, %v1035
  %v1037 = vpop.f32.mrb[0].mxu0
  %v1038 = vadd.f32 %v806, %v1037
  %1039 = vmatprep.mubr.f32.mxu0 %v843
  %1040 = vmatmul.mubr.f32.gmra.mrb[0].mxu0 %v742
  %v1041 = vpop.f32.mrb[0].mxu0
  %v1042 = vadd.f32 %v802, %v1041
  %v1043 = vpop.f32.mrb[0].mxu0
  %v1044 = vadd.f32 %v806, %v1043
  %1045 = vmatprep.mubr.f32.mxu0 %v845
  %1046 = vmatmul.mubr.f32.gmra.mrb[0].mxu0 %v743
  %v1047 = vpop.f32.mrb[0].mxu0
  %v1048 = vadd.f32 %v802, %v1047
  %v1049 = vpop.f32.mrb[0].mxu0
  %v1050 = vadd.f32 %v806, %v1049
  %1051 = vmatprep.mubr.f32.mxu0 %v847
  %1052 = vmatmul.mubr.f32.gmra.mrb[0].mxu0 %v744
  %v1053 = vpop.f32.mrb[0].mxu0
  %v1054 = vadd.f32 %v802, %v1053
  %v1055 = vpop.f32.mrb[0].mxu0
  %v1056 = vadd.f32 %v806, %v1055
  %1057 = vmatprep.mubr.f32.mxu0 %v849
  %1058 = vmatmul.mubr.f32.gmra.mrb[0].mxu0 %v745
  %v1059 = vpop.f32.mrb[0].mxu0
  %v1060 = vadd.f32 %v802, %v1059
  %v1061 = vpop.f32.mrb[0].mxu0
  %v1062 = vadd.f32 %v806, %v1061
  %1063 = vmatprep.mubr.f32.mxu0 %v851
  %1064 = vmatmul.mubr.f32.gmra.mrb[0].mxu0 %v746
  %v1065 = vpop.f32.mrb[0].mxu0
  %v1066 = vadd.f32 %v802, %v1065
  %v1067 = vpop.f32.mrb[0].mxu0
  %v1068 = vadd.f32 %v806, %v1067
  %1069 = vmatprep.mubr.f32.mxu0 %v853
  %1070 = vmatmul.mubr.f32.gmra.mrb[0].mxu0 %v747
  %v1071 = vpop.f32.mrb[0].mxu0
  %v1072 = vadd.f32 %v802, %v1071
  %v1073 = vpop.f32.mrb[0].mxu0
  %v1074 = vadd.f32 %v806, %v1073
  %1075 = vmatprep.mubr.f32.mxu0 %v855
  %1076 = vmatmul.mubr.f32.gmra.mrb[0].mxu0 %v748
  %v1077 = vpop.f32.mrb[0].mxu0
  %v1078 = vadd.f32 %v802, %v1077
  %v1079 = vpop.f32.mrb[0].mxu0
  %v1080 = vadd.f32 %v806, %v1079
  %1081 = vmatprep.mubr.f32.mxu0 %v857
  %1082 = vmatmul.mubr.f32.gmra.mrb[0].mxu0 %v749
  %v1083 = vpop.f32.mrb[0].mxu0
  %v1084 = vadd.f32 %v802, %v1083
  %v1085 = vpop.f32.mrb[0].mxu0
  %v1086 = vadd.f32 %v806, %v1085
  %1087 = vmatprep.mubr.f32.mxu0 %v859
  %1088 = vmatmul.mubr.f32.gmra.mrb[0].mxu0 %v750
  %v1089 = vpop.f32.mrb[0].mxu0
  %v1090 = vadd.f32 %v802, %v1089
  %v1091 = vpop.f32.mrb[0].mxu0
  %v1092 = vadd.f32 %v806, %v1091
  %1093 = vmatprep.mubr.f32.mxu0 %v861
  %1094 = vmatmul.mubr.f32.gmra.mrb[0].mxu0 %v751
  %v1095 = vpop.f32.mrb[0].mxu0
  %v1096 = vadd.f32 %v802, %v1095
  %v1097 = vpop.f32.mrb[0].mxu0
  %v1098 = vadd.f32 %v806, %v1097
  %1099 = vmatprep.mubr.f32.mxu0 %v863
  %1100 = vmatmul.mubr.f32.gmra.mrb[0].mxu0 %v752
  %v1101 = vpop.f32.mrb[0].mxu0
  %v1102 = vadd.f32 %v802, %v1101
  %v1103 = vpop.f32.mrb[0].mxu0
  %v1104 = vadd.f32 %v806, %v1103
  %1105 = vmatprep.mubr.f32.mxu0 %v865
  %1106 = vmatmul.mubr.f32.gmra.mrb[0].mxu0 %v753
  %v1107 = vpop.f32.mrb[0].mxu0
  %v1108 = vadd.f32 %v802, %v1107
  %v1109 = vpop.f32.mrb[0].mxu0
  %v1110 = vadd.f32 %v806, %v1109
  %1111 = vmatprep.mubr.f32.mxu0 %v867
  %1112 = vmatmul.mubr.f32.gmra.mrb[0].mxu0 %v754
  %v1113 = vpop.f32.mrb[0].mxu0
  %v1114 = vadd.f32 %v802, %v1113
  %v1115 = vpop.f32.mrb[0].mxu0
  %v1116 = vadd.f32 %v806, %v1115
  %1117 = vmatprep.mubr.f32.mxu0 %v869
  %1118 = vmatmul.mubr.f32.gmra.mrb[0].mxu0 %v755
  %v1119 = vpop.f32.mrb[0].mxu0
  %v1120 = vadd.f32 %v802, %v1119
  %v1121 = vpop.f32.mrb[0].mxu0
  %v1122 = vadd.f32 %v806, %v1121
  %1123 = vmatprep.mubr.f32.mxu0 %v871
  %1124 = vmatmul.mubr.f32.gmra.mrb[0].mxu0 %v756
  %v1125 = vpop.f32.mrb[0].mxu0
  %v1126 = vadd.f32 %v802, %v1125
  %v1127 = vpop.f32.mrb[0].mxu0
  %v1128 = vadd.f32 %v806, %v1127
  %1129 = vdwg.mxu0
  %v1130 = vmax.f32 %v940, 0.0
  %v1131 = vmax.f32 %v942, 0.0
  %v1132 = vmax.f32 %v946, 0.0
  %v1133 = vmax.f32 %v948, 0.0
  %v1134 = vmax.f32 %v952, 0.0
  %v1135 = vmax.f32 %v954, 0.0
  %v1136 = vmax.f32 %v958, 0.0
  %v1137 = vmax.f32 %v960, 0.0
  %v1138 = vmax.f32 %v964, 0.0
  %v1139 = vmax.f32 %v966, 0.0
  %v1140 = vmax.f32 %v970, 0.0
  %v1141 = vmax.f32 %v972, 0.0
  %v1142 = vmax.f32 %v976, 0.0
  %v1143 = vmax.f32 %v978, 0.0
  %v1144 = vmax.f32 %v982, 0.0
  %v1145 = vmax.f32 %v984, 0.0
  %v1146 = vmax.f32 %v988, 0.0
  %v1147 = vmax.f32 %v990, 0.0
  %v1148 = vmax.f32 %v994, 0.0
  %v1149 = vmax.f32 %v996, 0.0
  %v1150 = vmax.f32 %v1000, 0.0
  %v1151 = vmax.f32 %v1002, 0.0
  %v1152 = vmax.f32 %v1006, 0.0
  %v1153 = vmax.f32 %v1008, 0.0
  %v1154 = vmax.f32 %v1012, 0.0
  %v1155 = vmax.f32 %v1014, 0.0
  %v1156 = vmax.f32 %v1018, 0.0
  %v1157 = vmax.f32 %v1020, 0.0
  %v1158 = vmax.f32 %v1024, 0.0
  %v1159 = vmax.f32 %v1026, 0.0
  %v1160 = vmax.f32 %v1030, 0.0
  %v1161 = vmax.f32 %v1032, 0.0
  %v1162 = vmax.f32 %v1036, 0.0
  %v1163 = vmax.f32 %v1038, 0.0
  %v1164 = vmax.f32 %v1042, 0.0
  %v1165 = vmax.f32 %v1044, 0.0
  %v1166 = vmax.f32 %v1048, 0.0
  %v1167 = vmax.f32 %v1050, 0.0
  %v1168 = vmax.f32 %v1054, 0.0
  %v1169 = vmax.f32 %v1056, 0.0
  %v1170 = vmax.f32 %v1060, 0.0
  %v1171 = vmax.f32 %v1062, 0.0
  %v1172 = vmax.f32 %v1066, 0.0
  %v1173 = vmax.f32 %v1068, 0.0
  %v1174 = vmax.f32 %v1072, 0.0
  %v1175 = vmax.f32 %v1074, 0.0
  %v1176 = vmax.f32 %v1078, 0.0
  %v1177 = vmax.f32 %v1080, 0.0
  %v1178 = vmax.f32 %v1084, 0.0
  %v1179 = vmax.f32 %v1086, 0.0
  %v1180 = vmax.f32 %v1090, 0.0
  %v1181 = vmax.f32 %v1092, 0.0
  %v1182 = vmax.f32 %v1096, 0.0
  %v1183 = vmax.f32 %v1098, 0.0
  %v1184 = vmax.f32 %v1102, 0.0
  %v1185 = vmax.f32 %v1104, 0.0
  %v1186 = vmax.f32 %v1108, 0.0
  %v1187 = vmax.f32 %v1110, 0.0
  %v1188 = vmax.f32 %v1114, 0.0
  %v1189 = vmax.f32 %v1116, 0.0
  %v1190 = vmax.f32 %v1120, 0.0
  %v1191 = vmax.f32 %v1122, 0.0
  %v1192 = vmax.f32 %v1126, 0.0
  %v1193 = vmax.f32 %v1128, 0.0
  %v1194 = vld [vmem:[%s4] sm:$0xff]
  %v1195 = vld [vmem:[%s4 + $0x8] sm:$0xff]
  %v1196 = vld [vmem:[%s4 + $0x10] sm:$0xff]
  %v1197 = vld [vmem:[%s4 + $0x18] sm:$0xff]
  %v1198 = vld [vmem:[%s4 + $0x20] sm:$0xff]
  %v1199 = vld [vmem:[%s4 + $0x28] sm:$0xff]
  %v1200 = vld [vmem:[%s4 + $0x30] sm:$0xff]
  %v1201 = vld [vmem:[%s4 + $0x38] sm:$0xff]
  %v1202 = vld [vmem:[%s4 + $0x40] sm:$0xff]
  %v1203 = vld [vmem:[%s4 + $0x48] sm:$0xff]
  %v1204 = vld [vmem:[%s4 + $0x50] sm:$0xff]
  %v1205 = vld [vmem:[%s4 + $0x58] sm:$0xff]
  %v1206 = vld [vmem:[%s4 + $0x60] sm:$0xff]
  %v1207 = vld [vmem:[%s4 + $0x68] sm:$0xff]
  %v1208 = vld [vmem:[%s4 + $0x70] sm:$0xff]
  %v1209 = vld [vmem:[%s4 + $0x78] sm:$0xff]
  %v1210 = vld [vmem:[%s4 + $0x80] sm:$0xff]
  %v1211 = vld [vmem:[%s4 + $0x88] sm:$0xff]
  %v1212 = vld [vmem:[%s4 + $0x90] sm:$0xff]
  %v1213 = vld [vmem:[%s4 + $0x98] sm:$0xff]
  %v1214 = vld [vmem:[%s4 + $0xa0] sm:$0xff]
  %v1215 = vld [vmem:[%s4 + $0xa8] sm:$0xff]
  %v1216 = vld [vmem:[%s4 + $0xb0] sm:$0xff]
  %v1217 = vld [vmem:[%s4 + $0xb8] sm:$0xff]
  %v1218 = vld [vmem:[%s4 + $0xc0] sm:$0xff]
  %v1219 = vld [vmem:[%s4 + $0xc8] sm:$0xff]
  %v1220 = vld [vmem:[%s4 + $0xd0] sm:$0xff]
  %v1221 = vld [vmem:[%s4 + $0xd8] sm:$0xff]
  %v1222 = vld [vmem:[%s3] sm:$0xff]
  %v1223 = vld [vmem:[%s3 + $0x8] sm:$0xff]
  %v1224 = vld [vmem:[%s3 + $0x10] sm:$0xff]
  %v1225 = vld [vmem:[%s3 + $0x18] sm:$0xff]
  %v1226 = vld [vmem:[%s3 + $0x20] sm:$0xff]
  %v1227 = vld [vmem:[%s3 + $0x28] sm:$0xff]
  %v1228 = vld [vmem:[%s3 + $0x30] sm:$0xff]
  %v1229 = vld [vmem:[%s3 + $0x38] sm:$0xff]
  %v1230 = vld [vmem:[%s3 + $0x40] sm:$0xff]
  %v1231 = vld [vmem:[%s3 + $0x48] sm:$0xff]
  %v1232 = vld [vmem:[%s3 + $0x50] sm:$0xff]
  %v1233 = vld [vmem:[%s3 + $0x58] sm:$0xff]
  %v1234 = vld [vmem:[%s3 + $0x60] sm:$0xff]
  %v1235 = vld [vmem:[%s3 + $0x68] sm:$0xff]
  %v1236 = vld [vmem:[%s3 + $0x70] sm:$0xff]
  %v1237 = vld [vmem:[%s3 + $0x78] sm:$0xff]
  %v1238 = vld [vmem:[%s3 + $0x80] sm:$0xff]
  %v1239 = vld [vmem:[%s3 + $0x88] sm:$0xff]
  %v1240 = vld [vmem:[%s3 + $0x90] sm:$0xff]
  %v1241 = vld [vmem:[%s3 + $0x98] sm:$0xff]
  %v1242 = vld [vmem:[%s3 + $0xa0] sm:$0xff]
  %vm1243 = vcmask 326656
  %v1245 = vsel %vm1243, %v1131, 0
  %v1248 = vsel %vm1243, %v1133, 0
  %v1251 = vsel %vm1243, %v1135, 0
  %v1254 = vsel %vm1243, %v1137, 0
  %v1257 = vsel %vm1243, %v1139, 0
  %v1260 = vsel %vm1243, %v1141, 0
  %v1263 = vsel %vm1243, %v1143, 0
  %v1266 = vsel %vm1243, %v1145, 0
  %v1269 = vsel %vm1243, %v1147, 0
  %v1272 = vsel %vm1243, %v1149, 0
  %v1275 = vsel %vm1243, %v1151, 0
  %v1278 = vsel %vm1243, %v1153, 0
  %v1281 = vsel %vm1243, %v1155, 0
  %v1284 = vsel %vm1243, %v1157, 0
  %v1287 = vsel %vm1243, %v1159, 0
  %v1290 = vsel %vm1243, %v1161, 0
  %v1293 = vsel %vm1243, %v1163, 0
  %v1296 = vsel %vm1243, %v1165, 0
  %v1299 = vsel %vm1243, %v1167, 0
  %v1302 = vsel %vm1243, %v1169, 0
  %v1305 = vsel %vm1243, %v1171, 0
  %v1308 = vsel %vm1243, %v1173, 0
  %v1311 = vsel %vm1243, %v1175, 0
  %v1314 = vsel %vm1243, %v1177, 0
  %v1317 = vsel %vm1243, %v1179, 0
  %v1320 = vsel %vm1243, %v1181, 0
  %v1323 = vsel %vm1243, %v1183, 0
  %v1326 = vsel %vm1243, %v1185, 0
  %v1329 = vsel %vm1243, %v1187, 0
  %v1332 = vsel %vm1243, %v1189, 0
  %v1335 = vsel %vm1243, %v1191, 0
  %v1338 = vsel %vm1243, %v1193, 0
  %1340 = vmatprep.subr.mxu0 0.0
  %1341 = vmatpush1.msra.mxu0 %v1222
  %1342 = vmatprep.subr.mxu0 0.0
  %1343 = vmatpush1.msra.mxu0 %v1223
  %1344 = vmatprep.subr.mxu0 0.0
  %1345 = vmatpush1.msra.mxu0 %v1224
  %1346 = vmatprep.subr.mxu0 0.0
  %1347 = vmatpush1.msra.mxu0 %v1225
  %1348 = vmatprep.subr.mxu0 0.0
  %1349 = vmatpush1.msra.mxu0 %v1226
  %1350 = vmatprep.subr.mxu0 0.0
  %1351 = vmatpush1.msra.mxu0 %v1227
  %1352 = vmatprep.subr.mxu0 0.0
  %1353 = vmatpush1.msra.mxu0 %v1228
  %1354 = vmatprep.subr.mxu0 0.0
  %1355 = vmatpush1.msra.mxu0 %v1229
  %1356 = vmatprep.subr.mxu0 0.0
  %1357 = vmatpush1.msra.mxu0 %v1230
  %1358 = vmatprep.subr.mxu0 0.0
  %1359 = vmatpush1.msra.mxu0 %v1231
  %1360 = vmatprep.subr.mxu0 0.0
  %1361 = vmatpush1.msra.mxu0 %v1232
  %1362 = vmatprep.subr.mxu0 0.0
  %1363 = vmatpush1.msra.mxu0 %v1233
  %1364 = vmatprep.subr.mxu0 0.0
  %1365 = vmatpush1.msra.mxu0 %v1234
  %1366 = vmatprep.subr.mxu0 0.0
  %1367 = vmatpush1.msra.mxu0 %v1235
  %1368 = vmatprep.subr.mxu0 0.0
  %1369 = vmatpush1.msra.mxu0 %v1236
  %1370 = vmatprep.subr.mxu0 0.0
  %1371 = vmatpush1.msra.mxu0 %v1237
  %1372 = vmatprep.subr.mxu0 0.0
  %1373 = vmatpush1.msra.mxu0 %v1238
  %1374 = vmatprep.subr.mxu0 0.0
  %1375 = vmatpush1.msra.mxu0 %v1239
  %1376 = vmatprep.subr.mxu0 0.0
  %1377 = vmatpush1.msra.mxu0 %v1240
  %1378 = vmatprep.subr.mxu0 0.0
  %1379 = vmatpush1.msra.mxu0 %v1241
  %1380 = vmatprep.subr.mxu0 0.0
  %1381 = vmatpush1.msra.mxu0 %v1242
  %1382 = vmatprep.subr.mxu0 0.0
  %1383 = vmatpush1.msra.mxu0 0.0
  %1384 = vmatprep.subr.mxu0 0.0
  %1385 = vmatpush1.msra.mxu0 0.0
  %1386 = vmatprep.subr.mxu0 0.0
  %1387 = vmatpush1.msra.mxu0 0.0
  %1388 = vmatprep.subr.mxu0 0.0
  %1389 = vmatpush1.msra.mxu0 0.0
  %1390 = vmatprep.subr.mxu0 0.0
  %1391 = vmatpush1.msra.mxu0 0.0
  %1392 = vmatprep.subr.mxu0 0.0
  %1393 = vmatpush1.msra.mxu0 0.0
  %1394 = vmatprep.subr.mxu0 0.0
  %1395 = vmatpush1.msra.mxu0 0.0
  %1396 = vmatprep.subr.mxu0 0.0
  %1397 = vmatpush1.msra.mxu0 0.0
  %1398 = vmatprep.subr.mxu0 0.0
  %1399 = vmatpush1.msra.mxu0 0.0
  %1400 = vmatprep.subr.mxu0 0.0
  %1401 = vmatpush1.msra.mxu0 0.0
  %1402 = vmatprep.subr.mxu0 0.0
  %1403 = vmatpush1.msra.mxu0 0.0
  %1404 = vmatprep.mubr.f32.mxu0 %v1245
  %1405 = vmatmul.mubr.f32.gmra.mrb[0].mxu0 %v1130
  %v1406 = vpop.f32.mrb[0].mxu0
  %v1407 = vadd.f32 0.0, %v1406
  %v1408 = vpop.f32.mrb[0].mxu0
  %1409 = vmatprep.mubr.f32.mxu0 %v1248
  %1410 = vmatmul.mubr.f32.gmra.mrb[0].mxu0 %v1132
  %v1411 = vpop.f32.mrb[0].mxu0
  %v1412 = vadd.f32 0.0, %v1411
  %v1413 = vpop.f32.mrb[0].mxu0
  %1414 = vmatprep.mubr.f32.mxu0 %v1251
  %1415 = vmatmul.mubr.f32.gmra.mrb[0].mxu0 %v1134
  %v1416 = vpop.f32.mrb[0].mxu0
  %v1417 = vadd.f32 0.0, %v1416
  %v1418 = vpop.f32.mrb[0].mxu0
  %1419 = vmatprep.mubr.f32.mxu0 %v1254
  %1420 = vmatmul.mubr.f32.gmra.mrb[0].mxu0 %v1136
  %v1421 = vpop.f32.mrb[0].mxu0
  %v1422 = vadd.f32 0.0, %v1421
  %v1423 = vpop.f32.mrb[0].mxu0
  %1424 = vmatprep.mubr.f32.mxu0 %v1257
  %1425 = vmatmul.mubr.f32.gmra.mrb[0].mxu0 %v1138
  %v1426 = vpop.f32.mrb[0].mxu0
  %v1427 = vadd.f32 0.0, %v1426
  %v1428 = vpop.f32.mrb[0].mxu0
  %1429 = vmatprep.mubr.f32.mxu0 %v1260
  %1430 = vmatmul.mubr.f32.gmra.mrb[0].mxu0 %v1140
  %v1431 = vpop.f32.mrb[0].mxu0
  %v1432 = vadd.f32 0.0, %v1431
  %v1433 = vpop.f32.mrb[0].mxu0
  %1434 = vmatprep.mubr.f32.mxu0 %v1263
  %1435 = vmatmul.mubr.f32.gmra.mrb[0].mxu0 %v1142
  %v1436 = vpop.f32.mrb[0].mxu0
  %v1437 = vadd.f32 0.0, %v1436
  %v1438 = vpop.f32.mrb[0].mxu0
  %1439 = vmatprep.mubr.f32.mxu0 %v1266
  %1440 = vmatmul.mubr.f32.gmra.mrb[0].mxu0 %v1144
  %v1441 = vpop.f32.mrb[0].mxu0
  %v1442 = vadd.f32 0.0, %v1441
  %v1443 = vpop.f32.mrb[0].mxu0
  %1444 = vmatprep.mubr.f32.mxu0 %v1269
  %1445 = vmatmul.mubr.f32.gmra.mrb[0].mxu0 %v1146
  %v1446 = vpop.f32.mrb[0].mxu0
  %v1447 = vadd.f32 0.0, %v1446
  %v1448 = vpop.f32.mrb[0].mxu0
  %1449 = vmatprep.mubr.f32.mxu0 %v1272
  %1450 = vmatmul.mubr.f32.gmra.mrb[0].mxu0 %v1148
  %v1451 = vpop.f32.mrb[0].mxu0
  %v1452 = vadd.f32 0.0, %v1451
  %v1453 = vpop.f32.mrb[0].mxu0
  %1454 = vmatprep.mubr.f32.mxu0 %v1275
  %1455 = vmatmul.mubr.f32.gmra.mrb[0].mxu0 %v1150
  %v1456 = vpop.f32.mrb[0].mxu0
  %v1457 = vadd.f32 0.0, %v1456
  %v1458 = vpop.f32.mrb[0].mxu0
  %1459 = vmatprep.mubr.f32.mxu0 %v1278
  %1460 = vmatmul.mubr.f32.gmra.mrb[0].mxu0 %v1152
  %v1461 = vpop.f32.mrb[0].mxu0
  %v1462 = vadd.f32 0.0, %v1461
  %v1463 = vpop.f32.mrb[0].mxu0
  %1464 = vmatprep.mubr.f32.mxu0 %v1281
  %1465 = vmatmul.mubr.f32.gmra.mrb[0].mxu0 %v1154
  %v1466 = vpop.f32.mrb[0].mxu0
  %v1467 = vadd.f32 0.0, %v1466
  %v1468 = vpop.f32.mrb[0].mxu0
  %1469 = vmatprep.mubr.f32.mxu0 %v1284
  %1470 = vmatmul.mubr.f32.gmra.mrb[0].mxu0 %v1156
  %v1471 = vpop.f32.mrb[0].mxu0
  %v1472 = vadd.f32 0.0, %v1471
  %v1473 = vpop.f32.mrb[0].mxu0
  %1474 = vmatprep.mubr.f32.mxu0 %v1287
  %1475 = vmatmul.mubr.f32.gmra.mrb[0].mxu0 %v1158
  %v1476 = vpop.f32.mrb[0].mxu0
  %v1477 = vadd.f32 0.0, %v1476
  %v1478 = vpop.f32.mrb[0].mxu0
  %1479 = vmatprep.mubr.f32.mxu0 %v1290
  %1480 = vmatmul.mubr.f32.gmra.mrb[0].mxu0 %v1160
  %v1481 = vpop.f32.mrb[0].mxu0
  %v1482 = vadd.f32 0.0, %v1481
  %v1483 = vpop.f32.mrb[0].mxu0
  %1484 = vmatprep.mubr.f32.mxu0 %v1293
  %1485 = vmatmul.mubr.f32.gmra.mrb[0].mxu0 %v1162
  %v1486 = vpop.f32.mrb[0].mxu0
  %v1487 = vadd.f32 0.0, %v1486
  %v1488 = vpop.f32.mrb[0].mxu0
  %1489 = vmatprep.mubr.f32.mxu0 %v1296
  %1490 = vmatmul.mubr.f32.gmra.mrb[0].mxu0 %v1164
  %v1491 = vpop.f32.mrb[0].mxu0
  %v1492 = vadd.f32 0.0, %v1491
  %v1493 = vpop.f32.mrb[0].mxu0
  %1494 = vmatprep.mubr.f32.mxu0 %v1299
  %1495 = vmatmul.mubr.f32.gmra.mrb[0].mxu0 %v1166
  %v1496 = vpop.f32.mrb[0].mxu0
  %v1497 = vadd.f32 0.0, %v1496
  %v1498 = vpop.f32.mrb[0].mxu0
  %1499 = vmatprep.mubr.f32.mxu0 %v1302
  %1500 = vmatmul.mubr.f32.gmra.mrb[0].mxu0 %v1168
  %v1501 = vpop.f32.mrb[0].mxu0
  %v1502 = vadd.f32 0.0, %v1501
  %v1503 = vpop.f32.mrb[0].mxu0
  %1504 = vmatprep.mubr.f32.mxu0 %v1305
  %1505 = vmatmul.mubr.f32.gmra.mrb[0].mxu0 %v1170
  %v1506 = vpop.f32.mrb[0].mxu0
  %v1507 = vadd.f32 0.0, %v1506
  %v1508 = vpop.f32.mrb[0].mxu0
  %1509 = vmatprep.mubr.f32.mxu0 %v1308
  %1510 = vmatmul.mubr.f32.gmra.mrb[0].mxu0 %v1172
  %v1511 = vpop.f32.mrb[0].mxu0
  %v1512 = vadd.f32 0.0, %v1511
  %v1513 = vpop.f32.mrb[0].mxu0
  %1514 = vmatprep.mubr.f32.mxu0 %v1311
  %1515 = vmatmul.mubr.f32.gmra.mrb[0].mxu0 %v1174
  %v1516 = vpop.f32.mrb[0].mxu0
  %v1517 = vadd.f32 0.0, %v1516
  %v1518 = vpop.f32.mrb[0].mxu0
  %1519 = vmatprep.mubr.f32.mxu0 %v1314
  %1520 = vmatmul.mubr.f32.gmra.mrb[0].mxu0 %v1176
  %v1521 = vpop.f32.mrb[0].mxu0
  %v1522 = vadd.f32 0.0, %v1521
  %v1523 = vpop.f32.mrb[0].mxu0
  %1524 = vmatprep.mubr.f32.mxu0 %v1317
  %1525 = vmatmul.mubr.f32.gmra.mrb[0].mxu0 %v1178
  %v1526 = vpop.f32.mrb[0].mxu0
  %v1527 = vadd.f32 0.0, %v1526
  %v1528 = vpop.f32.mrb[0].mxu0
  %1529 = vmatprep.mubr.f32.mxu0 %v1320
  %1530 = vmatmul.mubr.f32.gmra.mrb[0].mxu0 %v1180
  %v1531 = vpop.f32.mrb[0].mxu0
  %v1532 = vadd.f32 0.0, %v1531
  %v1533 = vpop.f32.mrb[0].mxu0
  %1534 = vmatprep.mubr.f32.mxu0 %v1323
  %1535 = vmatmul.mubr.f32.gmra.mrb[0].mxu0 %v1182
  %v1536 = vpop.f32.mrb[0].mxu0
  %v1537 = vadd.f32 0.0, %v1536
  %v1538 = vpop.f32.mrb[0].mxu0
  %1539 = vmatprep.mubr.f32.mxu0 %v1326
  %1540 = vmatmul.mubr.f32.gmra.mrb[0].mxu0 %v1184
  %v1541 = vpop.f32.mrb[0].mxu0
  %v1542 = vadd.f32 0.0, %v1541
  %v1543 = vpop.f32.mrb[0].mxu0
  %1544 = vmatprep.mubr.f32.mxu0 %v1329
  %1545 = vmatmul.mubr.f32.gmra.mrb[0].mxu0 %v1186
  %v1546 = vpop.f32.mrb[0].mxu0
  %v1547 = vadd.f32 0.0, %v1546
  %v1548 = vpop.f32.mrb[0].mxu0
  %1549 = vmatprep.mubr.f32.mxu0 %v1332
  %1550 = vmatmul.mubr.f32.gmra.mrb[0].mxu0 %v1188
  %v1551 = vpop.f32.mrb[0].mxu0
  %v1552 = vadd.f32 0.0, %v1551
  %v1553 = vpop.f32.mrb[0].mxu0
  %1554 = vmatprep.mubr.f32.mxu0 %v1335
  %1555 = vmatmul.mubr.f32.gmra.mrb[0].mxu0 %v1190
  %v1556 = vpop.f32.mrb[0].mxu0
  %v1557 = vadd.f32 0.0, %v1556
  %v1558 = vpop.f32.mrb[0].mxu0
  %1559 = vmatprep.mubr.f32.mxu0 %v1338
  %1560 = vmatmul.mubr.f32.gmra.mrb[0].mxu0 %v1192
  %v1561 = vpop.f32.mrb[0].mxu0
  %v1562 = vadd.f32 0.0, %v1561
  %v1563 = vpop.f32.mrb[0].mxu0
  %1564 = vdwg.mxu0
  %vm1565 = vcmask 1014784
  %v1567 = vsel %vm1565, %v1195, 0
  %v1570 = vsel %vm1565, %v1197, 0
  %v1573 = vsel %vm1565, %v1199, 0
  %v1576 = vsel %vm1565, %v1201, 0
  %v1579 = vsel %vm1565, %v1203, 0
  %v1582 = vsel %vm1565, %v1205, 0
  %v1585 = vsel %vm1565, %v1207, 0
  %v1588 = vsel %vm1565, %v1209, 0
  %v1591 = vsel %vm1565, %v1211, 0
  %v1594 = vsel %vm1565, %v1213, 0
  %v1597 = vsel %vm1565, %v1215, 0
  %v1600 = vsel %vm1565, %v1217, 0
  %v1603 = vsel %vm1565, %v1219, 0
  %v1606 = vsel %vm1565, %v1221, 0
  %v1609 = vsel %vm594, %v1562, 0
  %1611 = vmatprep.subr.mxu0 0.0
  %1612 = vmatpush1.msra.mxu0 %v1407
  %1613 = vmatprep.subr.mxu0 0.0
  %1614 = vmatpush1.msra.mxu0 %v1412
  %1615 = vmatprep.subr.mxu0 0.0
  %1616 = vmatpush1.msra.mxu0 %v1417
  %1617 = vmatprep.subr.mxu0 0.0
  %1618 = vmatpush1.msra.mxu0 %v1422
  %1619 = vmatprep.subr.mxu0 0.0
  %1620 = vmatpush1.msra.mxu0 %v1427
  %1621 = vmatprep.subr.mxu0 0.0
  %1622 = vmatpush1.msra.mxu0 %v1432
  %1623 = vmatprep.subr.mxu0 0.0
  %1624 = vmatpush1.msra.mxu0 %v1437
  %1625 = vmatprep.subr.mxu0 0.0
  %1626 = vmatpush1.msra.mxu0 %v1442
  %1627 = vmatprep.subr.mxu0 0.0
  %1628 = vmatpush1.msra.mxu0 %v1447
  %1629 = vmatprep.subr.mxu0 0.0
  %1630 = vmatpush1.msra.mxu0 %v1452
  %1631 = vmatprep.subr.mxu0 0.0
  %1632 = vmatpush1.msra.mxu0 %v1457
  %1633 = vmatprep.subr.mxu0 0.0
  %1634 = vmatpush1.msra.mxu0 %v1462
  %1635 = vmatprep.subr.mxu0 0.0
  %1636 = vmatpush1.msra.mxu0 %v1467
  %1637 = vmatprep.subr.mxu0 0.0
  %1638 = vmatpush1.msra.mxu0 %v1472
  %1639 = vmatprep.subr.mxu0 0.0
  %1640 = vmatpush1.msra.mxu0 %v1477
  %1641 = vmatprep.subr.mxu0 0.0
  %1642 = vmatpush1.msra.mxu0 %v1482
  %1643 = vmatprep.subr.mxu0 0.0
  %1644 = vmatpush1.msra.mxu0 %v1487
  %1645 = vmatprep.subr.mxu0 0.0
  %1646 = vmatpush1.msra.mxu0 %v1492
  %1647 = vmatprep.subr.mxu0 0.0
  %1648 = vmatpush1.msra.mxu0 %v1497
  %1649 = vmatprep.subr.mxu0 0.0
  %1650 = vmatpush1.msra.mxu0 %v1502
  %1651 = vmatprep.subr.mxu0 0.0
  %1652 = vmatpush1.msra.mxu0 %v1507
  %1653 = vmatprep.subr.mxu0 0.0
  %1654 = vmatpush1.msra.mxu0 %v1512
  %1655 = vmatprep.subr.mxu0 0.0
  %1656 = vmatpush1.msra.mxu0 %v1517
  %1657 = vmatprep.subr.mxu0 0.0
  %1658 = vmatpush1.msra.mxu0 %v1522
  %1659 = vmatprep.subr.mxu0 0.0
  %1660 = vmatpush1.msra.mxu0 %v1527
  %1661 = vmatprep.subr.mxu0 0.0
  %1662 = vmatpush1.msra.mxu0 %v1532
  %1663 = vmatprep.subr.mxu0 0.0
  %1664 = vmatpush1.msra.mxu0 %v1537
  %1665 = vmatprep.subr.mxu0 0.0
  %1666 = vmatpush1.msra.mxu0 %v1542
  %1667 = vmatprep.subr.mxu0 0.0
  %1668 = vmatpush1.msra.mxu0 %v1547
  %1669 = vmatprep.subr.mxu0 0.0
  %1670 = vmatpush1.msra.mxu0 %v1552
  %1671 = vmatprep.subr.mxu0 0.0
  %1672 = vmatpush1.msra.mxu0 %v1557
  %1673 = vmatprep.subr.mxu0 0.0
  %1674 = vmatpush1.msra.mxu0 %v1609
  %1675 = vmatprep.mubr.f32.mxu0 %v1567
  %1676 = vmatmul.mubr.f32.gmra.mrb[0].mxu0 %v1194
  %v1677 = vpop.f32.mrb[0].mxu0
  %v1678 = vadd.f32 0.0, %v1677
  %v1679 = vpop.f32.mrb[0].mxu0
  %1680 = vmatprep.mubr.f32.mxu0 %v1570
  %1681 = vmatmul.mubr.f32.gmra.mrb[0].mxu0 %v1196
  %v1682 = vpop.f32.mrb[0].mxu0
  %v1683 = vadd.f32 0.0, %v1682
  %v1684 = vpop.f32.mrb[0].mxu0
  %1685 = vmatprep.mubr.f32.mxu0 %v1573
  %1686 = vmatmul.mubr.f32.gmra.mrb[0].mxu0 %v1198
  %v1687 = vpop.f32.mrb[0].mxu0
  %v1688 = vadd.f32 0.0, %v1687
  %v1689 = vpop.f32.mrb[0].mxu0
  %1690 = vmatprep.mubr.f32.mxu0 %v1576
  %1691 = vmatmul.mubr.f32.gmra.mrb[0].mxu0 %v1200
  %v1692 = vpop.f32.mrb[0].mxu0
  %v1693 = vadd.f32 0.0, %v1692
  %v1694 = vpop.f32.mrb[0].mxu0
  %1695 = vmatprep.mubr.f32.mxu0 %v1579
  %1696 = vmatmul.mubr.f32.gmra.mrb[0].mxu0 %v1202
  %v1697 = vpop.f32.mrb[0].mxu0
  %v1698 = vadd.f32 0.0, %v1697
  %v1699 = vpop.f32.mrb[0].mxu0
  %1700 = vmatprep.mubr.f32.mxu0 %v1582
  %1701 = vmatmul.mubr.f32.gmra.mrb[0].mxu0 %v1204
  %v1702 = vpop.f32.mrb[0].mxu0
  %v1703 = vadd.f32 0.0, %v1702
  %v1704 = vpop.f32.mrb[0].mxu0
  %1705 = vmatprep.mubr.f32.mxu0 %v1585
  %1706 = vmatmul.mubr.f32.gmra.mrb[0].mxu0 %v1206
  %v1707 = vpop.f32.mrb[0].mxu0
  %v1708 = vadd.f32 0.0, %v1707
  %v1709 = vpop.f32.mrb[0].mxu0
  %1710 = vmatprep.mubr.f32.mxu0 %v1588
  %1711 = vmatmul.mubr.f32.gmra.mrb[0].mxu0 %v1208
  %v1712 = vpop.f32.mrb[0].mxu0
  %v1713 = vadd.f32 0.0, %v1712
  %v1714 = vpop.f32.mrb[0].mxu0
  %1715 = vmatprep.mubr.f32.mxu0 %v1591
  %1716 = vmatmul.mubr.f32.gmra.mrb[0].mxu0 %v1210
  %v1717 = vpop.f32.mrb[0].mxu0
  %v1718 = vadd.f32 0.0, %v1717
  %v1719 = vpop.f32.mrb[0].mxu0
  %1720 = vmatprep.mubr.f32.mxu0 %v1594
  %1721 = vmatmul.mubr.f32.gmra.mrb[0].mxu0 %v1212
  %v1722 = vpop.f32.mrb[0].mxu0
  %v1723 = vadd.f32 0.0, %v1722
  %v1724 = vpop.f32.mrb[0].mxu0
  %1725 = vmatprep.mubr.f32.mxu0 %v1597
  %1726 = vmatmul.mubr.f32.gmra.mrb[0].mxu0 %v1214
  %v1727 = vpop.f32.mrb[0].mxu0
  %v1728 = vadd.f32 0.0, %v1727
  %v1729 = vpop.f32.mrb[0].mxu0
  %1730 = vmatprep.mubr.f32.mxu0 %v1600
  %1731 = vmatmul.mubr.f32.gmra.mrb[0].mxu0 %v1216
  %v1732 = vpop.f32.mrb[0].mxu0
  %v1733 = vadd.f32 0.0, %v1732
  %v1734 = vpop.f32.mrb[0].mxu0
  %1735 = vmatprep.mubr.f32.mxu0 %v1603
  %1736 = vmatmul.mubr.f32.gmra.mrb[0].mxu0 %v1218
  %v1737 = vpop.f32.mrb[0].mxu0
  %v1738 = vadd.f32 0.0, %v1737
  %v1739 = vpop.f32.mrb[0].mxu0
  %1740 = vmatprep.mubr.f32.mxu0 %v1606
  %1741 = vmatmul.mubr.f32.gmra.mrb[0].mxu0 %v1220
  %v1742 = vpop.f32.mrb[0].mxu0
  %v1743 = vadd.f32 0.0, %v1742
  %v1744 = vpop.f32.mrb[0].mxu0
  %1745 = vdwg.mxu0
  %v1760 = vrot.slane %v1678, 1
  %v1761 = vrot.slane %v1683, 1
  %v1762 = vsel %vm114, %v1760, %v1761
  %v1763 = vrot.slane %v1688, 1
  %v1764 = vsel %vm114, %v1761, %v1763
  %v1765 = vrot.slane %v1693, 1
  %v1766 = vsel %vm114, %v1763, %v1765
  %v1767 = vrot.slane %v1698, 1
  %v1768 = vsel %vm114, %v1765, %v1767
  %v1769 = vrot.slane %v1703, 1
  %v1770 = vsel %vm114, %v1767, %v1769
  %v1771 = vrot.slane %v1708, 1
  %v1772 = vsel %vm114, %v1769, %v1771
  %v1773 = vrot.slane %v1713, 1
  %v1774 = vsel %vm114, %v1771, %v1773
  %v1775 = vrot.slane %v1718, 1
  %v1776 = vsel %vm114, %v1773, %v1775
  %v1777 = vrot.slane %v1723, 1
  %v1778 = vsel %vm114, %v1775, %v1777
  %v1779 = vrot.slane %v1728, 1
  %v1780 = vsel %vm114, %v1777, %v1779
  %v1781 = vrot.slane %v1733, 1
  %v1782 = vsel %vm114, %v1779, %v1781
  %v1783 = vrot.slane %v1738, 1
  %v1784 = vsel %vm114, %v1781, %v1783
  %v1785 = vrot.slane %v1743, 1
  %v1786 = vsel %vm114, %v1783, %v1785
  %1787 = vrot.lane.b32.xlu0 %v1762, 84
  %v1788 = vpop.permute.xlu0 %1787
  %1789 = vrot.lane.b32.xlu0 %v1764, 84
  %v1790 = vpop.permute.xlu0 %1789
  %1791 = vrot.lane.b32.xlu0 %v1766, 84
  %v1792 = vpop.permute.xlu0 %1791
  %1793 = vrot.lane.b32.xlu0 %v1768, 84
  %v1794 = vpop.permute.xlu0 %1793
  %1795 = vrot.lane.b32.xlu0 %v1770, 84
  %v1796 = vpop.permute.xlu0 %1795
  %1797 = vrot.lane.b32.xlu0 %v1772, 84
  %v1798 = vpop.permute.xlu0 %1797
  %1799 = vrot.lane.b32.xlu0 %v1774, 84
  %v1800 = vpop.permute.xlu0 %1799
  %1801 = vrot.lane.b32.xlu0 %v1776, 84
  %v1802 = vpop.permute.xlu0 %1801
  %1803 = vrot.lane.b32.xlu0 %v1778, 84
  %v1804 = vpop.permute.xlu0 %1803
  %1805 = vrot.lane.b32.xlu0 %v1780, 84
  %v1806 = vpop.permute.xlu0 %1805
  %1807 = vrot.lane.b32.xlu0 %v1782, 84
  %v1808 = vpop.permute.xlu0 %1807
  %1809 = vrot.lane.b32.xlu0 %v1784, 84
  %v1810 = vpop.permute.xlu0 %1809
  %1811 = vrot.lane.b32.xlu0 %v1786, 84
  %v1812 = vpop.permute.xlu0 %1811
  %1813 = vrot.lane.b32.xlu0 %v1785, 84
  %v1814 = vpop.permute.xlu0 %1813
  %v1829 = vrot.slane %v1678, 2
  %v1830 = vrot.slane %v1683, 2
  %v1831 = vsel %vm274, %v1829, %v1830
  %v1832 = vrot.slane %v1688, 2
  %v1833 = vsel %vm274, %v1830, %v1832
  %v1834 = vrot.slane %v1693, 2
  %v1835 = vsel %vm274, %v1832, %v1834
  %v1836 = vrot.slane %v1698, 2
  %v1837 = vsel %vm274, %v1834, %v1836
  %v1838 = vrot.slane %v1703, 2
  %v1839 = vsel %vm274, %v1836, %v1838
  %v1840 = vrot.slane %v1708, 2
  %v1841 = vsel %vm274, %v1838, %v1840
  %v1842 = vrot.slane %v1713, 2
  %v1843 = vsel %vm274, %v1840, %v1842
  %v1844 = vrot.slane %v1718, 2
  %v1845 = vsel %vm274, %v1842, %v1844
  %v1846 = vrot.slane %v1723, 2
  %v1847 = vsel %vm274, %v1844, %v1846
  %v1848 = vrot.slane %v1728, 2
  %v1849 = vsel %vm274, %v1846, %v1848
  %v1850 = vrot.slane %v1733, 2
  %v1851 = vsel %vm274, %v1848, %v1850
  %v1852 = vrot.slane %v1738, 2
  %v1853 = vsel %vm274, %v1850, %v1852
  %v1854 = vrot.slane %v1743, 2
  %v1855 = vsel %vm274, %v1852, %v1854
  %1856 = vrot.lane.b32.xlu0 %v1831, 40
  %v1857 = vpop.permute.xlu0 %1856
  %1858 = vrot.lane.b32.xlu0 %v1833, 40
  %v1859 = vpop.permute.xlu0 %1858
  %1860 = vrot.lane.b32.xlu0 %v1835, 40
  %v1861 = vpop.permute.xlu0 %1860
  %1862 = vrot.lane.b32.xlu0 %v1837, 40
  %v1863 = vpop.permute.xlu0 %1862
  %1864 = vrot.lane.b32.xlu0 %v1839, 40
  %v1865 = vpop.permute.xlu0 %1864
  %1866 = vrot.lane.b32.xlu0 %v1841, 40
  %v1867 = vpop.permute.xlu0 %1866
  %1868 = vrot.lane.b32.xlu0 %v1843, 40
  %v1869 = vpop.permute.xlu0 %1868
  %1870 = vrot.lane.b32.xlu0 %v1845, 40
  %v1871 = vpop.permute.xlu0 %1870
  %1872 = vrot.lane.b32.xlu0 %v1847, 40
  %v1873 = vpop.permute.xlu0 %1872
  %1874 = vrot.lane.b32.xlu0 %v1849, 40
  %v1875 = vpop.permute.xlu0 %1874
  %1876 = vrot.lane.b32.xlu0 %v1851, 40
  %v1877 = vpop.permute.xlu0 %1876
  %1878 = vrot.lane.b32.xlu0 %v1853, 40
  %v1879 = vpop.permute.xlu0 %1878
  %1880 = vrot.lane.b32.xlu0 %v1855, 40
  %v1881 = vpop.permute.xlu0 %1880
  %1882 = vrot.lane.b32.xlu0 %v1854, 40
  %v1883 = vpop.permute.xlu0 %1882
  %v1898 = vrot.slane %v1678, 3
  %v1899 = vrot.slane %v1683, 3
  %v1900 = vsel %vm434, %v1898, %v1899
  %v1901 = vrot.slane %v1688, 3
  %v1902 = vsel %vm434, %v1899, %v1901
  %v1903 = vrot.slane %v1693, 3
  %v1904 = vsel %vm434, %v1901, %v1903
  %v1905 = vrot.slane %v1698, 3
  %v1906 = vsel %vm434, %v1903, %v1905
  %v1907 = vrot.slane %v1703, 3
  %v1908 = vsel %vm434, %v1905, %v1907
  %v1909 = vrot.slane %v1708, 3
  %v1910 = vsel %vm434, %v1907, %v1909
  %v1911 = vrot.slane %v1713, 3
  %v1912 = vsel %vm434, %v1909, %v1911
  %v1913 = vrot.slane %v1718, 3
  %v1914 = vsel %vm434, %v1911, %v1913
  %v1915 = vrot.slane %v1723, 3
  %v1916 = vsel %vm434, %v1913, %v1915
  %v1917 = vrot.slane %v1728, 3
  %v1918 = vsel %vm434, %v1915, %v1917
  %v1919 = vrot.slane %v1733, 3
  %v1920 = vsel %vm434, %v1917, %v1919
  %v1921 = vrot.slane %v1738, 3
  %v1922 = vsel %vm434, %v1919, %v1921
  %v1923 = vrot.slane %v1743, 3
  %v1924 = vsel %vm434, %v1921, %v1923
  %1925 = vrot.lane.b32.xlu0 %v1900, 124
  %v1926 = vpop.permute.xlu0 %1925
  %1927 = vrot.lane.b32.xlu0 %v1902, 124
  %v1928 = vpop.permute.xlu0 %1927
  %1929 = vrot.lane.b32.xlu0 %v1904, 124
  %v1930 = vpop.permute.xlu0 %1929
  %1931 = vrot.lane.b32.xlu0 %v1906, 124
  %v1932 = vpop.permute.xlu0 %1931
  %1933 = vrot.lane.b32.xlu0 %v1908, 124
  %v1934 = vpop.permute.xlu0 %1933
  %1935 = vrot.lane.b32.xlu0 %v1910, 124
  %v1936 = vpop.permute.xlu0 %1935
  %1937 = vrot.lane.b32.xlu0 %v1912, 124
  %v1938 = vpop.permute.xlu0 %1937
  %1939 = vrot.lane.b32.xlu0 %v1914, 124
  %v1940 = vpop.permute.xlu0 %1939
  %1941 = vrot.lane.b32.xlu0 %v1916, 124
  %v1942 = vpop.permute.xlu0 %1941
  %1943 = vrot.lane.b32.xlu0 %v1918, 124
  %v1944 = vpop.permute.xlu0 %1943
  %1945 = vrot.lane.b32.xlu0 %v1920, 124
  %v1946 = vpop.permute.xlu0 %1945
  %1947 = vrot.lane.b32.xlu0 %v1922, 124
  %v1948 = vpop.permute.xlu0 %1947
  %1949 = vrot.lane.b32.xlu0 %v1924, 124
  %v1950 = vpop.permute.xlu0 %1949
  %1951 = vrot.lane.b32.xlu0 %v1923, 124
  %v1952 = vpop.permute.xlu0 %1951
  %v1967 = vrot.slane %v1678, 4
  %v1968 = vrot.slane %v1683, 4
  %v1969 = vsel %vm594, %v1967, %v1968
  %v1970 = vrot.slane %v1688, 4
  %v1971 = vsel %vm594, %v1968, %v1970
  %v1972 = vrot.slane %v1693, 4
  %v1973 = vsel %vm594, %v1970, %v1972
  %v1974 = vrot.slane %v1698, 4
  %v1975 = vsel %vm594, %v1972, %v1974
  %v1976 = vrot.slane %v1703, 4
  %v1977 = vsel %vm594, %v1974, %v1976
  %v1978 = vrot.slane %v1708, 4
  %v1979 = vsel %vm594, %v1976, %v1978
  %v1980 = vrot.slane %v1713, 4
  %v1981 = vsel %vm594, %v1978, %v1980
  %v1982 = vrot.slane %v1718, 4
  %v1983 = vsel %vm594, %v1980, %v1982
  %v1984 = vrot.slane %v1723, 4
  %v1985 = vsel %vm594, %v1982, %v1984
  %v1986 = vrot.slane %v1728, 4
  %v1987 = vsel %vm594, %v1984, %v1986
  %v1988 = vrot.slane %v1733, 4
  %v1989 = vsel %vm594, %v1986, %v1988
  %v1990 = vrot.slane %v1738, 4
  %v1991 = vsel %vm594, %v1988, %v1990
  %v1992 = vrot.slane %v1743, 4
  %v1993 = vsel %vm594, %v1990, %v1992
  %1994 = vrot.lane.b32.xlu0 %v1969, 80
  %v1995 = vpop.permute.xlu0 %1994
  %1996 = vrot.lane.b32.xlu0 %v1971, 80
  %v1997 = vpop.permute.xlu0 %1996
  %1998 = vrot.lane.b32.xlu0 %v1973, 80
  %v1999 = vpop.permute.xlu0 %1998
  %2000 = vrot.lane.b32.xlu0 %v1975, 80
  %v2001 = vpop.permute.xlu0 %2000
  %2002 = vrot.lane.b32.xlu0 %v1977, 80
  %v2003 = vpop.permute.xlu0 %2002
  %2004 = vrot.lane.b32.xlu0 %v1979, 80
  %v2005 = vpop.permute.xlu0 %2004
  %2006 = vrot.lane.b32.xlu0 %v1981, 80
  %v2007 = vpop.permute.xlu0 %2006
  %2008 = vrot.lane.b32.xlu0 %v1983, 80
  %v2009 = vpop.permute.xlu0 %2008
  %2010 = vrot.lane.b32.xlu0 %v1985, 80
  %v2011 = vpop.permute.xlu0 %2010
  %2012 = vrot.lane.b32.xlu0 %v1987, 80
  %v2013 = vpop.permute.xlu0 %2012
  %2014 = vrot.lane.b32.xlu0 %v1989, 80
  %v2015 = vpop.permute.xlu0 %2014
  %2016 = vrot.lane.b32.xlu0 %v1991, 80
  %v2017 = vpop.permute.xlu0 %2016
  %2018 = vrot.lane.b32.xlu0 %v1993, 80
  %v2019 = vpop.permute.xlu0 %2018
  %2020 = vrot.lane.b32.xlu0 %v1992, 80
  %v2021 = vpop.permute.xlu0 %2020
  %vm2036 = vcmask 687104
  %v2037 = vsel %vm2036, %v1678, %v1788
  %v2038 = vsel %vm2036, %v1683, %v1790
  %v2039 = vsel %vm2036, %v1688, %v1792
  %v2040 = vsel %vm2036, %v1693, %v1794
  %v2041 = vsel %vm2036, %v1698, %v1796
  %v2042 = vsel %vm2036, %v1703, %v1798
  %v2043 = vsel %vm2036, %v1708, %v1800
  %v2044 = vsel %vm2036, %v1713, %v1802
  %v2045 = vsel %vm2036, %v1718, %v1804
  %v2046 = vsel %vm2036, %v1723, %v1806
  %v2047 = vsel %vm2036, %v1728, %v1808
  %v2048 = vsel %vm2036, %v1733, %v1810
  %v2049 = vsel %vm2036, %v1738, %v1812
  %v2050 = vsel %vm2036, %v1743, %v1814
  %v2051 = vsel %vm1243, %v1788, %v1857
  %v2052 = vsel %vm1243, %v1790, %v1859
  %v2053 = vsel %vm1243, %v1792, %v1861
  %v2054 = vsel %vm1243, %v1794, %v1863
  %v2055 = vsel %vm1243, %v1796, %v1865
  %v2056 = vsel %vm1243, %v1798, %v1867
  %v2057 = vsel %vm1243, %v1800, %v1869
  %v2058 = vsel %vm1243, %v1802, %v1871
  %v2059 = vsel %vm1243, %v1804, %v1873
  %v2060 = vsel %vm1243, %v1806, %v1875
  %v2061 = vsel %vm1243, %v1808, %v1877
  %v2062 = vsel %vm1243, %v1810, %v1879
  %v2063 = vsel %vm1243, %v1812, %v1881
  %v2064 = vsel %vm1243, %v1814, %v1883
  %v2065 = vsel %vm1565, %v2051, %v1926
  %v2066 = vsel %vm1565, %v2052, %v1928
  %v2067 = vsel %vm1565, %v2053, %v1930
  %v2068 = vsel %vm1565, %v2054, %v1932
  %v2069 = vsel %vm1565, %v2055, %v1934
  %v2070 = vsel %vm1565, %v2056, %v1936
  %v2071 = vsel %vm1565, %v2057, %v1938
  %v2072 = vsel %vm1565, %v2058, %v1940
  %v2073 = vsel %vm1565, %v2059, %v1942
  %v2074 = vsel %vm1565, %v2060, %v1944
  %v2075 = vsel %vm1565, %v2061, %v1946
  %v2076 = vsel %vm1565, %v2062, %v1948
  %v2077 = vsel %vm1565, %v2063, %v1950
  %v2078 = vsel %vm1565, %v2064, %v1952
  %vm2079 = vcmask 654336
  %v2080 = vsel %vm2079, %v1926, %v1995
  %v2081 = vsel %vm2079, %v1928, %v1997
  %v2082 = vsel %vm2079, %v1930, %v1999
  %v2083 = vsel %vm2079, %v1932, %v2001
  %v2084 = vsel %vm2079, %v1934, %v2003
  %v2085 = vsel %vm2079, %v1936, %v2005
  %v2086 = vsel %vm2079, %v1938, %v2007
  %v2087 = vsel %vm2079, %v1940, %v2009
  %v2088 = vsel %vm2079, %v1942, %v2011
  %v2089 = vsel %vm2079, %v1944, %v2013
  %v2090 = vsel %vm2079, %v1946, %v2015
  %v2091 = vsel %vm2079, %v1948, %v2017
  %v2092 = vsel %vm2079, %v1950, %v2019
  %v2093 = vsel %vm2079, %v1952, %v2021
  %v2094 = vld [vmem:[%s5] sm:$0xff]
  %v2095 = vld [vmem:[%s5 + $0x8] sm:$0xff]
  %v2096 = vld [vmem:[%s5 + $0x10] sm:$0xff]
  %v2097 = vld [vmem:[%s5 + $0x18] sm:$0xff]
  %v2098 = vld [vmem:[%s5 + $0x20] sm:$0xff]
  %v2099 = vld [vmem:[%s5 + $0x28] sm:$0xff]
  %v2100 = vld [vmem:[%s5 + $0x30] sm:$0xff]
  %v2101 = vld [vmem:[%s5 + $0x38] sm:$0xff]
  %v2102 = vld [vmem:[%s5 + $0x40] sm:$0xff]
  %v2103 = vld [vmem:[%s5 + $0x48] sm:$0xff]
  %v2104 = vld [vmem:[%s5 + $0x50] sm:$0xff]
  %v2105 = vld [vmem:[%s5 + $0x58] sm:$0xff]
  %v2106 = vld [vmem:[%s5 + $0x60] sm:$0xff]
  %v2107 = vld [vmem:[%s5 + $0x68] sm:$0xff]
  %v2108 = vld [vmem:[%s5 + $0x70] sm:$0xff]
  %v2109 = vld [vmem:[%s5 + $0x78] sm:$0xff]
  %v2110 = vld [vmem:[%s5 + $0x80] sm:$0xff]
  %v2111 = vld [vmem:[%s5 + $0x88] sm:$0xff]
  %v2112 = vld [vmem:[%s5 + $0x90] sm:$0xff]
  %v2113 = vld [vmem:[%s5 + $0x98] sm:$0xff]
  %v2114 = vld [vmem:[%s5 + $0xa0] sm:$0xff]
  %v2115 = vld [vmem:[%s5 + $0xa8] sm:$0xff]
  %v2116 = vld [vmem:[%s5 + $0xb0] sm:$0xff]
  %v2117 = vld [vmem:[%s5 + $0xb8] sm:$0xff]
  %v2118 = vld [vmem:[%s5 + $0xc0] sm:$0xff]
  %v2119 = vld [vmem:[%s5 + $0xc8] sm:$0xff]
  %v2120 = vld [vmem:[%s5 + $0xd0] sm:$0xff]
  %v2121 = vld [vmem:[%s5 + $0xd8] sm:$0xff]
  %v2122 = vld [vmem:[%s5 + $0xe0] sm:$0xff]
  %v2123 = vld [vmem:[%s5 + $0xe8] sm:$0xff]
  %v2124 = vld [vmem:[%s5 + $0xf0] sm:$0xff]
  %v2125 = vld [vmem:[%s5 + $0xf8] sm:$0xff]
  %v2126 = vld [vmem:[%s5 + $0x100] sm:$0xff]
  %v2127 = vld [vmem:[%s5 + $0x108] sm:$0xff]
  %v2128 = vld [vmem:[%s5 + $0x110] sm:$0xff]
  %v2129 = vld [vmem:[%s5 + $0x118] sm:$0xff]
  %v2130 = vld [vmem:[%s5 + $0x120] sm:$0xff]
  %v2131 = vld [vmem:[%s5 + $0x128] sm:$0xff]
  %v2132 = vld [vmem:[%s5 + $0x130] sm:$0xff]
  %v2133 = vld [vmem:[%s5 + $0x138] sm:$0xff]
  %v2134 = vld [vmem:[%s5 + $0x140] sm:$0xff]
  %v2135 = vld [vmem:[%s5 + $0x148] sm:$0xff]
  %v2136 = vld [vmem:[%s5 + $0x150] sm:$0xff]
  %v2137 = vld [vmem:[%s5 + $0x158] sm:$0xff]
  %v2138 = vld [vmem:[%s5 + $0x160] sm:$0xff]
  %v2139 = vld [vmem:[%s5 + $0x168] sm:$0xff]
  %v2140 = vld [vmem:[%s5 + $0x170] sm:$0xff]
  %v2141 = vld [vmem:[%s5 + $0x178] sm:$0xff]
  %v2142 = vld [vmem:[%s5 + $0x180] sm:$0xff]
  %v2143 = vld [vmem:[%s5 + $0x188] sm:$0xff]
  %v2144 = vld [vmem:[%s5 + $0x190] sm:$0xff]
  %v2145 = vld [vmem:[%s5 + $0x198] sm:$0xff]
  %v2146 = vld [vmem:[%s5 + $0x1a0] sm:$0xff]
  %v2147 = vld [vmem:[%s5 + $0x1a8] sm:$0xff]
  %v2148 = vld [vmem:[%s5 + $0x1b0] sm:$0xff]
  %v2149 = vld [vmem:[%s5 + $0x1b8] sm:$0xff]
  %v2150 = vld [vmem:[%s5 + $0x1c0] sm:$0xff]
  %v2151 = vld [vmem:[%s5 + $0x1c8] sm:$0xff]
  %v2152 = vld [vmem:[%s5 + $0x1d0] sm:$0xff]
  %v2153 = vld [vmem:[%s5 + $0x1d8] sm:$0xff]
  %v2154 = vld [vmem:[%s5 + $0x1e0] sm:$0xff]
  %v2155 = vld [vmem:[%s5 + $0x1e8] sm:$0xff]
  %v2156 = vld [vmem:[%s5 + $0x1f0] sm:$0xff]
  %v2157 = vld [vmem:[%s5 + $0x1f8] sm:$0xff]
  %v2158 = vld [vmem:[%s5 + $0x200] sm:$0xff]
  %v2159 = vld [vmem:[%s5 + $0x208] sm:$0xff]
  %v2160 = vld [vmem:[%s5 + $0x210] sm:$0xff]
  %v2161 = vld [vmem:[%s5 + $0x218] sm:$0xff]
  %v2162 = vld [vmem:[%s5 + $0x220] sm:$0xff]
  %v2163 = vld [vmem:[%s5 + $0x228] sm:$0xff]
  %v2164 = vld [vmem:[%s5 + $0x230] sm:$0xff]
  %v2165 = vld [vmem:[%s5 + $0x238] sm:$0xff]
  %v2166 = vld [vmem:[%s5 + $0x240] sm:$0xff]
  %v2167 = vld [vmem:[%s5 + $0x248] sm:$0xff]
  %v2168 = vld [vmem:[%s5 + $0x250] sm:$0xff]
  %v2169 = vld [vmem:[%s5 + $0x258] sm:$0xff]
  %v2170 = vld [vmem:[%s5 + $0x260] sm:$0xff]
  %v2171 = vld [vmem:[%s5 + $0x268] sm:$0xff]
  %v2172 = vld [vmem:[%s5 + $0x270] sm:$0xff]
  %v2173 = vld [vmem:[%s5 + $0x278] sm:$0xff]
  %v2174 = vld [vmem:[%s5 + $0x280] sm:$0xff]
  %v2175 = vld [vmem:[%s5 + $0x288] sm:$0xff]
  %v2176 = vld [vmem:[%s5 + $0x290] sm:$0xff]
  %v2177 = vld [vmem:[%s5 + $0x298] sm:$0xff]
  %v2178 = vld [vmem:[%s5 + $0x2a0] sm:$0xff]
  %v2179 = vld [vmem:[%s5 + $0x2a8] sm:$0xff]
  %v2180 = vld [vmem:[%s5 + $0x2b0] sm:$0xff]
  %v2181 = vld [vmem:[%s5 + $0x2b8] sm:$0xff]
  %v2182 = vld [vmem:[%s5 + $0x2c0] sm:$0xff]
  %v2183 = vld [vmem:[%s5 + $0x2c8] sm:$0xff]
  %v2184 = vld [vmem:[%s5 + $0x2d0] sm:$0xff]
  %v2185 = vld [vmem:[%s5 + $0x2d8] sm:$0xff]
  %v2186 = vld [vmem:[%s5 + $0x2e0] sm:$0xff]
  %v2187 = vld [vmem:[%s5 + $0x2e8] sm:$0xff]
  %v2188 = vld [vmem:[%s5 + $0x2f0] sm:$0xff]
  %v2189 = vld [vmem:[%s5 + $0x2f8] sm:$0xff]
  %v2190 = vld [vmem:[%s5 + $0x300] sm:$0xff]
  %v2191 = vld [vmem:[%s5 + $0x308] sm:$0xff]
  %v2192 = vld [vmem:[%s5 + $0x310] sm:$0xff]
  %v2193 = vld [vmem:[%s5 + $0x318] sm:$0xff]
  %v2194 = vld [vmem:[%s5 + $0x320] sm:$0xff]
  %v2195 = vld [vmem:[%s5 + $0x328] sm:$0xff]
  %v2196 = vld [vmem:[%s5 + $0x330] sm:$0xff]
  %v2197 = vld [vmem:[%s5 + $0x338] sm:$0xff]
  %v2198 = vld [vmem:[%s5 + $0x340] sm:$0xf]
  %v2199 = vld [vmem:[%s5 + $0x348] sm:$0xf]
  %v2200 = vld [vmem:[%s6] sm:$0x3]
  %v2202 = vlaneseq
  %v2203 = vshrl.u32 %v2202, 7
  %v2204 = vsub.s32 0, %v2203
  %v2205 = vrot.slane %v2200, %v2204
  %v2206 = vlaneseq
  %v2207 = vshrl.u32 %v2206, 7
  %v2208 = vsub.s32 1, %v2207
  %v2209 = vrot.slane %v2200, %v2208
  %vm2212 = vcmask 293888
  %v2213 = vsel %vm2212, %v1995, 0
  %v2215 = vsel %vm2212, %v1997, 0
  %v2217 = vsel %vm2212, %v1999, 0
  %v2219 = vsel %vm2212, %v2001, 0
  %v2221 = vsel %vm2212, %v2003, 0
  %v2223 = vsel %vm2212, %v2005, 0
  %v2225 = vsel %vm2212, %v2007, 0
  %v2227 = vsel %vm2212, %v2009, 0
  %v2229 = vsel %vm2212, %v2011, 0
  %v2231 = vsel %vm2212, %v2013, 0
  %v2233 = vsel %vm2212, %v2015, 0
  %v2235 = vsel %vm2212, %v2017, 0
  %v2237 = vsel %vm2212, %v2019, 0
  %v2239 = vsel %vm2212, %v2021, 0
  %v2242 = vsel %vm594, %v2198, 0
  %v2245 = vsel %vm594, %v2199, 0
  %2247 = vmatprep.subr.mxu0 %v2095
  %2248 = vmatpush1.msra.mxu0 %v2094
  %2249 = vmatprep.subr.mxu0 %v2097
  %2250 = vmatpush1.msra.mxu0 %v2096
  %2251 = vmatprep.subr.mxu0 %v2099
  %2252 = vmatpush1.msra.mxu0 %v2098
  %2253 = vmatprep.subr.mxu0 %v2101
  %2254 = vmatpush1.msra.mxu0 %v2100
  %2255 = vmatprep.subr.mxu0 %v2103
  %2256 = vmatpush1.msra.mxu0 %v2102
  %2257 = vmatprep.subr.mxu0 %v2105
  %2258 = vmatpush1.msra.mxu0 %v2104
  %2259 = vmatprep.subr.mxu0 %v2107
  %2260 = vmatpush1.msra.mxu0 %v2106
  %2261 = vmatprep.subr.mxu0 %v2109
  %2262 = vmatpush1.msra.mxu0 %v2108
  %2263 = vmatprep.subr.mxu0 %v2111
  %2264 = vmatpush1.msra.mxu0 %v2110
  %2265 = vmatprep.subr.mxu0 %v2113
  %2266 = vmatpush1.msra.mxu0 %v2112
  %2267 = vmatprep.subr.mxu0 %v2115
  %2268 = vmatpush1.msra.mxu0 %v2114
  %2269 = vmatprep.subr.mxu0 %v2117
  %2270 = vmatpush1.msra.mxu0 %v2116
  %2271 = vmatprep.subr.mxu0 %v2119
  %2272 = vmatpush1.msra.mxu0 %v2118
  %2273 = vmatprep.subr.mxu0 %v2121
  %2274 = vmatpush1.msra.mxu0 %v2120
  %2275 = vmatprep.subr.mxu0 %v2123
  %2276 = vmatpush1.msra.mxu0 %v2122
  %2277 = vmatprep.subr.mxu0 %v2125
  %2278 = vmatpush1.msra.mxu0 %v2124
  %2279 = vmatprep.subr.mxu0 %v2127
  %2280 = vmatpush1.msra.mxu0 %v2126
  %2281 = vmatprep.subr.mxu0 %v2129
  %2282 = vmatpush1.msra.mxu0 %v2128
  %2283 = vmatprep.subr.mxu0 %v2131
  %2284 = vmatpush1.msra.mxu0 %v2130
  %2285 = vmatprep.subr.mxu0 %v2133
  %2286 = vmatpush1.msra.mxu0 %v2132
  %2287 = vmatprep.subr.mxu0 %v2135
  %2288 = vmatpush1.msra.mxu0 %v2134
  %2289 = vmatprep.subr.mxu0 %v2137
  %2290 = vmatpush1.msra.mxu0 %v2136
  %2291 = vmatprep.subr.mxu0 %v2139
  %2292 = vmatpush1.msra.mxu0 %v2138
  %2293 = vmatprep.subr.mxu0 %v2141
  %2294 = vmatpush1.msra.mxu0 %v2140
  %2295 = vmatprep.subr.mxu0 %v2143
  %2296 = vmatpush1.msra.mxu0 %v2142
  %2297 = vmatprep.subr.mxu0 %v2145
  %2298 = vmatpush1.msra.mxu0 %v2144
  %2299 = vmatprep.subr.mxu0 %v2147
  %2300 = vmatpush1.msra.mxu0 %v2146
  %2301 = vmatprep.subr.mxu0 %v2149
  %2302 = vmatpush1.msra.mxu0 %v2148
  %2303 = vmatprep.subr.mxu0 %v2151
  %2304 = vmatpush1.msra.mxu0 %v2150
  %2305 = vmatprep.subr.mxu0 %v2153
  %2306 = vmatpush1.msra.mxu0 %v2152
  %2307 = vmatprep.subr.mxu0 %v2155
  %2308 = vmatpush1.msra.mxu0 %v2154
  %2309 = vmatprep.subr.mxu0 %v2157
  %2310 = vmatpush1.msra.mxu0 %v2156
  %2311 = vmatprep.mubr.f32.mxu0 %v2065
  %2312 = vmatmul.mubr.f32.gmra.mrb[0].mxu0 %v2037
  %v2313 = vpop.f32.mrb[0].mxu0
  %v2314 = vadd.f32 %v2205, %v2313
  %v2315 = vpop.f32.mrb[0].mxu0
  %v2316 = vadd.f32 %v2209, %v2315
  %2317 = vmatprep.mubr.f32.mxu0 %v2066
  %2318 = vmatmul.mubr.f32.gmra.mrb[0].mxu0 %v2038
  %v2319 = vpop.f32.mrb[0].mxu0
  %v2320 = vadd.f32 %v2205, %v2319
  %v2321 = vpop.f32.mrb[0].mxu0
  %v2322 = vadd.f32 %v2209, %v2321
  %2323 = vmatprep.mubr.f32.mxu0 %v2067
  %2324 = vmatmul.mubr.f32.gmra.mrb[0].mxu0 %v2039
  %v2325 = vpop.f32.mrb[0].mxu0
  %v2326 = vadd.f32 %v2205, %v2325
  %v2327 = vpop.f32.mrb[0].mxu0
  %v2328 = vadd.f32 %v2209, %v2327
  %2329 = vmatprep.mubr.f32.mxu0 %v2068
  %2330 = vmatmul.mubr.f32.gmra.mrb[0].mxu0 %v2040
  %v2331 = vpop.f32.mrb[0].mxu0
  %v2332 = vadd.f32 %v2205, %v2331
  %v2333 = vpop.f32.mrb[0].mxu0
  %v2334 = vadd.f32 %v2209, %v2333
  %2335 = vmatprep.mubr.f32.mxu0 %v2069
  %2336 = vmatmul.mubr.f32.gmra.mrb[0].mxu0 %v2041
  %v2337 = vpop.f32.mrb[0].mxu0
  %v2338 = vadd.f32 %v2205, %v2337
  %v2339 = vpop.f32.mrb[0].mxu0
  %v2340 = vadd.f32 %v2209, %v2339
  %2341 = vmatprep.mubr.f32.mxu0 %v2070
  %2342 = vmatmul.mubr.f32.gmra.mrb[0].mxu0 %v2042
  %v2343 = vpop.f32.mrb[0].mxu0
  %v2344 = vadd.f32 %v2205, %v2343
  %v2345 = vpop.f32.mrb[0].mxu0
  %v2346 = vadd.f32 %v2209, %v2345
  %2347 = vmatprep.mubr.f32.mxu0 %v2071
  %2348 = vmatmul.mubr.f32.gmra.mrb[0].mxu0 %v2043
  %v2349 = vpop.f32.mrb[0].mxu0
  %v2350 = vadd.f32 %v2205, %v2349
  %v2351 = vpop.f32.mrb[0].mxu0
  %v2352 = vadd.f32 %v2209, %v2351
  %2353 = vmatprep.mubr.f32.mxu0 %v2072
  %2354 = vmatmul.mubr.f32.gmra.mrb[0].mxu0 %v2044
  %v2355 = vpop.f32.mrb[0].mxu0
  %v2356 = vadd.f32 %v2205, %v2355
  %v2357 = vpop.f32.mrb[0].mxu0
  %v2358 = vadd.f32 %v2209, %v2357
  %2359 = vmatprep.mubr.f32.mxu0 %v2073
  %2360 = vmatmul.mubr.f32.gmra.mrb[0].mxu0 %v2045
  %v2361 = vpop.f32.mrb[0].mxu0
  %v2362 = vadd.f32 %v2205, %v2361
  %v2363 = vpop.f32.mrb[0].mxu0
  %v2364 = vadd.f32 %v2209, %v2363
  %2365 = vmatprep.mubr.f32.mxu0 %v2074
  %2366 = vmatmul.mubr.f32.gmra.mrb[0].mxu0 %v2046
  %v2367 = vpop.f32.mrb[0].mxu0
  %v2368 = vadd.f32 %v2205, %v2367
  %v2369 = vpop.f32.mrb[0].mxu0
  %v2370 = vadd.f32 %v2209, %v2369
  %2371 = vmatprep.mubr.f32.mxu0 %v2075
  %2372 = vmatmul.mubr.f32.gmra.mrb[0].mxu0 %v2047
  %v2373 = vpop.f32.mrb[0].mxu0
  %v2374 = vadd.f32 %v2205, %v2373
  %v2375 = vpop.f32.mrb[0].mxu0
  %v2376 = vadd.f32 %v2209, %v2375
  %2377 = vmatprep.mubr.f32.mxu0 %v2076
  %2378 = vmatmul.mubr.f32.gmra.mrb[0].mxu0 %v2048
  %v2379 = vpop.f32.mrb[0].mxu0
  %v2380 = vadd.f32 %v2205, %v2379
  %v2381 = vpop.f32.mrb[0].mxu0
  %v2382 = vadd.f32 %v2209, %v2381
  %2383 = vmatprep.mubr.f32.mxu0 %v2077
  %2384 = vmatmul.mubr.f32.gmra.mrb[0].mxu0 %v2049
  %v2385 = vpop.f32.mrb[0].mxu0
  %v2386 = vadd.f32 %v2205, %v2385
  %v2387 = vpop.f32.mrb[0].mxu0
  %v2388 = vadd.f32 %v2209, %v2387
  %2389 = vmatprep.mubr.f32.mxu0 %v2078
  %2390 = vmatmul.mubr.f32.gmra.mrb[0].mxu0 %v2050
  %v2391 = vpop.f32.mrb[0].mxu0
  %v2392 = vadd.f32 %v2205, %v2391
  %v2393 = vpop.f32.mrb[0].mxu0
  %v2394 = vadd.f32 %v2209, %v2393
  %2395 = vdwg.mxu0
  %2396 = vmatprep.subr.mxu0 %v2159
  %2397 = vmatpush1.msra.mxu0 %v2158
  %2398 = vmatprep.subr.mxu0 %v2161
  %2399 = vmatpush1.msra.mxu0 %v2160
  %2400 = vmatprep.subr.mxu0 %v2163
  %2401 = vmatpush1.msra.mxu0 %v2162
  %2402 = vmatprep.subr.mxu0 %v2165
  %2403 = vmatpush1.msra.mxu0 %v2164
  %2404 = vmatprep.subr.mxu0 %v2167
  %2405 = vmatpush1.msra.mxu0 %v2166
  %2406 = vmatprep.subr.mxu0 %v2169
  %2407 = vmatpush1.msra.mxu0 %v2168
  %2408 = vmatprep.subr.mxu0 %v2171
  %2409 = vmatpush1.msra.mxu0 %v2170
  %2410 = vmatprep.subr.mxu0 %v2173
  %2411 = vmatpush1.msra.mxu0 %v2172
  %2412 = vmatprep.subr.mxu0 %v2175
  %2413 = vmatpush1.msra.mxu0 %v2174
  %2414 = vmatprep.subr.mxu0 %v2177
  %2415 = vmatpush1.msra.mxu0 %v2176
  %2416 = vmatprep.subr.mxu0 %v2179
  %2417 = vmatpush1.msra.mxu0 %v2178
  %2418 = vmatprep.subr.mxu0 %v2181
  %2419 = vmatpush1.msra.mxu0 %v2180
  %2420 = vmatprep.subr.mxu0 %v2183
  %2421 = vmatpush1.msra.mxu0 %v2182
  %2422 = vmatprep.subr.mxu0 %v2185
  %2423 = vmatpush1.msra.mxu0 %v2184
  %2424 = vmatprep.subr.mxu0 %v2187
  %2425 = vmatpush1.msra.mxu0 %v2186
  %2426 = vmatprep.subr.mxu0 %v2189
  %2427 = vmatpush1.msra.mxu0 %v2188
  %2428 = vmatprep.subr.mxu0 %v2191
  %2429 = vmatpush1.msra.mxu0 %v2190
  %2430 = vmatprep.subr.mxu0 %v2193
  %2431 = vmatpush1.msra.mxu0 %v2192
  %2432 = vmatprep.subr.mxu0 %v2195
  %2433 = vmatpush1.msra.mxu0 %v2194
  %2434 = vmatprep.subr.mxu0 %v2197
  %2435 = vmatpush1.msra.mxu0 %v2196
  %2436 = vmatprep.subr.mxu0 %v2245
  %2437 = vmatpush1.msra.mxu0 %v2242
  %2438 = vmatprep.subr.mxu0 0.0
  %2439 = vmatpush1.msra.mxu0 0.0
  %2440 = vmatprep.subr.mxu0 0.0
  %2441 = vmatpush1.msra.mxu0 0.0
  %2442 = vmatprep.subr.mxu0 0.0
  %2443 = vmatpush1.msra.mxu0 0.0
  %2444 = vmatprep.subr.mxu0 0.0
  %2445 = vmatpush1.msra.mxu0 0.0
  %2446 = vmatprep.subr.mxu0 0.0
  %2447 = vmatpush1.msra.mxu0 0.0
  %2448 = vmatprep.subr.mxu0 0.0
  %2449 = vmatpush1.msra.mxu0 0.0
  %2450 = vmatprep.subr.mxu0 0.0
  %2451 = vmatpush1.msra.mxu0 0.0
  %2452 = vmatprep.subr.mxu0 0.0
  %2453 = vmatpush1.msra.mxu0 0.0
  %2454 = vmatprep.subr.mxu0 0.0
  %2455 = vmatpush1.msra.mxu0 0.0
  %2456 = vmatprep.subr.mxu0 0.0
  %2457 = vmatpush1.msra.mxu0 0.0
  %2458 = vmatprep.subr.mxu0 0.0
  %2459 = vmatpush1.msra.mxu0 0.0
  %2460 = vmatprep.mubr.f32.mxu0 %v2213
  %2461 = vmatmul.mubr.f32.gmra.mrb[0].mxu0 %v2080
  %v2462 = vpop.f32.mrb[0].mxu0
  %v2463 = vadd.f32 %v2314, %v2462
  %v2464 = vpop.f32.mrb[0].mxu0
  %v2465 = vadd.f32 %v2316, %v2464
  %2466 = vmatprep.mubr.f32.mxu0 %v2215
  %2467 = vmatmul.mubr.f32.gmra.mrb[0].mxu0 %v2081
  %v2468 = vpop.f32.mrb[0].mxu0
  %v2469 = vadd.f32 %v2320, %v2468
  %v2470 = vpop.f32.mrb[0].mxu0
  %v2471 = vadd.f32 %v2322, %v2470
  %2472 = vmatprep.mubr.f32.mxu0 %v2217
  %2473 = vmatmul.mubr.f32.gmra.mrb[0].mxu0 %v2082
  %v2474 = vpop.f32.mrb[0].mxu0
  %v2475 = vadd.f32 %v2326, %v2474
  %v2476 = vpop.f32.mrb[0].mxu0
  %v2477 = vadd.f32 %v2328, %v2476
  %2478 = vmatprep.mubr.f32.mxu0 %v2219
  %2479 = vmatmul.mubr.f32.gmra.mrb[0].mxu0 %v2083
  %v2480 = vpop.f32.mrb[0].mxu0
  %v2481 = vadd.f32 %v2332, %v2480
  %v2482 = vpop.f32.mrb[0].mxu0
  %v2483 = vadd.f32 %v2334, %v2482
  %2484 = vmatprep.mubr.f32.mxu0 %v2221
  %2485 = vmatmul.mubr.f32.gmra.mrb[0].mxu0 %v2084
  %v2486 = vpop.f32.mrb[0].mxu0
  %v2487 = vadd.f32 %v2338, %v2486
  %v2488 = vpop.f32.mrb[0].mxu0
  %v2489 = vadd.f32 %v2340, %v2488
  %2490 = vmatprep.mubr.f32.mxu0 %v2223
  %2491 = vmatmul.mubr.f32.gmra.mrb[0].mxu0 %v2085
  %v2492 = vpop.f32.mrb[0].mxu0
  %v2493 = vadd.f32 %v2344, %v2492
  %v2494 = vpop.f32.mrb[0].mxu0
  %v2495 = vadd.f32 %v2346, %v2494
  %2496 = vmatprep.mubr.f32.mxu0 %v2225
  %2497 = vmatmul.mubr.f32.gmra.mrb[0].mxu0 %v2086
  %v2498 = vpop.f32.mrb[0].mxu0
  %v2499 = vadd.f32 %v2350, %v2498
  %v2500 = vpop.f32.mrb[0].mxu0
  %v2501 = vadd.f32 %v2352, %v2500
  %2502 = vmatprep.mubr.f32.mxu0 %v2227
  %2503 = vmatmul.mubr.f32.gmra.mrb[0].mxu0 %v2087
  %v2504 = vpop.f32.mrb[0].mxu0
  %v2505 = vadd.f32 %v2356, %v2504
  %v2506 = vpop.f32.mrb[0].mxu0
  %v2507 = vadd.f32 %v2358, %v2506
  %2508 = vmatprep.mubr.f32.mxu0 %v2229
  %2509 = vmatmul.mubr.f32.gmra.mrb[0].mxu0 %v2088
  %v2510 = vpop.f32.mrb[0].mxu0
  %v2511 = vadd.f32 %v2362, %v2510
  %v2512 = vpop.f32.mrb[0].mxu0
  %v2513 = vadd.f32 %v2364, %v2512
  %2514 = vmatprep.mubr.f32.mxu0 %v2231
  %2515 = vmatmul.mubr.f32.gmra.mrb[0].mxu0 %v2089
  %v2516 = vpop.f32.mrb[0].mxu0
  %v2517 = vadd.f32 %v2368, %v2516
  %v2518 = vpop.f32.mrb[0].mxu0
  %v2519 = vadd.f32 %v2370, %v2518
  %2520 = vmatprep.mubr.f32.mxu0 %v2233
  %2521 = vmatmul.mubr.f32.gmra.mrb[0].mxu0 %v2090
  %v2522 = vpop.f32.mrb[0].mxu0
  %v2523 = vadd.f32 %v2374, %v2522
  %v2524 = vpop.f32.mrb[0].mxu0
  %v2525 = vadd.f32 %v2376, %v2524
  %2526 = vmatprep.mubr.f32.mxu0 %v2235
  %2527 = vmatmul.mubr.f32.gmra.mrb[0].mxu0 %v2091
  %v2528 = vpop.f32.mrb[0].mxu0
  %v2529 = vadd.f32 %v2380, %v2528
  %v2530 = vpop.f32.mrb[0].mxu0
  %v2531 = vadd.f32 %v2382, %v2530
  %2532 = vmatprep.mubr.f32.mxu0 %v2237
  %2533 = vmatmul.mubr.f32.gmra.mrb[0].mxu0 %v2092
  %v2534 = vpop.f32.mrb[0].mxu0
  %v2535 = vadd.f32 %v2386, %v2534
  %v2536 = vpop.f32.mrb[0].mxu0
  %v2537 = vadd.f32 %v2388, %v2536
  %2538 = vmatprep.mubr.f32.mxu0 %v2239
  %2539 = vmatmul.mubr.f32.gmra.mrb[0].mxu0 %v2093
  %v2540 = vpop.f32.mrb[0].mxu0
  %v2541 = vadd.f32 %v2392, %v2540
  %v2542 = vpop.f32.mrb[0].mxu0
  %v2543 = vadd.f32 %v2394, %v2542
  %2544 = vdwg.mxu0
  %v2545 = vmax.f32 %v2463, 0.0
  %v2546 = vmax.f32 %v2465, 0.0
  %v2547 = vmax.f32 %v2469, 0.0
  %v2548 = vmax.f32 %v2471, 0.0
  %v2549 = vmax.f32 %v2475, 0.0
  %v2550 = vmax.f32 %v2477, 0.0
  %v2551 = vmax.f32 %v2481, 0.0
  %v2552 = vmax.f32 %v2483, 0.0
  %v2553 = vmax.f32 %v2487, 0.0
  %v2554 = vmax.f32 %v2489, 0.0
  %v2555 = vmax.f32 %v2493, 0.0
  %v2556 = vmax.f32 %v2495, 0.0
  %v2557 = vmax.f32 %v2499, 0.0
  %v2558 = vmax.f32 %v2501, 0.0
  %v2559 = vmax.f32 %v2505, 0.0
  %v2560 = vmax.f32 %v2507, 0.0
  %v2561 = vmax.f32 %v2511, 0.0
  %v2562 = vmax.f32 %v2513, 0.0
  %v2563 = vmax.f32 %v2517, 0.0
  %v2564 = vmax.f32 %v2519, 0.0
  %v2565 = vmax.f32 %v2523, 0.0
  %v2566 = vmax.f32 %v2525, 0.0
  %v2567 = vmax.f32 %v2529, 0.0
  %v2568 = vmax.f32 %v2531, 0.0
  %v2569 = vmax.f32 %v2535, 0.0
  %v2570 = vmax.f32 %v2537, 0.0
  %v2571 = vmax.f32 %v2541, 0.0
  %v2572 = vmax.f32 %v2543, 0.0
  %v2573 = vld [vmem:[%s8] sm:$0xff]
  %v2574 = vld [vmem:[%s8 + $0x8] sm:$0xff]
  %v2575 = vld [vmem:[%s8 + $0x10] sm:$0xff]
  %v2576 = vld [vmem:[%s8 + $0x18] sm:$0xff]
  %v2577 = vld [vmem:[%s8 + $0x20] sm:$0xff]
  %v2578 = vld [vmem:[%s7] sm:$0xff]
  %v2579 = vld [vmem:[%s7 + $0x8] sm:$0xff]
  %v2580 = vld [vmem:[%s7 + $0x10] sm:$0xff]
  %v2581 = vld [vmem:[%s7 + $0x18] sm:$0xff]
  %v2582 = vld [vmem:[%s7 + $0x20] sm:$0xff]
  %v2583 = vld [vmem:[%s7 + $0x28] sm:$0xff]
  %v2584 = vld [vmem:[%s7 + $0x30] sm:$0xff]
  %v2585 = vld [vmem:[%s7 + $0x38] sm:$0xff]
  %v2586 = vld [vmem:[%s7 + $0x40] sm:$0xff]
  %v2587 = vld [vmem:[%s7 + $0x48] sm:$0xff]
  %v2588 = vld [vmem:[%s7 + $0x50] sm:$0xff]
  %v2589 = vld [vmem:[%s7 + $0x58] sm:$0xff]
  %v2590 = vld [vmem:[%s7 + $0x60] sm:$0xff]
  %v2591 = vld [vmem:[%s7 + $0x68] sm:$0xff]
  %v2592 = vld [vmem:[%s7 + $0x70] sm:$0xff]
  %v2593 = vld [vmem:[%s7 + $0x78] sm:$0xff]
  %v2594 = vld [vmem:[%s7 + $0x80] sm:$0xff]
  %v2595 = vld [vmem:[%s7 + $0x88] sm:$0xff]
  %v2596 = vld [vmem:[%s7 + $0x90] sm:$0xff]
  %v2597 = vld [vmem:[%s7 + $0x98] sm:$0xff]
  %v2599 = vsel %vm658, %v2546, 0
  %v2602 = vsel %vm658, %v2548, 0
  %v2605 = vsel %vm658, %v2550, 0
  %v2608 = vsel %vm658, %v2552, 0
  %v2611 = vsel %vm658, %v2554, 0
  %v2614 = vsel %vm658, %v2556, 0
  %v2617 = vsel %vm658, %v2558, 0
  %v2620 = vsel %vm658, %v2560, 0
  %v2623 = vsel %vm658, %v2562, 0
  %v2626 = vsel %vm658, %v2564, 0
  %v2629 = vsel %vm658, %v2566, 0
  %v2632 = vsel %vm658, %v2568, 0
  %v2635 = vsel %vm658, %v2570, 0
  %v2638 = vsel %vm658, %v2572, 0
  %2640 = vmatprep.subr.mxu0 0.0
  %2641 = vmatpush1.msra.mxu0 %v2578
  %2642 = vmatprep.subr.mxu0 0.0
  %2643 = vmatpush1.msra.mxu0 %v2579
  %2644 = vmatprep.subr.mxu0 0.0
  %2645 = vmatpush1.msra.mxu0 %v2580
  %2646 = vmatprep.subr.mxu0 0.0
  %2647 = vmatpush1.msra.mxu0 %v2581
  %2648 = vmatprep.subr.mxu0 0.0
  %2649 = vmatpush1.msra.mxu0 %v2582
  %2650 = vmatprep.subr.mxu0 0.0
  %2651 = vmatpush1.msra.mxu0 %v2583
  %2652 = vmatprep.subr.mxu0 0.0
  %2653 = vmatpush1.msra.mxu0 %v2584
  %2654 = vmatprep.subr.mxu0 0.0
  %2655 = vmatpush1.msra.mxu0 %v2585
  %2656 = vmatprep.subr.mxu0 0.0
  %2657 = vmatpush1.msra.mxu0 %v2586
  %2658 = vmatprep.subr.mxu0 0.0
  %2659 = vmatpush1.msra.mxu0 %v2587
  %2660 = vmatprep.subr.mxu0 0.0
  %2661 = vmatpush1.msra.mxu0 %v2588
  %2662 = vmatprep.subr.mxu0 0.0
  %2663 = vmatpush1.msra.mxu0 %v2589
  %2664 = vmatprep.subr.mxu0 0.0
  %2665 = vmatpush1.msra.mxu0 %v2590
  %2666 = vmatprep.subr.mxu0 0.0
  %2667 = vmatpush1.msra.mxu0 %v2591
  %2668 = vmatprep.subr.mxu0 0.0
  %2669 = vmatpush1.msra.mxu0 %v2592
  %2670 = vmatprep.subr.mxu0 0.0
  %2671 = vmatpush1.msra.mxu0 %v2593
  %2672 = vmatprep.subr.mxu0 0.0
  %2673 = vmatpush1.msra.mxu0 %v2594
  %2674 = vmatprep.subr.mxu0 0.0
  %2675 = vmatpush1.msra.mxu0 %v2595
  %2676 = vmatprep.subr.mxu0 0.0
  %2677 = vmatpush1.msra.mxu0 %v2596
  %2678 = vmatprep.subr.mxu0 0.0
  %2679 = vmatpush1.msra.mxu0 %v2597
  %2680 = vmatprep.subr.mxu0 0.0
  %2681 = vmatpush1.msra.mxu0 0.0
  %2682 = vmatprep.subr.mxu0 0.0
  %2683 = vmatpush1.msra.mxu0 0.0
  %2684 = vmatprep.subr.mxu0 0.0
  %2685 = vmatpush1.msra.mxu0 0.0
  %2686 = vmatprep.subr.mxu0 0.0
  %2687 = vmatpush1.msra.mxu0 0.0
  %2688 = vmatprep.subr.mxu0 0.0
  %2689 = vmatpush1.msra.mxu0 0.0
  %2690 = vmatprep.subr.mxu0 0.0
  %2691 = vmatpush1.msra.mxu0 0.0
  %2692 = vmatprep.subr.mxu0 0.0
  %2693 = vmatpush1.msra.mxu0 0.0
  %2694 = vmatprep.subr.mxu0 0.0
  %2695 = vmatpush1.msra.mxu0 0.0
  %2696 = vmatprep.subr.mxu0 0.0
  %2697 = vmatpush1.msra.mxu0 0.0
  %2698 = vmatprep.subr.mxu0 0.0
  %2699 = vmatpush1.msra.mxu0 0.0
  %2700 = vmatprep.subr.mxu0 0.0
  %2701 = vmatpush1.msra.mxu0 0.0
  %2702 = vmatprep.subr.mxu0 0.0
  %2703 = vmatpush1.msra.mxu0 0.0
  %2704 = vmatprep.mubr.f32.mxu0 %v2599
  %2705 = vmatmul.mubr.f32.gmra.mrb[0].mxu0 %v2545
  %v2706 = vpop.f32.mrb[0].mxu0
  %v2707 = vadd.f32 0.0, %v2706
  %v2708 = vpop.f32.mrb[0].mxu0
  %2709 = vmatprep.mubr.f32.mxu0 %v2602
  %2710 = vmatmul.mubr.f32.gmra.mrb[0].mxu0 %v2547
  %v2711 = vpop.f32.mrb[0].mxu0
  %v2712 = vadd.f32 0.0, %v2711
  %v2713 = vpop.f32.mrb[0].mxu0
  %2714 = vmatprep.mubr.f32.mxu0 %v2605
  %2715 = vmatmul.mubr.f32.gmra.mrb[0].mxu0 %v2549
  %v2716 = vpop.f32.mrb[0].mxu0
  %v2717 = vadd.f32 0.0, %v2716
  %v2718 = vpop.f32.mrb[0].mxu0
  %2719 = vmatprep.mubr.f32.mxu0 %v2608
  %2720 = vmatmul.mubr.f32.gmra.mrb[0].mxu0 %v2551
  %v2721 = vpop.f32.mrb[0].mxu0
  %v2722 = vadd.f32 0.0, %v2721
  %v2723 = vpop.f32.mrb[0].mxu0
  %2724 = vmatprep.mubr.f32.mxu0 %v2611
  %2725 = vmatmul.mubr.f32.gmra.mrb[0].mxu0 %v2553
  %v2726 = vpop.f32.mrb[0].mxu0
  %v2727 = vadd.f32 0.0, %v2726
  %v2728 = vpop.f32.mrb[0].mxu0
  %2729 = vmatprep.mubr.f32.mxu0 %v2614
  %2730 = vmatmul.mubr.f32.gmra.mrb[0].mxu0 %v2555
  %v2731 = vpop.f32.mrb[0].mxu0
  %v2732 = vadd.f32 0.0, %v2731
  %v2733 = vpop.f32.mrb[0].mxu0
  %2734 = vmatprep.mubr.f32.mxu0 %v2617
  %2735 = vmatmul.mubr.f32.gmra.mrb[0].mxu0 %v2557
  %v2736 = vpop.f32.mrb[0].mxu0
  %v2737 = vadd.f32 0.0, %v2736
  %v2738 = vpop.f32.mrb[0].mxu0
  %2739 = vmatprep.mubr.f32.mxu0 %v2620
  %2740 = vmatmul.mubr.f32.gmra.mrb[0].mxu0 %v2559
  %v2741 = vpop.f32.mrb[0].mxu0
  %v2742 = vadd.f32 0.0, %v2741
  %v2743 = vpop.f32.mrb[0].mxu0
  %2744 = vmatprep.mubr.f32.mxu0 %v2623
  %2745 = vmatmul.mubr.f32.gmra.mrb[0].mxu0 %v2561
  %v2746 = vpop.f32.mrb[0].mxu0
  %v2747 = vadd.f32 0.0, %v2746
  %v2748 = vpop.f32.mrb[0].mxu0
  %2749 = vmatprep.mubr.f32.mxu0 %v2626
  %2750 = vmatmul.mubr.f32.gmra.mrb[0].mxu0 %v2563
  %v2751 = vpop.f32.mrb[0].mxu0
  %v2752 = vadd.f32 0.0, %v2751
  %v2753 = vpop.f32.mrb[0].mxu0
  %2754 = vmatprep.mubr.f32.mxu0 %v2629
  %2755 = vmatmul.mubr.f32.gmra.mrb[0].mxu0 %v2565
  %v2756 = vpop.f32.mrb[0].mxu0
  %v2757 = vadd.f32 0.0, %v2756
  %v2758 = vpop.f32.mrb[0].mxu0
  %2759 = vmatprep.mubr.f32.mxu0 %v2632
  %2760 = vmatmul.mubr.f32.gmra.mrb[0].mxu0 %v2567
  %v2761 = vpop.f32.mrb[0].mxu0
  %v2762 = vadd.f32 0.0, %v2761
  %v2763 = vpop.f32.mrb[0].mxu0
  %2764 = vmatprep.mubr.f32.mxu0 %v2635
  %2765 = vmatmul.mubr.f32.gmra.mrb[0].mxu0 %v2569
  %v2766 = vpop.f32.mrb[0].mxu0
  %v2767 = vadd.f32 0.0, %v2766
  %v2768 = vpop.f32.mrb[0].mxu0
  %2769 = vmatprep.mubr.f32.mxu0 %v2638
  %2770 = vmatmul.mubr.f32.gmra.mrb[0].mxu0 %v2571
  %v2771 = vpop.f32.mrb[0].mxu0
  %v2772 = vadd.f32 0.0, %v2771
  %v2773 = vpop.f32.mrb[0].mxu0
  %2774 = vdwg.mxu0
  %vm2775 = vcmask 883712
  %v2777 = vsel %vm2775, %v2573, 0
  %v2780 = vsel %vm2775, %v2574, 0
  %v2783 = vsel %vm2775, %v2575, 0
  %v2786 = vsel %vm2775, %v2576, 0
  %v2789 = vsel %vm2775, %v2577, 0
  %v2792 = vsel %vm594, %v2772, 0
  %2794 = vmatprep.subr.mxu0 0.0
  %2795 = vmatpush1.msra.mxu0 %v2707
  %2796 = vmatprep.subr.mxu0 0.0
  %2797 = vmatpush1.msra.mxu0 %v2712
  %2798 = vmatprep.subr.mxu0 0.0
  %2799 = vmatpush1.msra.mxu0 %v2717
  %2800 = vmatprep.subr.mxu0 0.0
  %2801 = vmatpush1.msra.mxu0 %v2722
  %2802 = vmatprep.subr.mxu0 0.0
  %2803 = vmatpush1.msra.mxu0 %v2727
  %2804 = vmatprep.subr.mxu0 0.0
  %2805 = vmatpush1.msra.mxu0 %v2732
  %2806 = vmatprep.subr.mxu0 0.0
  %2807 = vmatpush1.msra.mxu0 %v2737
  %2808 = vmatprep.subr.mxu0 0.0
  %2809 = vmatpush1.msra.mxu0 %v2742
  %2810 = vmatprep.subr.mxu0 0.0
  %2811 = vmatpush1.msra.mxu0 %v2747
  %2812 = vmatprep.subr.mxu0 0.0
  %2813 = vmatpush1.msra.mxu0 %v2752
  %2814 = vmatprep.subr.mxu0 0.0
  %2815 = vmatpush1.msra.mxu0 %v2757
  %2816 = vmatprep.subr.mxu0 0.0
  %2817 = vmatpush1.msra.mxu0 %v2762
  %2818 = vmatprep.subr.mxu0 0.0
  %2819 = vmatpush1.msra.mxu0 %v2767
  %2820 = vmatprep.subr.mxu0 0.0
  %2821 = vmatpush1.msra.mxu0 %v2792
  %2822 = vmatprep.subr.mxu0 0.0
  %2823 = vmatpush1.msra.mxu0 0.0
  %2824 = vmatprep.subr.mxu0 0.0
  %2825 = vmatpush1.msra.mxu0 0.0
  %2826 = vmatprep.subr.mxu0 0.0
  %2827 = vmatpush1.msra.mxu0 0.0
  %2828 = vmatprep.subr.mxu0 0.0
  %2829 = vmatpush1.msra.mxu0 0.0
  %2830 = vmatprep.subr.mxu0 0.0
  %2831 = vmatpush1.msra.mxu0 0.0
  %2832 = vmatprep.subr.mxu0 0.0
  %2833 = vmatpush1.msra.mxu0 0.0
  %2834 = vmatprep.subr.mxu0 0.0
  %2835 = vmatpush1.msra.mxu0 0.0
  %2836 = vmatprep.subr.mxu0 0.0
  %2837 = vmatpush1.msra.mxu0 0.0
  %2838 = vmatprep.subr.mxu0 0.0
  %2839 = vmatpush1.msra.mxu0 0.0
  %2840 = vmatprep.subr.mxu0 0.0
  %2841 = vmatpush1.msra.mxu0 0.0
  %2842 = vmatprep.subr.mxu0 0.0
  %2843 = vmatpush1.msra.mxu0 0.0
  %2844 = vmatprep.subr.mxu0 0.0
  %2845 = vmatpush1.msra.mxu0 0.0
  %2846 = vmatprep.subr.mxu0 0.0
  %2847 = vmatpush1.msra.mxu0 0.0
  %2848 = vmatprep.subr.mxu0 0.0
  %2849 = vmatpush1.msra.mxu0 0.0
  %2850 = vmatprep.subr.mxu0 0.0
  %2851 = vmatpush1.msra.mxu0 0.0
  %2852 = vmatprep.subr.mxu0 0.0
  %2853 = vmatpush1.msra.mxu0 0.0
  %2854 = vmatprep.subr.mxu0 0.0
  %2855 = vmatpush1.msra.mxu0 0.0
  %2856 = vmatprep.subr.mxu0 0.0
  %2857 = vmatpush1.msra.mxu0 0.0
  %2858 = vmatprep.mubr.f32.mxu0 0.0
  %2859 = vmatmul.mubr.f32.gmra.mrb[0].mxu0 %v2777
  %v2860 = vpop.f32.mrb[0].mxu0
  %v2861 = vadd.f32 0.0, %v2860
  %v2862 = vpop.f32.mrb[0].mxu0
  %2863 = vmatprep.mubr.f32.mxu0 0.0
  %2864 = vmatmul.mubr.f32.gmra.mrb[0].mxu0 %v2780
  %v2865 = vpop.f32.mrb[0].mxu0
  %v2866 = vadd.f32 0.0, %v2865
  %v2867 = vpop.f32.mrb[0].mxu0
  %2868 = vmatprep.mubr.f32.mxu0 0.0
  %2869 = vmatmul.mubr.f32.gmra.mrb[0].mxu0 %v2783
  %v2870 = vpop.f32.mrb[0].mxu0
  %v2871 = vadd.f32 0.0, %v2870
  %v2872 = vpop.f32.mrb[0].mxu0
  %2873 = vmatprep.mubr.f32.mxu0 0.0
  %2874 = vmatmul.mubr.f32.gmra.mrb[0].mxu0 %v2786
  %v2875 = vpop.f32.mrb[0].mxu0
  %v2876 = vadd.f32 0.0, %v2875
  %v2877 = vpop.f32.mrb[0].mxu0
  %2878 = vmatprep.mubr.f32.mxu0 0.0
  %2879 = vmatmul.mubr.f32.gmra.mrb[0].mxu0 %v2789
  %v2880 = vpop.f32.mrb[0].mxu0
  %v2881 = vadd.f32 0.0, %v2880
  %v2882 = vpop.f32.mrb[0].mxu0
  %2883 = vdwg.mxu0
  %2885 = vrot.lane.b32.xlu0 %v2866, 80
  %v2886 = vpop.permute.xlu0 %2885
  %2889 = vrot.lane.b32.xlu0 %v2871, 32
  %v2890 = vpop.permute.xlu0 %2889
  %2893 = vrot.lane.b32.xlu0 %v2876, 112
  %v2894 = vpop.permute.xlu0 %2893
  %2897 = vrot.lane.b32.xlu0 %v2881, 64
  %v2898 = vpop.permute.xlu0 %2897
  %v2900 = vsel %vm2079, %v2861, %v2886
  %v2901 = vsel %vm658, %v2886, %v2890
  %vm2902 = vcmask 916480
  %v2903 = vsel %vm2902, %v2901, %v2894
  %v2904 = vsel %vm691, %v2894, %v2898
  %v2905 = vld [vmem:[%s9] sm:$0xff]
  %v2906 = vld [vmem:[%s9 + $0x8] sm:$0xff]
  %v2907 = vld [vmem:[%s9 + $0x10] sm:$0xff]
  %v2908 = vld [vmem:[%s9 + $0x18] sm:$0xff]
  %v2909 = vld [vmem:[%s9 + $0x20] sm:$0xff]
  %v2910 = vld [vmem:[%s9 + $0x28] sm:$0xff]
  %v2911 = vld [vmem:[%s9 + $0x30] sm:$0xff]
  %v2912 = vld [vmem:[%s9 + $0x38] sm:$0xff]
  %v2913 = vld [vmem:[%s9 + $0x40] sm:$0xff]
  %v2914 = vld [vmem:[%s9 + $0x48] sm:$0xff]
  %v2915 = vld [vmem:[%s9 + $0x50] sm:$0xff]
  %v2916 = vld [vmem:[%s9 + $0x58] sm:$0xff]
  %v2917 = vld [vmem:[%s9 + $0x60] sm:$0xff]
  %v2918 = vld [vmem:[%s9 + $0x68] sm:$0xff]
  %v2919 = vld [vmem:[%s9 + $0x70] sm:$0xff]
  %v2920 = vld [vmem:[%s9 + $0x78] sm:$0xff]
  %v2921 = vld [vmem:[%s9 + $0x80] sm:$0xff]
  %v2922 = vld [vmem:[%s9 + $0x88] sm:$0xff]
  %v2923 = vld [vmem:[%s9 + $0x90] sm:$0xff]
  %v2924 = vld [vmem:[%s9 + $0x98] sm:$0xff]
  %v2925 = vld [vmem:[%s9 + $0xa0] sm:$0xff]
  %v2926 = vld [vmem:[%s9 + $0xa8] sm:$0xff]
  %v2927 = vld [vmem:[%s9 + $0xb0] sm:$0xff]
  %v2928 = vld [vmem:[%s9 + $0xb8] sm:$0xff]
  %v2929 = vld [vmem:[%s9 + $0xc0] sm:$0xff]
  %v2930 = vld [vmem:[%s9 + $0xc8] sm:$0xff]
  %v2931 = vld [vmem:[%s9 + $0xd0] sm:$0xff]
  %v2932 = vld [vmem:[%s9 + $0xd8] sm:$0xff]
  %v2933 = vld [vmem:[%s9 + $0xe0] sm:$0xff]
  %v2934 = vld [vmem:[%s9 + $0xe8] sm:$0xff]
  %v2935 = vld [vmem:[%s9 + $0xf0] sm:$0xff]
  %v2936 = vld [vmem:[%s9 + $0xf8] sm:$0xff]
  %v2937 = vld [vmem:[%s9 + $0x100] sm:$0xff]
  %v2938 = vld [vmem:[%s9 + $0x108] sm:$0xff]
  %v2939 = vld [vmem:[%s9 + $0x110] sm:$0xff]
  %v2940 = vld [vmem:[%s9 + $0x118] sm:$0xff]
  %v2941 = vld [vmem:[%s9 + $0x120] sm:$0xff]
  %v2942 = vld [vmem:[%s9 + $0x128] sm:$0xff]
  %v2943 = vld [vmem:[%s9 + $0x130] sm:$0xff]
  %v2944 = vld [vmem:[%s9 + $0x138] sm:$0xff]
  %v2945 = vld [vmem:[%s9 + $0x140] sm:$0xff]
  %v2946 = vld [vmem:[%s9 + $0x148] sm:$0xff]
  %v2947 = vld [vmem:[%s9 + $0x150] sm:$0xff]
  %v2948 = vld [vmem:[%s9 + $0x158] sm:$0xff]
  %v2949 = vld [vmem:[%s9 + $0x160] sm:$0xff]
  %v2950 = vld [vmem:[%s9 + $0x168] sm:$0xff]
  %v2951 = vld [vmem:[%s9 + $0x170] sm:$0xff]
  %v2952 = vld [vmem:[%s9 + $0x178] sm:$0xff]
  %v2953 = vld [vmem:[%s9 + $0x180] sm:$0xff]
  %v2954 = vld [vmem:[%s9 + $0x188] sm:$0xff]
  %v2955 = vld [vmem:[%s10] sm:$0x1]
  %v2957 = vlaneseq
  %v2958 = vshrl.u32 %v2957, 7
  %v2959 = vsub.s32 0, %v2958
  %v2960 = vrot.slane %v2955, %v2959
  %vm2962 = vcmask 130048
  %v2963 = vsel %vm2962, %v2898, 0
  %2965 = vmatprep.subr.mxu0 0.0
  %2966 = vmatpush1.msra.mxu0 %v2905
  %2967 = vmatprep.subr.mxu0 0.0
  %2968 = vmatpush1.msra.mxu0 %v2906
  %2969 = vmatprep.subr.mxu0 0.0
  %2970 = vmatpush1.msra.mxu0 %v2907
  %2971 = vmatprep.subr.mxu0 0.0
  %2972 = vmatpush1.msra.mxu0 %v2908
  %2973 = vmatprep.subr.mxu0 0.0
  %2974 = vmatpush1.msra.mxu0 %v2909
  %2975 = vmatprep.subr.mxu0 0.0
  %2976 = vmatpush1.msra.mxu0 %v2910
  %2977 = vmatprep.subr.mxu0 0.0
  %2978 = vmatpush1.msra.mxu0 %v2911
  %2979 = vmatprep.subr.mxu0 0.0
  %2980 = vmatpush1.msra.mxu0 %v2912
  %2981 = vmatprep.subr.mxu0 0.0
  %2982 = vmatpush1.msra.mxu0 %v2913
  %2983 = vmatprep.subr.mxu0 0.0
  %2984 = vmatpush1.msra.mxu0 %v2914
  %2985 = vmatprep.subr.mxu0 0.0
  %2986 = vmatpush1.msra.mxu0 %v2915
  %2987 = vmatprep.subr.mxu0 0.0
  %2988 = vmatpush1.msra.mxu0 %v2916
  %2989 = vmatprep.subr.mxu0 0.0
  %2990 = vmatpush1.msra.mxu0 %v2917
  %2991 = vmatprep.subr.mxu0 0.0
  %2992 = vmatpush1.msra.mxu0 %v2918
  %2993 = vmatprep.subr.mxu0 0.0
  %2994 = vmatpush1.msra.mxu0 %v2919
  %2995 = vmatprep.subr.mxu0 0.0
  %2996 = vmatpush1.msra.mxu0 %v2920
  %2997 = vmatprep.subr.mxu0 0.0
  %2998 = vmatpush1.msra.mxu0 %v2921
  %2999 = vmatprep.subr.mxu0 0.0
  %3000 = vmatpush1.msra.mxu0 %v2922
  %3001 = vmatprep.subr.mxu0 0.0
  %3002 = vmatpush1.msra.mxu0 %v2923
  %3003 = vmatprep.subr.mxu0 0.0
  %3004 = vmatpush1.msra.mxu0 %v2924
  %3005 = vmatprep.subr.mxu0 0.0
  %3006 = vmatpush1.msra.mxu0 %v2925
  %3007 = vmatprep.subr.mxu0 0.0
  %3008 = vmatpush1.msra.mxu0 %v2926
  %3009 = vmatprep.subr.mxu0 0.0
  %3010 = vmatpush1.msra.mxu0 %v2927
  %3011 = vmatprep.subr.mxu0 0.0
  %3012 = vmatpush1.msra.mxu0 %v2928
  %3013 = vmatprep.subr.mxu0 0.0
  %3014 = vmatpush1.msra.mxu0 %v2929
  %3015 = vmatprep.subr.mxu0 0.0
  %3016 = vmatpush1.msra.mxu0 %v2930
  %3017 = vmatprep.subr.mxu0 0.0
  %3018 = vmatpush1.msra.mxu0 %v2931
  %3019 = vmatprep.subr.mxu0 0.0
  %3020 = vmatpush1.msra.mxu0 %v2932
  %3021 = vmatprep.subr.mxu0 0.0
  %3022 = vmatpush1.msra.mxu0 %v2933
  %3023 = vmatprep.subr.mxu0 0.0
  %3024 = vmatpush1.msra.mxu0 %v2934
  %3025 = vmatprep.subr.mxu0 0.0
  %3026 = vmatpush1.msra.mxu0 %v2935
  %3027 = vmatprep.subr.mxu0 0.0
  %3028 = vmatpush1.msra.mxu0 %v2936
  %3029 = vmatprep.mubr.f32.mxu0 %v2903
  %3030 = vmatmul.mubr.f32.gmra.mrb[0].mxu0 %v2900
  %v3031 = vpop.f32.mrb[0].mxu0
  %v3032 = vadd.f32 %v2960, %v3031
  %v3033 = vpop.f32.mrb[0].mxu0
  %3034 = vdwg.mxu0
  %3035 = vmatprep.subr.mxu0 0.0
  %3036 = vmatpush1.msra.mxu0 %v2937
  %3037 = vmatprep.subr.mxu0 0.0
  %3038 = vmatpush1.msra.mxu0 %v2938
  %3039 = vmatprep.subr.mxu0 0.0
  %3040 = vmatpush1.msra.mxu0 %v2939
  %3041 = vmatprep.subr.mxu0 0.0
  %3042 = vmatpush1.msra.mxu0 %v2940
  %3043 = vmatprep.subr.mxu0 0.0
  %3044 = vmatpush1.msra.mxu0 %v2941
  %3045 = vmatprep.subr.mxu0 0.0
  %3046 = vmatpush1.msra.mxu0 %v2942
  %3047 = vmatprep.subr.mxu0 0.0
  %3048 = vmatpush1.msra.mxu0 %v2943
  %3049 = vmatprep.subr.mxu0 0.0
  %3050 = vmatpush1.msra.mxu0 %v2944
  %3051 = vmatprep.subr.mxu0 0.0
  %3052 = vmatpush1.msra.mxu0 %v2945
  %3053 = vmatprep.subr.mxu0 0.0
  %3054 = vmatpush1.msra.mxu0 %v2946
  %3055 = vmatprep.subr.mxu0 0.0
  %3056 = vmatpush1.msra.mxu0 %v2947
  %3057 = vmatprep.subr.mxu0 0.0
  %3058 = vmatpush1.msra.mxu0 %v2948
  %3059 = vmatprep.subr.mxu0 0.0
  %3060 = vmatpush1.msra.mxu0 %v2949
  %3061 = vmatprep.subr.mxu0 0.0
  %3062 = vmatpush1.msra.mxu0 %v2950
  %3063 = vmatprep.subr.mxu0 0.0
  %3064 = vmatpush1.msra.mxu0 %v2951
  %3065 = vmatprep.subr.mxu0 0.0
  %3066 = vmatpush1.msra.mxu0 %v2952
  %3067 = vmatprep.subr.mxu0 0.0
  %3068 = vmatpush1.msra.mxu0 %v2953
  %3069 = vmatprep.subr.mxu0 0.0
  %3070 = vmatpush1.msra.mxu0 %v2954
  %3071 = vmatprep.subr.mxu0 0.0
  %3072 = vmatpush1.msra.mxu0 0.0
  %3073 = vmatprep.subr.mxu0 0.0
  %3074 = vmatpush1.msra.mxu0 0.0
  %3075 = vmatprep.subr.mxu0 0.0
  %3076 = vmatpush1.msra.mxu0 0.0
  %3077 = vmatprep.subr.mxu0 0.0
  %3078 = vmatpush1.msra.mxu0 0.0
  %3079 = vmatprep.subr.mxu0 0.0
  %3080 = vmatpush1.msra.mxu0 0.0
  %3081 = vmatprep.subr.mxu0 0.0
  %3082 = vmatpush1.msra.mxu0 0.0
  %3083 = vmatprep.subr.mxu0 0.0
  %3084 = vmatpush1.msra.mxu0 0.0
  %3085 = vmatprep.subr.mxu0 0.0
  %3086 = vmatpush1.msra.mxu0 0.0
  %3087 = vmatprep.subr.mxu0 0.0
  %3088 = vmatpush1.msra.mxu0 0.0
  %3089 = vmatprep.subr.mxu0 0.0
  %3090 = vmatpush1.msra.mxu0 0.0
  %3091 = vmatprep.subr.mxu0 0.0
  %3092 = vmatpush1.msra.mxu0 0.0
  %3093 = vmatprep.subr.mxu0 0.0
  %3094 = vmatpush1.msra.mxu0 0.0
  %3095 = vmatprep.subr.mxu0 0.0
  %3096 = vmatpush1.msra.mxu0 0.0
  %3097 = vmatprep.subr.mxu0 0.0
  %3098 = vmatpush1.msra.mxu0 0.0
  %3099 = vmatprep.mubr.f32.mxu0 %v2963
  %3100 = vmatmul.mubr.f32.gmra.mrb[0].mxu0 %v2904
  %v3101 = vpop.f32.mrb[0].mxu0
  %v3102 = vadd.f32 %v3032, %v3101
  %v3103 = vpop.f32.mrb[0].mxu0
  %3104 = vdwg.mxu0
  %v3105 = vmax.f32 %v3102, 0.0
  %v3106 = vld [vmem:[%s11] sm:$0xff]
  %v3107 = vld [vmem:[%s11 + $0x8] sm:$0xff]
  %v3108 = vld [vmem:[%s11 + $0x10] sm:$0xff]
  %v3109 = vld [vmem:[%s11 + $0x18] sm:$0xff]
  %v3110 = vld [vmem:[%s11 + $0x20] sm:$0xff]
  %v3111 = vld [vmem:[%s11 + $0x28] sm:$0xff]
  %v3112 = vld [vmem:[%s11 + $0x30] sm:$0xff]
  %v3113 = vld [vmem:[%s11 + $0x38] sm:$0xff]
  %v3114 = vld [vmem:[%s11 + $0x40] sm:$0xff]
  %v3115 = vld [vmem:[%s11 + $0x48] sm:$0xff]
  %v3116 = vld [vmem:[%s11 + $0x50] sm:$0xff]
  %v3117 = vld [vmem:[%s11 + $0x58] sm:$0xff]
  %v3118 = vld [vmem:[%s11 + $0x60] sm:$0xff]
  %v3119 = vld [vmem:[%s11 + $0x68] sm:$0xff]
  %v3120 = vld [vmem:[%s11 + $0x70] sm:$0xff]
  %v3121 = vld [vmem:[%s12] sm:$0x1]
  %v3123 = vlaneseq
  %v3124 = vshrl.u32 %v3123, 7
  %v3125 = vsub.s32 0, %v3124
  %v3126 = vrot.slane %v3121, %v3125
  %vm3128 = vcmask 982016
  %v3130 = vsel %vm3128, %v3105, 0
  %3132 = vmatprep.subr.mxu0 0.0
  %3133 = vmatpush1.msra.mxu0 %v3106
  %3134 = vmatprep.subr.mxu0 0.0
  %3135 = vmatpush1.msra.mxu0 %v3107
  %3136 = vmatprep.subr.mxu0 0.0
  %3137 = vmatpush1.msra.mxu0 %v3108
  %3138 = vmatprep.subr.mxu0 0.0
  %3139 = vmatpush1.msra.mxu0 %v3109
  %3140 = vmatprep.subr.mxu0 0.0
  %3141 = vmatpush1.msra.mxu0 %v3110
  %3142 = vmatprep.subr.mxu0 0.0
  %3143 = vmatpush1.msra.mxu0 %v3111
  %3144 = vmatprep.subr.mxu0 0.0
  %3145 = vmatpush1.msra.mxu0 %v3112
  %3146 = vmatprep.subr.mxu0 0.0
  %3147 = vmatpush1.msra.mxu0 %v3113
  %3148 = vmatprep.subr.mxu0 0.0
  %3149 = vmatpush1.msra.mxu0 %v3114
  %3150 = vmatprep.subr.mxu0 0.0
  %3151 = vmatpush1.msra.mxu0 %v3115
  %3152 = vmatprep.subr.mxu0 0.0
  %3153 = vmatpush1.msra.mxu0 %v3116
  %3154 = vmatprep.subr.mxu0 0.0
  %3155 = vmatpush1.msra.mxu0 %v3117
  %3156 = vmatprep.subr.mxu0 0.0
  %3157 = vmatpush1.msra.mxu0 %v3118
  %3158 = vmatprep.subr.mxu0 0.0
  %3159 = vmatpush1.msra.mxu0 %v3119
  %3160 = vmatprep.subr.mxu0 0.0
  %3161 = vmatpush1.msra.mxu0 %v3120
  %3162 = vmatprep.subr.mxu0 0.0
  %3163 = vmatpush1.msra.mxu0 0.0
  %3164 = vmatprep.subr.mxu0 0.0
  %3165 = vmatpush1.msra.mxu0 0.0
  %3166 = vmatprep.subr.mxu0 0.0
  %3167 = vmatpush1.msra.mxu0 0.0
  %3168 = vmatprep.subr.mxu0 0.0
  %3169 = vmatpush1.msra.mxu0 0.0
  %3170 = vmatprep.subr.mxu0 0.0
  %3171 = vmatpush1.msra.mxu0 0.0
  %3172 = vmatprep.subr.mxu0 0.0
  %3173 = vmatpush1.msra.mxu0 0.0
  %3174 = vmatprep.subr.mxu0 0.0
  %3175 = vmatpush1.msra.mxu0 0.0
  %3176 = vmatprep.subr.mxu0 0.0
  %3177 = vmatpush1.msra.mxu0 0.0
  %3178 = vmatprep.subr.mxu0 0.0
  %3179 = vmatpush1.msra.mxu0 0.0
  %3180 = vmatprep.subr.mxu0 0.0
  %3181 = vmatpush1.msra.mxu0 0.0
  %3182 = vmatprep.subr.mxu0 0.0
  %3183 = vmatpush1.msra.mxu0 0.0
  %3184 = vmatprep.subr.mxu0 0.0
  %3185 = vmatpush1.msra.mxu0 0.0
  %3186 = vmatprep.subr.mxu0 0.0
  %3187 = vmatpush1.msra.mxu0 0.0
  %3188 = vmatprep.subr.mxu0 0.0
  %3189 = vmatpush1.msra.mxu0 0.0
  %3190 = vmatprep.subr.mxu0 0.0
  %3191 = vmatpush1.msra.mxu0 0.0
  %3192 = vmatprep.subr.mxu0 0.0
  %3193 = vmatpush1.msra.mxu0 0.0
  %3194 = vmatprep.subr.mxu0 0.0
  %3195 = vmatpush1.msra.mxu0 0.0
  %3196 = vmatprep.mubr.f32.mxu0 0.0
  %3197 = vmatmul.mubr.f32.gmra.mrb[0].mxu0 %v3130
  %v3198 = vpop.f32.mrb[0].mxu0
  %v3199 = vadd.f32 %v3126, %v3198
  %v3200 = vpop.f32.mrb[0].mxu0
  %3201 = vdwg.mxu0
  %v3202 = vmax.f32 %v3199, 0.0
  %v3203 = vld [vmem:[%s13] sm:$0xff]
  %v3204 = vld [vmem:[%s13 + $0x8] sm:$0xff]
  %v3205 = vld [vmem:[%s13 + $0x10] sm:$0xff]
  %v3206 = vld [vmem:[%s13 + $0x18] sm:$0xff]
  %v3207 = vld [vmem:[%s13 + $0x20] sm:$0xff]
  %v3208 = vld [vmem:[%s13 + $0x28] sm:$0xff]
  %v3209 = vld [vmem:[%s13 + $0x30] sm:$0xff]
  %v3210 = vld [vmem:[%s13 + $0x38] sm:$0xff]
  %v3211 = vld [vmem:[%s13 + $0x40] sm:$0xff]
  %v3212 = vld [vmem:[%s13 + $0x48] sm:$0xff]
  %v3213 = vld [vmem:[%s13 + $0x50] sm:$0xf]
  %v3214 = vld [vmem:[%s14] sm:$0x1]
  %v3216 = vlaneseq
  %v3217 = vshrl.u32 %v3216, 7
  %v3218 = vsub.s32 0, %v3217
  %v3219 = vrot.slane %v3214, %v3218
  %v3222 = vsel %vm2036, %v3202, 0
  %v3225 = vsel %vm594, %v3213, 0
  %3227 = vmatprep.subr.mxu0 0.0
  %3228 = vmatpush1.msra.mxu0 %v3203
  %3229 = vmatprep.subr.mxu0 0.0
  %3230 = vmatpush1.msra.mxu0 %v3204
  %3231 = vmatprep.subr.mxu0 0.0
  %3232 = vmatpush1.msra.mxu0 %v3205
  %3233 = vmatprep.subr.mxu0 0.0
  %3234 = vmatpush1.msra.mxu0 %v3206
  %3235 = vmatprep.subr.mxu0 0.0
  %3236 = vmatpush1.msra.mxu0 %v3207
  %3237 = vmatprep.subr.mxu0 0.0
  %3238 = vmatpush1.msra.mxu0 %v3208
  %3239 = vmatprep.subr.mxu0 0.0
  %3240 = vmatpush1.msra.mxu0 %v3209
  %3241 = vmatprep.subr.mxu0 0.0
  %3242 = vmatpush1.msra.mxu0 %v3210
  %3243 = vmatprep.subr.mxu0 0.0
  %3244 = vmatpush1.msra.mxu0 %v3211
  %3245 = vmatprep.subr.mxu0 0.0
  %3246 = vmatpush1.msra.mxu0 %v3212
  %3247 = vmatprep.subr.mxu0 0.0
  %3248 = vmatpush1.msra.mxu0 %v3225
  %3249 = vmatprep.subr.mxu0 0.0
  %3250 = vmatpush1.msra.mxu0 0.0
  %3251 = vmatprep.subr.mxu0 0.0
  %3252 = vmatpush1.msra.mxu0 0.0
  %3253 = vmatprep.subr.mxu0 0.0
  %3254 = vmatpush1.msra.mxu0 0.0
  %3255 = vmatprep.subr.mxu0 0.0
  %3256 = vmatpush1.msra.mxu0 0.0
  %3257 = vmatprep.subr.mxu0 0.0
  %3258 = vmatpush1.msra.mxu0 0.0
  %3259 = vmatprep.subr.mxu0 0.0
  %3260 = vmatpush1.msra.mxu0 0.0
  %3261 = vmatprep.subr.mxu0 0.0
  %3262 = vmatpush1.msra.mxu0 0.0
  %3263 = vmatprep.subr.mxu0 0.0
  %3264 = vmatpush1.msra.mxu0 0.0
  %3265 = vmatprep.subr.mxu0 0.0
  %3266 = vmatpush1.msra.mxu0 0.0
  %3267 = vmatprep.subr.mxu0 0.0
  %3268 = vmatpush1.msra.mxu0 0.0
  %3269 = vmatprep.subr.mxu0 0.0
  %3270 = vmatpush1.msra.mxu0 0.0
  %3271 = vmatprep.subr.mxu0 0.0
  %3272 = vmatpush1.msra.mxu0 0.0
  %3273 = vmatprep.subr.mxu0 0.0
  %3274 = vmatpush1.msra.mxu0 0.0
  %3275 = vmatprep.subr.mxu0 0.0
  %3276 = vmatpush1.msra.mxu0 0.0
  %3277 = vmatprep.subr.mxu0 0.0
  %3278 = vmatpush1.msra.mxu0 0.0
  %3279 = vmatprep.subr.mxu0 0.0
  %3280 = vmatpush1.msra.mxu0 0.0
  %3281 = vmatprep.subr.mxu0 0.0
  %3282 = vmatpush1.msra.mxu0 0.0
  %3283 = vmatprep.subr.mxu0 0.0
  %3284 = vmatpush1.msra.mxu0 0.0
  %3285 = vmatprep.subr.mxu0 0.0
  %3286 = vmatpush1.msra.mxu0 0.0
  %3287 = vmatprep.subr.mxu0 0.0
  %3288 = vmatpush1.msra.mxu0 0.0
  %3289 = vmatprep.subr.mxu0 0.0
  %3290 = vmatpush1.msra.mxu0 0.0
  %3291 = vmatprep.mubr.f32.mxu0 0.0
  %3292 = vmatmul.mubr.f32.gmra.mrb[0].mxu0 %v3222
  %v3293 = vpop.f32.mrb[0].mxu0
  %v3294 = vadd.f32 %v3219, %v3293
  %v3295 = vpop.f32.mrb[0].mxu0
  %3296 = vdwg.mxu0
  %vm3297 = vcmask 80896
  %3298 = vst.msk [vmem:[%s15] sm:$0xff] %vm3297, %v3294
  // Predicated region
  $region62: #{lenet5_forward.1} parent=0 // pred_check
    _
  $region63: #{lenet5_forward.1} parent=0 // pred_check_branch
    %3300 = sbr.rel (0) target = $region65
  $region64: #{lenet5_forward.1} parent=0 // pred_region
    _
  $region65: #{lenet5_forward.1} parent=0 // pred_fallthru
    _
  // Predicated region
  $region66: #{lenet5_forward.1} parent=0 // pred_check
    _
  $region67: #{lenet5_forward.1} parent=0 // pred_check_branch
    %3302 = sbr.rel (0) target = $region69
  $region68: #{lenet5_forward.1} parent=0 // pred_region
    _
  $region69: #{lenet5_forward.1} parent=0 // pred_fallthru
    _

</llo_original>
